<compile_context>
chip_gen: v5e
topology: v5e:2x2
jax: 0.10.0
libtpu: 0.0.40
codegen_flags: <defaults>
</compile_context>

<pallas_src>
import functools

import jax
import jax.numpy as jnp
from jax import lax
from jax.experimental import pallas as pl
from jax.experimental.pallas import tpu as pltpu

_LANE = 128
_PAD = 256   # node count padded to a multiple of this


def _round_up(n, m):
    return ((n + m - 1) // m) * m


def _pick_tile(n, candidates):
    for t in candidates:
        if t <= n and n % t == 0:
            return t
    return n


# ---------------------------------------------------------------------------
# One-time A preparation (OUTSIDE the jitted forward): pad + cast to bf16.
# ---------------------------------------------------------------------------
def prepare_adjacency(a, n_pad):
    n = a.shape[0]
    a = jnp.pad(a, ((0, n_pad - n), (0, n_pad - n)))
    return a.astype(jnp.bfloat16)


# ---------------------------------------------------------------------------
# Kernel 1: per-layer projections (row-tiled, O(N*F*H)):
#   P         = (h @ w_neigh)        -> bf16 (streamed operand of the N^2 sweep)
#   self_term = h @ w_self + b       -> f32  (seeds the aggregation accumulator)
# ---------------------------------------------------------------------------
def sage_project_kernel(h_ref, wn_ref, ws_ref, b_ref, p_ref, s_ref):
    h = h_ref[...]
    p_ref[...] = jnp.dot(h, wn_ref[...],
                         preferred_element_type=jnp.float32).astype(p_ref.dtype)
    s_ref[...] = (jnp.dot(h, ws_ref[...], preferred_element_type=jnp.float32)
                  + b_ref[...]).astype(s_ref.dtype)


def sage_project(h, w_neigh, w_self, b, *, tm):
    n, f_in = h.shape
    f_out = w_neigh.shape[1]
    return pl.pallas_call(
        sage_project_kernel,
        out_shape=(jax.ShapeDtypeStruct((n, f_out), jnp.bfloat16),
                   jax.ShapeDtypeStruct((n, f_out), jnp.float32)),
        grid_spec=pltpu.PrefetchScalarGridSpec(
            num_scalar_prefetch=0,
            grid=(n // tm,),
            in_specs=[
                pl.BlockSpec((tm, f_in), lambda i: (i, 0)),
                pl.BlockSpec(w_neigh.shape, lambda i: (0, 0)),
                pl.BlockSpec(w_self.shape, lambda i: (0, 0)),
                pl.BlockSpec(b.shape, lambda i: (0, 0)),
            ],
            out_specs=(pl.BlockSpec((tm, f_out), lambda i: (i, 0)),
                       pl.BlockSpec((tm, f_out), lambda i: (i, 0))),
        ),
        compiler_params=pltpu.CompilerParams(
            dimension_semantics=("parallel",)),
    )(h, w_neigh, w_self, b)


# ---------------------------------------------------------------------------
# Kernel 2: the dominant N^2 aggregation sweep + fused bias/self path + ReLU.
#   grid = (N/tm, N/tk), K (source-node contraction) last; f32 VMEM accumulator;
#   out BlockSpec independent of k; row axis "parallel" for megacore sharding.
#   HBM traffic per step is essentially only the bf16 A tile -> near HBM roofline.
# ---------------------------------------------------------------------------
def sage_agg_kernel(a_ref, p_ref, s_ref, out_ref, acc_ref):
    k = pl.program_id(1)

    @pl.when(k == 0)
    def _init():
        acc_ref[...] = s_ref[...]          # self path + bias seeds the accumulator

    acc_ref[...] += jnp.dot(a_ref[...], p_ref[...],
                            preferred_element_type=jnp.float32)

    @pl.when(k == pl.num_programs(1) - 1)
    def _finalize():
        out_ref[...] = jnp.maximum(acc_ref[...], 0.0).astype(out_ref.dtype)


def sage_aggregate(a_bf16, p_bf16, self_term, *, tm, tk):
    n = a_bf16.shape[0]
    f_out = p_bf16.shape[1]
    # Right-size scoped VMEM: double-buffered input/output tiles + accumulator.
    tile_bytes = (2 * (tm * tk * 2 + tk * f_out * 2 + 2 * tm * f_out * 4)
                  + tm * f_out * 4)
    vmem_limit = int(min(40 * 2 ** 20, max(8 * 2 ** 20, 3 * tile_bytes)))
    return pl.pallas_call(
        sage_agg_kernel,
        out_shape=jax.ShapeDtypeStruct((n, f_out), jnp.float32),
        grid_spec=pltpu.PrefetchScalarGridSpec(
            num_scalar_prefetch=0,
            grid=(n // tm, n // tk),
            in_specs=[
                pl.BlockSpec((tm, tk), lambda i, k: (i, k)),      # A tile (bf16)
                pl.BlockSpec((tk, f_out), lambda i, k: (k, 0)),   # projected neighbors
                pl.BlockSpec((tm, f_out), lambda i, k: (i, 0)),   # self + bias
            ],
            out_specs=pl.BlockSpec((tm, f_out), lambda i, k: (i, 0)),
            scratch_shapes=[pltpu.VMEM((tm, f_out), jnp.float32)],
        ),
        compiler_params=pltpu.CompilerParams(
            dimension_semantics=("parallel", "arbitrary"),
            vmem_limit_bytes=vmem_limit,
        ),
    )(a_bf16, p_bf16, self_term)


# ---------------------------------------------------------------------------
# Kernel 3: prompt scoring + first-max cluster assignment + per-cluster pp head.
#   The (h, h_dst) concat is fused as split-K; prompt AND all pp heads are one
#   merged matmul pair; every slab (prompt scores, each head, the output) is
#   lane-padded to 128 so all slices/stores are unmasked and vreg-aligned.
# ---------------------------------------------------------------------------
def prompt_select_kernel(h_ref, hd_ref, wh_ref, wd_ref, out_ref, *,
                         center_num, pad_c, pad_cls):
    h = h_ref[...]
    hd = jnp.maximum(hd_ref[...], 0.0)     # fused activation(h_dst)

    z = (jnp.dot(h, wh_ref[...], preferred_element_type=jnp.float32)
         + jnp.dot(hd, wd_ref[...], preferred_element_type=jnp.float32))

    scores = z[:, :pad_c]
    cols = lax.broadcasted_iota(jnp.int32, scores.shape, 1)
    scores = jnp.where(cols < center_num, scores, -jnp.inf)      # mask lane padding
    m = jnp.max(scores, axis=-1, keepdims=True)
    best = jnp.min(jnp.where(scores == m, cols, center_num),
                   axis=-1, keepdims=True)                       # first-max tie rule

    out = z[:, pad_c:pad_c + pad_cls]
    for i in range(1, center_num):
        lo = pad_c + i * pad_cls
        out = jnp.where(best == i, z[:, lo:lo + pad_cls], out)
    out_ref[...] = out.astype(out_ref.dtype)


def prompt_select(h, h_dst, w_prompt_t, w_pp_t, *, n_classes, center_num, tm):
    n, hh = h.shape
    hd_feats = h_dst.shape[1]
    pad_c = _round_up(center_num, _LANE)
    pad_cls = _round_up(n_classes, _LANE)

    # Pack once (tiny, static): columns = [prompt | pp_0 | ... | pp_{C-1}], each
    # slab zero-padded to a multiple of 128 lanes; rows split for the fused concat.
    wp = jnp.pad(w_prompt_t, ((0, 0), (0, pad_c - center_num)))
    wpp = jnp.pad(w_pp_t, ((0, 0), (0, 0), (0, pad_cls - n_classes)))
    wpp = jnp.transpose(wpp, (1, 0, 2)).reshape(hh + hd_feats, center_num * pad_cls)
    w_all = jnp.concatenate([wp, wpp], axis=1)
    w_h, w_d = w_all[:hh], w_all[hh:]

    kernel = functools.partial(prompt_select_kernel, center_num=center_num,
                               pad_c=pad_c, pad_cls=pad_cls)
    return pl.pallas_call(
        kernel,
        out_shape=jax.ShapeDtypeStruct((n, pad_cls), jnp.float32),
        grid_spec=pltpu.PrefetchScalarGridSpec(
            num_scalar_prefetch=0,
            grid=(n // tm,),
            in_specs=[
                pl.BlockSpec((tm, hh), lambda i: (i, 0)),
                pl.BlockSpec((tm, hd_feats), lambda i: (i, 0)),
                pl.BlockSpec(w_h.shape, lambda i: (0, 0)),
                pl.BlockSpec(w_d.shape, lambda i: (0, 0)),
            ],
            out_specs=pl.BlockSpec((tm, pad_cls), lambda i: (i, 0)),
        ),
        compiler_params=pltpu.CompilerParams(
            dimension_semantics=("parallel",)),
    )(h, h_dst, w_h, w_d)


# ---------------------------------------------------------------------------
# Full forward (glue in plain JAX, hot paths in the Pallas kernels above).
# a_bf16 is the persistently cached, padded, bf16 adjacency (prepare_adjacency).
# ---------------------------------------------------------------------------
def graphsage_forward(params, a_bf16, x, *, n_classes, center_num, n_real):
    n_pad = a_bf16.shape[0]
    tm = _pick_tile(n_pad, (512, 256, 128))
    tk = _pick_tile(n_pad, (1024, 512, 256, 128))

    # Zero-pad features to the padded graph size (cheap, O(N*F)); padded A
    # rows/cols are zero so padding never contaminates real rows.
    h = jnp.pad(x, ((0, n_pad - x.shape[0]), (0, 0)))
    h_dst = h
    for l in range(len(params["w_self"])):
        h_dst = h                          # graph[l].num_dst_nodes() == N (full-graph MFG)
        p_bf16, self_term = sage_project(h, params["w_neigh"][l],
                                         params["w_self"][l], params["b"][l], tm=tm)
        h = sage_aggregate(a_bf16, p_bf16, self_term, tm=tm, tk=tk)
    # relu(h) fused in sage_aggregate; relu(h_dst) + concat fused into prompt_select.
    out = prompt_select(h, h_dst, params["w_prompt_t"], params["w_pp_t"],
                        n_classes=n_classes, center_num=center_num, tm=tm)
    return out[:n_real, :n_classes]


def init_params(key, in_feats, n_hidden, n_classes, n_layers, center_num):
    ks = jax.random.split(key, 3 * n_layers + 2)
    w_self, w_neigh, b = [], [], []
    fan_in = in_feats
    for l in range(n_layers):
        w_self.append(0.1 * jax.random.normal(ks[3 * l + 0], (fan_in, n_hidden), jnp.float32))
        w_neigh.append(0.1 * jax.random.normal(ks[3 * l + 1], (fan_in, n_hidden), jnp.float32))
        b.append(0.1 * jax.random.normal(ks[3 * l + 2], (1, n_hidden), jnp.float32))
        fan_in = n_hidden
    dst_feats = n_hidden if n_layers >= 2 else in_feats
    cat_feats = n_hidden + dst_feats
    # prompt: Linear(cat_feats, center_num, bias=False) weight stored transposed (cat, C).
    w_prompt_t = 0.1 * jax.random.normal(ks[-2], (cat_feats, center_num), jnp.float32)
    # pp[i]: Linear(cat_feats, n_classes, bias=False) weights stacked (C, cat, cls).
    w_pp_t = 0.1 * jax.random.normal(ks[-1], (center_num, cat_feats, n_classes), jnp.float32)
    return dict(w_self=w_self, w_neigh=w_neigh, b=b,
                w_prompt_t=w_prompt_t, w_pp_t=w_pp_t)


# Pure-JAX f32 reference for a tolerance check (returns outputs and prompt scores).
def reference_forward(params, a, x):
    with jax.default_matmul_precision("float32"):
        h = x
        h_dst = x
        for l in range(len(params["w_self"])):
            h_dst = h
            h = jnp.maximum(h_dst @ params["w_self"][l]
                            + (a @ h) @ params["w_neigh"][l] + params["b"][l], 0.0)
        h_dst = jnp.maximum(h_dst, 0.0)
        hc = jnp.concatenate([h, h_dst], axis=1)
        scores = hc @ params["w_prompt_t"]
        idx = jnp.argmax(scores, axis=1)
        logits = jnp.einsum("nf,kfc->nkc", hc, params["w_pp_t"])
        out = jnp.take_along_axis(logits, idx[:, None, None], axis=1)[:, 0, :]
    return out, scores


if __name__ == "__main__":
    # Small synthetic configuration consistent with the module's __init__.
    N, in_feats, n_hidden, n_layers = 128, 32, 8, 2
    n_classes, center_num = 8, 4

    key = jax.random.PRNGKey(0)
    k_x, k_a, k_p = jax.random.split(key, 3)

    x = jax.random.normal(k_x, (N, in_feats), jnp.float32)

    # Dense row-normalized adjacency (mean aggregator); self-loops -> nonzero degree.
    adj = (jax.random.uniform(k_a, (N, N)) < 0.1).astype(jnp.float32)
    adj = jnp.minimum(adj + jnp.eye(N, dtype=jnp.float32), 1.0)
    a = adj / jnp.sum(adj, axis=1, keepdims=True)

    params = init_params(k_p, in_feats, n_hidden, n_classes, n_layers, center_num)

    # One-time prep: pad + cast A to bf16 OUTSIDE the jitted forward.
    n_pad = _round_up(N, _PAD)
    a_bf16 = jax.block_until_ready(prepare_adjacency(a, n_pad))

    fwd = jax.jit(functools.partial(graphsage_forward, n_classes=n_classes,
                                    center_num=center_num, n_real=N))
    out = jax.block_until_ready(fwd(params, a_bf16, x))
    assert out.shape == (N, n_classes) and out.dtype == jnp.float32

    # Tolerance check vs f32 reference, restricted to rows with a clear argmax
    # margin so bf16-induced near-tie head flips cannot cause false failures.
    ref, scores = reference_forward(params, a, x)
    s_sorted = jnp.sort(scores, axis=1)
    clear = ((s_sorted[:, -1] - s_sorted[:, -2]) > 1e-2).astype(jnp.float32)
    err = float(jnp.max(jnp.abs(out - ref) * clear[:, None]))
    assert err < 3e-2, f"max abs error {err}"

    print("KERNEL_OK")
</pallas_src>

<mosaic_0001>
module attributes {stable_mosaic.version = 11 : i64} {
  func.func @sage_project_kernel(%arg0: i32, %arg1: memref<256x32xf32, #tpu.memory_space<vmem>>, %arg2: memref<32x8xf32, #tpu.memory_space<vmem>>, %arg3: memref<32x8xf32, #tpu.memory_space<vmem>>, %arg4: memref<1x8xf32, #tpu.memory_space<vmem>>, %arg5: memref<256x8xbf16, #tpu.memory_space<vmem>>, %arg6: memref<256x8xf32, #tpu.memory_space<vmem>>) attributes {dimension_semantics = [#tpu.dimension_semantics<parallel>], iteration_bounds = array<i64: 1>, scalar_prefetch = 0 : i64, scratch_operands = 0 : i64, tpu.core_type = #tpu.core_type<tc>, window_params = [{transform_indices = @transform_0, window_bounds = array<i64: 256, 32>}, {pipeline_mode = #tpu.pipeline_mode<synchronous>, transform_indices = @transform_1, window_bounds = array<i64: 32, 8>}, {pipeline_mode = #tpu.pipeline_mode<synchronous>, transform_indices = @transform_2, window_bounds = array<i64: 32, 8>}, {pipeline_mode = #tpu.pipeline_mode<synchronous>, transform_indices = @transform_3, window_bounds = array<i64: 1, 8>}, {transform_indices = @transform_4, window_bounds = array<i64: 256, 8>}, {transform_indices = @transform_5, window_bounds = array<i64: 256, 8>}]} {
    %c0 = arith.constant 0 : index
    %c0_0 = arith.constant 0 : index
    %0 = vector.load %arg1[%c0, %c0_0] : memref<256x32xf32, #tpu.memory_space<vmem>>, vector<256x32xf32>
    %c0_1 = arith.constant 0 : index
    %c0_2 = arith.constant 0 : index
    %1 = vector.load %arg2[%c0_1, %c0_2] : memref<32x8xf32, #tpu.memory_space<vmem>>, vector<32x8xf32>
    %cst = arith.constant dense<0.000000e+00> : vector<256x8xf32>
    %2 = tpu.matmul %0, %1, %cst {dimension_numbers = #tpu.dot_dimension_numbers<[1], [0], [0], [1], [0, 0, 1, 1], [], []>} : vector<256x32xf32>, vector<32x8xf32>, vector<256x8xf32> -> vector<256x8xf32>
    %3 = arith.truncf %2 : vector<256x8xf32> to vector<256x8xbf16>
    %c0_3 = arith.constant 0 : index
    %c0_4 = arith.constant 0 : index
    %4 = vector.load %arg5[%c0_3, %c0_4] : memref<256x8xbf16, #tpu.memory_space<vmem>>, vector<256x8xbf16>
    tpu.vector_store %arg5[%c0_3, %c0_4], %3 {strides = array<i32>} : memref<256x8xbf16, #tpu.memory_space<vmem>>, vector<256x8xbf16>,
    %c0_5 = arith.constant 0 : index
    %c0_6 = arith.constant 0 : index
    %5 = vector.load %arg3[%c0_5, %c0_6] : memref<32x8xf32, #tpu.memory_space<vmem>>, vector<32x8xf32>
    %cst_7 = arith.constant dense<0.000000e+00> : vector<256x8xf32>
    %6 = tpu.matmul %0, %5, %cst_7 {dimension_numbers = #tpu.dot_dimension_numbers<[1], [0], [0], [1], [0, 0, 1, 1], [], []>} : vector<256x32xf32>, vector<32x8xf32>, vector<256x8xf32> -> vector<256x8xf32>
    %c0_8 = arith.constant 0 : index
    %c0_9 = arith.constant 0 : index
    %7 = vector.load %arg4[%c0_8, %c0_9] : memref<1x8xf32, #tpu.memory_space<vmem>>, vector<1x8xf32>
    %8 = vector.broadcast %7 : vector<1x8xf32> to vector<256x8xf32>
    %9 = arith.addf %6, %8 : vector<256x8xf32>
    %c0_10 = arith.constant 0 : index
    %c0_11 = arith.constant 0 : index
    %10 = vector.load %arg6[%c0_10, %c0_11] : memref<256x8xf32, #tpu.memory_space<vmem>>, vector<256x8xf32>
    tpu.vector_store %arg6[%c0_10, %c0_11], %9 {strides = array<i32>} : memref<256x8xf32, #tpu.memory_space<vmem>>, vector<256x8xf32>,
    return
  }
  func.func @transform_0(%arg0: i32) -> (i32, i32) {
    %c0_i32 = arith.constant 0 : i32
    %c0_i32_0 = arith.constant 0 : i32
    return %arg0, %c0_i32 : i32, i32
  }
  func.func @transform_1(%arg0: i32) -> (i32, i32) {
    %c0_i32 = arith.constant 0 : i32
    %c0_i32_0 = arith.constant 0 : i32
    %c0_i32_1 = arith.constant 0 : i32
    return %c0_i32, %c0_i32_0 : i32, i32
  }
  func.func @transform_2(%arg0: i32) -> (i32, i32) {
    %c0_i32 = arith.constant 0 : i32
    %c0_i32_0 = arith.constant 0 : i32
    %c0_i32_1 = arith.constant 0 : i32
    return %c0_i32, %c0_i32_0 : i32, i32
  }
  func.func @transform_3(%arg0: i32) -> (i32, i32) {
    %c0_i32 = arith.constant 0 : i32
    %c0_i32_0 = arith.constant 0 : i32
    %c0_i32_1 = arith.constant 0 : i32
    return %c0_i32, %c0_i32_0 : i32, i32
  }
  func.func @transform_4(%arg0: i32) -> (i32, i32) {
    %c0_i32 = arith.constant 0 : i32
    %c0_i32_0 = arith.constant 0 : i32
    return %arg0, %c0_i32 : i32, i32
  }
  func.func @transform_5(%arg0: i32) -> (i32, i32) {
    %c0_i32 = arith.constant 0 : i32
    %c0_i32_0 = arith.constant 0 : i32
    return %arg0, %c0_i32 : i32, i32
  }
}

module attributes {stable_mosaic.version = 11 : i64} {
  func.func @sage_agg_kernel(%arg0: i32, %arg1: i32, %arg2: memref<256x256xbf16, #tpu.memory_space<vmem>>, %arg3: memref<256x8xbf16, #tpu.memory_space<vmem>>, %arg4: memref<256x8xf32, #tpu.memory_space<vmem>>, %arg5: memref<256x8xf32, #tpu.memory_space<vmem>>, %arg6: memref<256x8xf32, #tpu.memory_space<vmem>>) attributes {dimension_semantics = [#tpu.dimension_semantics<parallel>, #tpu.dimension_semantics<arbitrary>], iteration_bounds = array<i64: 1, 1>, scalar_prefetch = 0 : i64, scratch_operands = 1 : i64, tpu.core_type = #tpu.core_type<tc>, window_params = [{transform_indices = @transform_0, window_bounds = array<i64: 256, 256>}, {transform_indices = @transform_1, window_bounds = array<i64: 256, 8>}, {transform_indices = @transform_2, window_bounds = array<i64: 256, 8>}, {transform_indices = @transform_3, window_bounds = array<i64: 256, 8>}]} {
    %c0_i32 = arith.constant 0 : i32
    %0 = arith.cmpi eq, %arg1, %c0_i32 : i32
    %1 = arith.extui %0 : i1 to i32
    %c0_i32_0 = arith.constant 0 : i32
    %2 = arith.cmpi ne, %1, %c0_i32_0 : i32
    scf.if %2 {
      %c0_10 = arith.constant 0 : index
      %c0_11 = arith.constant 0 : index
      %12 = vector.load %arg4[%c0_10, %c0_11] : memref<256x8xf32, #tpu.memory_space<vmem>>, vector<256x8xf32>
      %c0_12 = arith.constant 0 : index
      %c0_13 = arith.constant 0 : index
      %13 = vector.load %arg6[%c0_12, %c0_13] : memref<256x8xf32, #tpu.memory_space<vmem>>, vector<256x8xf32>
      tpu.vector_store %arg6[%c0_12, %c0_13], %12 {strides = array<i32>} : memref<256x8xf32, #tpu.memory_space<vmem>>, vector<256x8xf32>,
    } else {
    }
    %c0 = arith.constant 0 : index
    %c0_1 = arith.constant 0 : index
    %3 = vector.load %arg6[%c0, %c0_1] : memref<256x8xf32, #tpu.memory_space<vmem>>, vector<256x8xf32>
    %c0_2 = arith.constant 0 : index
    %c0_3 = arith.constant 0 : index
    %4 = vector.load %arg2[%c0_2, %c0_3] : memref<256x256xbf16, #tpu.memory_space<vmem>>, vector<256x256xbf16>
    %c0_4 = arith.constant 0 : index
    %c0_5 = arith.constant 0 : index
    %5 = vector.load %arg3[%c0_4, %c0_5] : memref<256x8xbf16, #tpu.memory_space<vmem>>, vector<256x8xbf16>
    %cst = arith.constant dense<0.000000e+00> : vector<256x8xf32>
    %6 = tpu.matmul %4, %5, %cst {dimension_numbers = #tpu.dot_dimension_numbers<[1], [0], [0], [1], [0, 0, 1, 1], [], []>} : vector<256x256xbf16>, vector<256x8xbf16>, vector<256x8xf32> -> vector<256x8xf32>
    %7 = arith.addf %3, %6 : vector<256x8xf32>
    %c0_6 = arith.constant 0 : index
    %c0_7 = arith.constant 0 : index
    %8 = vector.load %arg6[%c0_6, %c0_7] : memref<256x8xf32, #tpu.memory_space<vmem>>, vector<256x8xf32>
    tpu.vector_store %arg6[%c0_6, %c0_7], %7 {strides = array<i32>} : memref<256x8xf32, #tpu.memory_space<vmem>>, vector<256x8xf32>,
    %c0_i32_8 = arith.constant 0 : i32
    %9 = arith.cmpi eq, %arg1, %c0_i32_8 : i32
    %10 = arith.extui %9 : i1 to i32
    %c0_i32_9 = arith.constant 0 : i32
    %11 = arith.cmpi ne, %10, %c0_i32_9 : i32
    scf.if %11 {
      %c0_10 = arith.constant 0 : index
      %c0_11 = arith.constant 0 : index
      %12 = vector.load %arg6[%c0_10, %c0_11] : memref<256x8xf32, #tpu.memory_space<vmem>>, vector<256x8xf32>
      %cst_12 = arith.constant 0.000000e+00 : f32
      %13 = vector.broadcast %cst_12 : f32 to vector<256x8xf32>
      %14 = arith.maximumf %12, %13 : vector<256x8xf32>
      %c0_13 = arith.constant 0 : index
      %c0_14 = arith.constant 0 : index
      %15 = vector.load %arg5[%c0_13, %c0_14] : memref<256x8xf32, #tpu.memory_space<vmem>>, vector<256x8xf32>
      tpu.vector_store %arg5[%c0_13, %c0_14], %14 {strides = array<i32>} : memref<256x8xf32, #tpu.memory_space<vmem>>, vector<256x8xf32>,
    } else {
    }
    return
  }
  func.func @transform_0(%arg0: i32, %arg1: i32) -> (i32, i32) {
    %c0_i32 = arith.constant 0 : i32
    return %arg0, %arg1 : i32, i32
  }
  func.func @transform_1(%arg0: i32, %arg1: i32) -> (i32, i32) {
    %c0_i32 = arith.constant 0 : i32
    %c0_i32_0 = arith.constant 0 : i32
    return %arg1, %c0_i32 : i32, i32
  }
  func.func @transform_2(%arg0: i32, %arg1: i32) -> (i32, i32) {
    %c0_i32 = arith.constant 0 : i32
    %c0_i32_0 = arith.constant 0 : i32
    return %arg0, %c0_i32 : i32, i32
  }
  func.func @transform_3(%arg0: i32, %arg1: i32) -> (i32, i32) {
    %c0_i32 = arith.constant 0 : i32
    %c0_i32_0 = arith.constant 0 : i32
    return %arg0, %c0_i32 : i32, i32
  }
}

module attributes {stable_mosaic.version = 11 : i64} {
  func.func @sage_project_kernel(%arg0: i32, %arg1: memref<256x8xf32, #tpu.memory_space<vmem>>, %arg2: memref<8x8xf32, #tpu.memory_space<vmem>>, %arg3: memref<8x8xf32, #tpu.memory_space<vmem>>, %arg4: memref<1x8xf32, #tpu.memory_space<vmem>>, %arg5: memref<256x8xbf16, #tpu.memory_space<vmem>>, %arg6: memref<256x8xf32, #tpu.memory_space<vmem>>) attributes {dimension_semantics = [#tpu.dimension_semantics<parallel>], iteration_bounds = array<i64: 1>, scalar_prefetch = 0 : i64, scratch_operands = 0 : i64, tpu.core_type = #tpu.core_type<tc>, window_params = [{transform_indices = @transform_0, window_bounds = array<i64: 256, 8>}, {pipeline_mode = #tpu.pipeline_mode<synchronous>, transform_indices = @transform_1, window_bounds = array<i64: 8, 8>}, {pipeline_mode = #tpu.pipeline_mode<synchronous>, transform_indices = @transform_2, window_bounds = array<i64: 8, 8>}, {pipeline_mode = #tpu.pipeline_mode<synchronous>, transform_indices = @transform_3, window_bounds = array<i64: 1, 8>}, {transform_indices = @transform_4, window_bounds = array<i64: 256, 8>}, {transform_indices = @transform_5, window_bounds = array<i64: 256, 8>}]} {
    %c0 = arith.constant 0 : index
    %c0_0 = arith.constant 0 : index
    %0 = vector.load %arg1[%c0, %c0_0] : memref<256x8xf32, #tpu.memory_space<vmem>>, vector<256x8xf32>
    %c0_1 = arith.constant 0 : index
    %c0_2 = arith.constant 0 : index
    %1 = vector.load %arg2[%c0_1, %c0_2] : memref<8x8xf32, #tpu.memory_space<vmem>>, vector<8x8xf32>
    %cst = arith.constant dense<0.000000e+00> : vector<256x8xf32>
    %2 = tpu.matmul %0, %1, %cst {dimension_numbers = #tpu.dot_dimension_numbers<[1], [0], [0], [1], [0, 0, 1, 1], [], []>} : vector<256x8xf32>, vector<8x8xf32>, vector<256x8xf32> -> vector<256x8xf32>
    %3 = arith.truncf %2 : vector<256x8xf32> to vector<256x8xbf16>
    %c0_3 = arith.constant 0 : index
    %c0_4 = arith.constant 0 : index
    %4 = vector.load %arg5[%c0_3, %c0_4] : memref<256x8xbf16, #tpu.memory_space<vmem>>, vector<256x8xbf16>
    tpu.vector_store %arg5[%c0_3, %c0_4], %3 {strides = array<i32>} : memref<256x8xbf16, #tpu.memory_space<vmem>>, vector<256x8xbf16>,
    %c0_5 = arith.constant 0 : index
    %c0_6 = arith.constant 0 : index
    %5 = vector.load %arg3[%c0_5, %c0_6] : memref<8x8xf32, #tpu.memory_space<vmem>>, vector<8x8xf32>
    %cst_7 = arith.constant dense<0.000000e+00> : vector<256x8xf32>
    %6 = tpu.matmul %0, %5, %cst_7 {dimension_numbers = #tpu.dot_dimension_numbers<[1], [0], [0], [1], [0, 0, 1, 1], [], []>} : vector<256x8xf32>, vector<8x8xf32>, vector<256x8xf32> -> vector<256x8xf32>
    %c0_8 = arith.constant 0 : index
    %c0_9 = arith.constant 0 : index
    %7 = vector.load %arg4[%c0_8, %c0_9] : memref<1x8xf32, #tpu.memory_space<vmem>>, vector<1x8xf32>
    %8 = vector.broadcast %7 : vector<1x8xf32> to vector<256x8xf32>
    %9 = arith.addf %6, %8 : vector<256x8xf32>
    %c0_10 = arith.constant 0 : index
    %c0_11 = arith.constant 0 : index
    %10 = vector.load %arg6[%c0_10, %c0_11] : memref<256x8xf32, #tpu.memory_space<vmem>>, vector<256x8xf32>
    tpu.vector_store %arg6[%c0_10, %c0_11], %9 {strides = array<i32>} : memref<256x8xf32, #tpu.memory_space<vmem>>, vector<256x8xf32>,
    return
  }
  func.func @transform_0(%arg0: i32) -> (i32, i32) {
    %c0_i32 = arith.constant 0 : i32
    %c0_i32_0 = arith.constant 0 : i32
    return %arg0, %c0_i32 : i32, i32
  }
  func.func @transform_1(%arg0: i32) -> (i32, i32) {
    %c0_i32 = arith.constant 0 : i32
    %c0_i32_0 = arith.constant 0 : i32
    %c0_i32_1 = arith.constant 0 : i32
    return %c0_i32, %c0_i32_0 : i32, i32
  }
  func.func @transform_2(%arg0: i32) -> (i32, i32) {
    %c0_i32 = arith.constant 0 : i32
    %c0_i32_0 = arith.constant 0 : i32
    %c0_i32_1 = arith.constant 0 : i32
    return %c0_i32, %c0_i32_0 : i32, i32
  }
  func.func @transform_3(%arg0: i32) -> (i32, i32) {
    %c0_i32 = arith.constant 0 : i32
    %c0_i32_0 = arith.constant 0 : i32
    %c0_i32_1 = arith.constant 0 : i32
    return %c0_i32, %c0_i32_0 : i32, i32
  }
  func.func @transform_4(%arg0: i32) -> (i32, i32) {
    %c0_i32 = arith.constant 0 : i32
    %c0_i32_0 = arith.constant 0 : i32
    return %arg0, %c0_i32 : i32, i32
  }
  func.func @transform_5(%arg0: i32) -> (i32, i32) {
    %c0_i32 = arith.constant 0 : i32
    %c0_i32_0 = arith.constant 0 : i32
    return %arg0, %c0_i32 : i32, i32
  }
}

module attributes {stable_mosaic.version = 11 : i64} {
  func.func @prompt_select_kernel(%arg0: i32, %arg1: memref<256x8xf32, #tpu.memory_space<vmem>>, %arg2: memref<256x8xf32, #tpu.memory_space<vmem>>, %arg3: memref<8x640xf32, #tpu.memory_space<vmem>>, %arg4: memref<8x640xf32, #tpu.memory_space<vmem>>, %arg5: memref<256x128xf32, #tpu.memory_space<vmem>>) attributes {dimension_semantics = [#tpu.dimension_semantics<parallel>], iteration_bounds = array<i64: 1>, scalar_prefetch = 0 : i64, scratch_operands = 0 : i64, tpu.core_type = #tpu.core_type<tc>, window_params = [{transform_indices = @transform_0, window_bounds = array<i64: 256, 8>}, {transform_indices = @transform_1, window_bounds = array<i64: 256, 8>}, {pipeline_mode = #tpu.pipeline_mode<synchronous>, transform_indices = @transform_2, window_bounds = array<i64: 8, 640>}, {pipeline_mode = #tpu.pipeline_mode<synchronous>, transform_indices = @transform_3, window_bounds = array<i64: 8, 640>}, {transform_indices = @transform_4, window_bounds = array<i64: 256, 128>}]} {
    %c0 = arith.constant 0 : index
    %c0_0 = arith.constant 0 : index
    %0 = vector.load %arg1[%c0, %c0_0] : memref<256x8xf32, #tpu.memory_space<vmem>>, vector<256x8xf32>
    %c0_1 = arith.constant 0 : index
    %c0_2 = arith.constant 0 : index
    %1 = vector.load %arg2[%c0_1, %c0_2] : memref<256x8xf32, #tpu.memory_space<vmem>>, vector<256x8xf32>
    %cst = arith.constant 0.000000e+00 : f32
    %2 = vector.broadcast %cst : f32 to vector<256x8xf32>
    %3 = arith.maximumf %1, %2 : vector<256x8xf32>
    %c0_3 = arith.constant 0 : index
    %c0_4 = arith.constant 0 : index
    %4 = vector.load %arg3[%c0_3, %c0_4] : memref<8x640xf32, #tpu.memory_space<vmem>>, vector<8x640xf32>
    %cst_5 = arith.constant dense<0.000000e+00> : vector<256x640xf32>
    %5 = tpu.matmul %0, %4, %cst_5 {dimension_numbers = #tpu.dot_dimension_numbers<[1], [0], [0], [1], [0, 0, 1, 1], [], []>} : vector<256x8xf32>, vector<8x640xf32>, vector<256x640xf32> -> vector<256x640xf32>
    %c0_6 = arith.constant 0 : index
    %c0_7 = arith.constant 0 : index
    %6 = vector.load %arg4[%c0_6, %c0_7] : memref<8x640xf32, #tpu.memory_space<vmem>>, vector<8x640xf32>
    %cst_8 = arith.constant dense<0.000000e+00> : vector<256x640xf32>
    %7 = tpu.matmul %3, %6, %cst_8 {dimension_numbers = #tpu.dot_dimension_numbers<[1], [0], [0], [1], [0, 0, 1, 1], [], []>} : vector<256x8xf32>, vector<8x640xf32>, vector<256x640xf32> -> vector<256x640xf32>
    %8 = arith.addf %5, %7 : vector<256x640xf32>
    %9 = vector.extract_strided_slice %8 {offsets = [0, 0], sizes = [256, 128], strides = [1, 1]} : vector<256x640xf32> to vector<256x128xf32>
    %10 = tpu.iota {dimensions = array<i32: 1>} : vector<256x128xi32>
    %c4_i32 = arith.constant 4 : i32
    %11 = vector.broadcast %c4_i32 : i32 to vector<256x128xi32>
    %12 = arith.cmpi slt, %10, %11 : vector<256x128xi32>
    %cst_9 = arith.constant 0xFF800000 : f32
    %13 = vector.broadcast %cst_9 : f32 to vector<256x128xf32>
    %14 = arith.select %12, %9, %13 : vector<256x128xi1>, vector<256x128xf32>
    %cst_10 = arith.constant dense<0xFF800000> : vector<256xf32>
    %15 = vector.multi_reduction <maximumf>, %14, %cst_10 [1] : vector<256x128xf32> to vector<256xf32>
    %16 = vector.shape_cast %15 : vector<256xf32> to vector<256x1xf32>
    %17 = vector.broadcast %16 : vector<256x1xf32> to vector<256x128xf32>
    %18 = arith.cmpf oeq, %14, %17 : vector<256x128xf32>
    %c4_i32_11 = arith.constant 4 : i32
    %19 = vector.broadcast %c4_i32_11 : i32 to vector<256x128xi32>
    %20 = arith.select %18, %10, %19 : vector<256x128xi1>, vector<256x128xi32>
    %cst_12 = arith.constant dense<2147483647> : vector<256xi32>
    %21 = vector.multi_reduction <minsi>, %20, %cst_12 [1] : vector<256x128xi32> to vector<256xi32>
    %22 = vector.shape_cast %21 : vector<256xi32> to vector<256x1xi32>
    %23 = vector.extract_strided_slice %8 {offsets = [0, 128], sizes = [256, 128], strides = [1, 1]} : vector<256x640xf32> to vector<256x128xf32>
    %c1_i32 = arith.constant 1 : i32
    %24 = vector.broadcast %c1_i32 : i32 to vector<256x1xi32>
    %25 = arith.cmpi eq, %22, %24 : vector<256x1xi32>
    %26 = vector.extract_strided_slice %8 {offsets = [0, 256], sizes = [256, 128], strides = [1, 1]} : vector<256x640xf32> to vector<256x128xf32>
    %27 = vector.shape_cast %25 : vector<256x1xi1> to vector<256x1xi1>
    %28 = vector.broadcast %27 : vector<256x1xi1> to vector<256x128xi1>
    %29 = arith.select %28, %26, %23 : vector<256x128xi1>, vector<256x128xf32>
    %c2_i32 = arith.constant 2 : i32
    %30 = vector.broadcast %c2_i32 : i32 to vector<256x1xi32>
    %31 = arith.cmpi eq, %22, %30 : vector<256x1xi32>
    %32 = vector.extract_strided_slice %8 {offsets = [0, 384], sizes = [256, 128], strides = [1, 1]} : vector<256x640xf32> to vector<256x128xf32>
    %33 = vector.shape_cast %31 : vector<256x1xi1> to vector<256x1xi1>
    %34 = vector.broadcast %33 : vector<256x1xi1> to vector<256x128xi1>
    %35 = arith.select %34, %32, %29 : vector<256x128xi1>, vector<256x128xf32>
    %c3_i32 = arith.constant 3 : i32
    %36 = vector.broadcast %c3_i32 : i32 to vector<256x1xi32>
    %37 = arith.cmpi eq, %22, %36 : vector<256x1xi32>
    %38 = vector.extract_strided_slice %8 {offsets = [0, 512], sizes = [256, 128], strides = [1, 1]} : vector<256x640xf32> to vector<256x128xf32>
    %39 = vector.shape_cast %37 : vector<256x1xi1> to vector<256x1xi1>
    %40 = vector.broadcast %39 : vector<256x1xi1> to vector<256x128xi1>
    %41 = arith.select %40, %38, %35 : vector<256x128xi1>, vector<256x128xf32>
    %c0_13 = arith.constant 0 : index
    %c0_14 = arith.constant 0 : index
    %42 = vector.load %arg5[%c0_13, %c0_14] : memref<256x128xf32, #tpu.memory_space<vmem>>, vector<256x128xf32>
    tpu.vector_store %arg5[%c0_13, %c0_14], %41 {strides = array<i32>} : memref<256x128xf32, #tpu.memory_space<vmem>>, vector<256x128xf32>,
    return
  }
  func.func @transform_0(%arg0: i32) -> (i32, i32) {
    %c0_i32 = arith.constant 0 : i32
    %c0_i32_0 = arith.constant 0 : i32
    return %arg0, %c0_i32 : i32, i32
  }
  func.func @transform_1(%arg0: i32) -> (i32, i32) {
    %c0_i32 = arith.constant 0 : i32
    %c0_i32_0 = arith.constant 0 : i32
    return %arg0, %c0_i32 : i32, i32
  }
  func.func @transform_2(%arg0: i32) -> (i32, i32) {
    %c0_i32 = arith.constant 0 : i32
    %c0_i32_0 = arith.constant 0 : i32
    %c0_i32_1 = arith.constant 0 : i32
    return %c0_i32, %c0_i32_0 : i32, i32
  }
  func.func @transform_3(%arg0: i32) -> (i32, i32) {
    %c0_i32 = arith.constant 0 : i32
    %c0_i32_0 = arith.constant 0 : i32
    %c0_i32_1 = arith.constant 0 : i32
    return %c0_i32, %c0_i32_0 : i32, i32
  }
  func.func @transform_4(%arg0: i32) -> (i32, i32) {
    %c0_i32 = arith.constant 0 : i32
    %c0_i32_0 = arith.constant 0 : i32
    return %arg0, %c0_i32 : i32, i32
  }
}

</mosaic_0001>

<llo_original>
// kernel: graphsage_forward.7
$region0: #{graphsage_forward.7}
  #allocation0 [shape = 'u32[]', space=smem, size = 0x4, offset = 0x4, fixed_abs, tag = 'smem constant byte address 0x4 - core index']
  #allocation1 [shape = 'u32[72,128]{1,0:T(1,128)}', space=vmem, size = 0x9000, scoped, tag = 'internal scratch']
  %s0 = inlined_call_operand.vmem [shape: f32[256,8], index: 0, kind: input, shape index: {}]
  %s1 = inlined_call_operand.vmem [shape: f32[8,8], index: 1, kind: input, shape index: {}]
  %s2 = inlined_call_operand.vmem [shape: f32[8,8], index: 2, kind: input, shape index: {}]
  %s3 = inlined_call_operand.vmem [shape: f32[1,8], index: 3, kind: input, shape index: {}]
  %s4 = inlined_call_operand.vmem [shape: bf16[256,8], index: 4, kind: output, shape index: {0}]
  %s5 = inlined_call_operand.vmem [shape: f32[256,8], index: 5, kind: output, shape index: {1}]
  %6 = xla_tuple %s4, %s5
  %s7 = sld [smem:[#allocation0]]
  $region34: #{graphsage_forward.7} parent=0
    _
  %s9 = ssub.s32 1, %s7
  %s10 = scalar_select 0, %s9, %s7
  // Predicated region
  $region2: #{graphsage_forward.7} parent=0 // pred_check
    _
  $region3: #{graphsage_forward.7} parent=0 // pred_check_branch
    %12 = sbr.rel (0) target = $region5
  $region4: #{graphsage_forward.7} parent=0 // pred_region
    _
  $region5: #{graphsage_forward.7} parent=0 // pred_fallthru
    _
  // Predicated region
  $region6: #{graphsage_forward.7} parent=0 // pred_check
    _
  $region7: #{graphsage_forward.7} parent=0 // pred_check_branch
    %14 = sbr.rel (0) target = $region9
  $region8: #{graphsage_forward.7} parent=0 // pred_region
    _
  $region9: #{graphsage_forward.7} parent=0 // pred_fallthru
    _
  // Predicated region
  $region10: #{graphsage_forward.7} parent=0 // pred_check
    _
  $region11: #{graphsage_forward.7} parent=0 // pred_check_branch
    %16 = sbr.rel (0) target = $region13
  $region12: #{graphsage_forward.7} parent=0 // pred_region
    _
  $region13: #{graphsage_forward.7} parent=0 // pred_fallthru
    _
  // Predicated region
  $region14: #{graphsage_forward.7} parent=0 // pred_check
    _
  $region15: #{graphsage_forward.7} parent=0 // pred_check_branch
    %18 = sbr.rel (0) target = $region17
  $region16: #{graphsage_forward.7} parent=0 // pred_region
    _
  $region17: #{graphsage_forward.7} parent=0 // pred_fallthru
    _
  %v19 = vld [vmem:[%s0] sm:$0xff]
  %v20 = vld [vmem:[%s0 + $0x8] sm:$0xff]
  %v21 = vld [vmem:[%s0 + $0x10] sm:$0xff]
  %v22 = vld [vmem:[%s0 + $0x18] sm:$0xff]
  %v23 = vld [vmem:[%s0 + $0x20] sm:$0xff]
  %v24 = vld [vmem:[%s0 + $0x28] sm:$0xff]
  %v25 = vld [vmem:[%s0 + $0x30] sm:$0xff]
  %v26 = vld [vmem:[%s0 + $0x38] sm:$0xff]
  %v27 = vld [vmem:[%s0 + $0x40] sm:$0xff]
  %v28 = vld [vmem:[%s0 + $0x48] sm:$0xff]
  %v29 = vld [vmem:[%s0 + $0x50] sm:$0xff]
  %v30 = vld [vmem:[%s0 + $0x58] sm:$0xff]
  %v31 = vld [vmem:[%s0 + $0x60] sm:$0xff]
  %v32 = vld [vmem:[%s0 + $0x68] sm:$0xff]
  %v33 = vld [vmem:[%s0 + $0x70] sm:$0xff]
  %v34 = vld [vmem:[%s0 + $0x78] sm:$0xff]
  %v35 = vld [vmem:[%s0 + $0x80] sm:$0xff]
  %v36 = vld [vmem:[%s0 + $0x88] sm:$0xff]
  %v37 = vld [vmem:[%s0 + $0x90] sm:$0xff]
  %v38 = vld [vmem:[%s0 + $0x98] sm:$0xff]
  %v39 = vld [vmem:[%s0 + $0xa0] sm:$0xff]
  %v40 = vld [vmem:[%s0 + $0xa8] sm:$0xff]
  %v41 = vld [vmem:[%s0 + $0xb0] sm:$0xff]
  %v42 = vld [vmem:[%s0 + $0xb8] sm:$0xff]
  %v43 = vld [vmem:[%s0 + $0xc0] sm:$0xff]
  %v44 = vld [vmem:[%s0 + $0xc8] sm:$0xff]
  %v45 = vld [vmem:[%s0 + $0xd0] sm:$0xff]
  %v46 = vld [vmem:[%s0 + $0xd8] sm:$0xff]
  %v47 = vld [vmem:[%s0 + $0xe0] sm:$0xff]
  %v48 = vld [vmem:[%s0 + $0xe8] sm:$0xff]
  %v49 = vld [vmem:[%s0 + $0xf0] sm:$0xff]
  %v50 = vld [vmem:[%s0 + $0xf8] sm:$0xff]
  %v51 = vld [vmem:[%s1] sm:$0xff]
  %vm52 = vcmask 64512
  %v54 = vsel %vm52, %v19, 0
  %v57 = vsel %vm52, %v20, 0
  %v60 = vsel %vm52, %v21, 0
  %v63 = vsel %vm52, %v22, 0
  %v66 = vsel %vm52, %v23, 0
  %v69 = vsel %vm52, %v24, 0
  %v72 = vsel %vm52, %v25, 0
  %v75 = vsel %vm52, %v26, 0
  %v78 = vsel %vm52, %v27, 0
  %v81 = vsel %vm52, %v28, 0
  %v84 = vsel %vm52, %v29, 0
  %v87 = vsel %vm52, %v30, 0
  %v90 = vsel %vm52, %v31, 0
  %v93 = vsel %vm52, %v32, 0
  %v96 = vsel %vm52, %v33, 0
  %v99 = vsel %vm52, %v34, 0
  %v102 = vsel %vm52, %v35, 0
  %v105 = vsel %vm52, %v36, 0
  %v108 = vsel %vm52, %v37, 0
  %v111 = vsel %vm52, %v38, 0
  %v114 = vsel %vm52, %v39, 0
  %v117 = vsel %vm52, %v40, 0
  %v120 = vsel %vm52, %v41, 0
  %v123 = vsel %vm52, %v42, 0
  %v126 = vsel %vm52, %v43, 0
  %v129 = vsel %vm52, %v44, 0
  %v132 = vsel %vm52, %v45, 0
  %v135 = vsel %vm52, %v46, 0
  %v138 = vsel %vm52, %v47, 0
  %v141 = vsel %vm52, %v48, 0
  %v144 = vsel %vm52, %v49, 0
  %v147 = vsel %vm52, %v50, 0
  %149 = vmatpush.msra.mxu0 0.0
  %150 = vmatpush.msra.mxu0 0.0
  %151 = vmatpush.msra.mxu0 0.0
  %152 = vmatpush.msra.mxu0 0.0
  %153 = vmatpush.msra.mxu0 0.0
  %154 = vmatpush.msra.mxu0 0.0
  %155 = vmatpush.msra.mxu0 0.0
  %156 = vmatpush.msra.mxu0 0.0
  %157 = vmatpush.msra.mxu0 0.0
  %158 = vmatpush.msra.mxu0 0.0
  %159 = vmatpush.msra.mxu0 0.0
  %160 = vmatpush.msra.mxu0 0.0
  %161 = vmatpush.msra.mxu0 0.0
  %162 = vmatpush.msra.mxu0 0.0
  %163 = vmatpush.msra.mxu0 0.0
  %164 = vmatpush.msra.mxu0 %v51
  %165 = vmatmul.f32.gmra.mxu0 %v54
  %v166 = vpop.f32.mrf.mxu0
  %v167 = vadd.f32 0.0, %v166
  %168 = vmatmul.f32.gmra.mxu0 %v57
  %v169 = vpop.f32.mrf.mxu0
  %v170 = vadd.f32 0.0, %v169
  %171 = vmatmul.f32.gmra.mxu0 %v60
  %v172 = vpop.f32.mrf.mxu0
  %v173 = vadd.f32 0.0, %v172
  %174 = vmatmul.f32.gmra.mxu0 %v63
  %v175 = vpop.f32.mrf.mxu0
  %v176 = vadd.f32 0.0, %v175
  %177 = vmatmul.f32.gmra.mxu0 %v66
  %v178 = vpop.f32.mrf.mxu0
  %v179 = vadd.f32 0.0, %v178
  %180 = vmatmul.f32.gmra.mxu0 %v69
  %v181 = vpop.f32.mrf.mxu0
  %v182 = vadd.f32 0.0, %v181
  %183 = vmatmul.f32.gmra.mxu0 %v72
  %v184 = vpop.f32.mrf.mxu0
  %v185 = vadd.f32 0.0, %v184
  %186 = vmatmul.f32.gmra.mxu0 %v75
  %v187 = vpop.f32.mrf.mxu0
  %v188 = vadd.f32 0.0, %v187
  %189 = vmatmul.f32.gmra.mxu0 %v78
  %v190 = vpop.f32.mrf.mxu0
  %v191 = vadd.f32 0.0, %v190
  %192 = vmatmul.f32.gmra.mxu0 %v81
  %v193 = vpop.f32.mrf.mxu0
  %v194 = vadd.f32 0.0, %v193
  %195 = vmatmul.f32.gmra.mxu0 %v84
  %v196 = vpop.f32.mrf.mxu0
  %v197 = vadd.f32 0.0, %v196
  %198 = vmatmul.f32.gmra.mxu0 %v87
  %v199 = vpop.f32.mrf.mxu0
  %v200 = vadd.f32 0.0, %v199
  %201 = vmatmul.f32.gmra.mxu0 %v90
  %v202 = vpop.f32.mrf.mxu0
  %v203 = vadd.f32 0.0, %v202
  %204 = vmatmul.f32.gmra.mxu0 %v93
  %v205 = vpop.f32.mrf.mxu0
  %v206 = vadd.f32 0.0, %v205
  %207 = vmatmul.f32.gmra.mxu0 %v96
  %v208 = vpop.f32.mrf.mxu0
  %v209 = vadd.f32 0.0, %v208
  %210 = vmatmul.f32.gmra.mxu0 %v99
  %v211 = vpop.f32.mrf.mxu0
  %v212 = vadd.f32 0.0, %v211
  %213 = vmatmul.f32.gmra.mxu0 %v102
  %v214 = vpop.f32.mrf.mxu0
  %v215 = vadd.f32 0.0, %v214
  %216 = vmatmul.f32.gmra.mxu0 %v105
  %v217 = vpop.f32.mrf.mxu0
  %v218 = vadd.f32 0.0, %v217
  %219 = vmatmul.f32.gmra.mxu0 %v108
  %v220 = vpop.f32.mrf.mxu0
  %v221 = vadd.f32 0.0, %v220
  %222 = vmatmul.f32.gmra.mxu0 %v111
  %v223 = vpop.f32.mrf.mxu0
  %v224 = vadd.f32 0.0, %v223
  %225 = vmatmul.f32.gmra.mxu0 %v114
  %v226 = vpop.f32.mrf.mxu0
  %v227 = vadd.f32 0.0, %v226
  %228 = vmatmul.f32.gmra.mxu0 %v117
  %v229 = vpop.f32.mrf.mxu0
  %v230 = vadd.f32 0.0, %v229
  %231 = vmatmul.f32.gmra.mxu0 %v120
  %v232 = vpop.f32.mrf.mxu0
  %v233 = vadd.f32 0.0, %v232
  %234 = vmatmul.f32.gmra.mxu0 %v123
  %v235 = vpop.f32.mrf.mxu0
  %v236 = vadd.f32 0.0, %v235
  %237 = vmatmul.f32.gmra.mxu0 %v126
  %v238 = vpop.f32.mrf.mxu0
  %v239 = vadd.f32 0.0, %v238
  %240 = vmatmul.f32.gmra.mxu0 %v129
  %v241 = vpop.f32.mrf.mxu0
  %v242 = vadd.f32 0.0, %v241
  %243 = vmatmul.f32.gmra.mxu0 %v132
  %v244 = vpop.f32.mrf.mxu0
  %v245 = vadd.f32 0.0, %v244
  %246 = vmatmul.f32.gmra.mxu0 %v135
  %v247 = vpop.f32.mrf.mxu0
  %v248 = vadd.f32 0.0, %v247
  %249 = vmatmul.f32.gmra.mxu0 %v138
  %v250 = vpop.f32.mrf.mxu0
  %v251 = vadd.f32 0.0, %v250
  %252 = vmatmul.f32.gmra.mxu0 %v141
  %v253 = vpop.f32.mrf.mxu0
  %v254 = vadd.f32 0.0, %v253
  %255 = vmatmul.f32.gmra.mxu0 %v144
  %v256 = vpop.f32.mrf.mxu0
  %v257 = vadd.f32 0.0, %v256
  %258 = vmatmul.f32.gmra.mxu0 %v147
  %v259 = vpop.f32.mrf.mxu0
  %v260 = vadd.f32 0.0, %v259
  %261 = vdwg.mxu0
  %v262 = vpack.c.bf16 %v167, %v167
  %v263 = vpack.c.bf16 %v170, %v170
  %v264 = vpack.c.bf16 %v173, %v173
  %v265 = vpack.c.bf16 %v176, %v176
  %v266 = vpack.c.bf16 %v179, %v179
  %v267 = vpack.c.bf16 %v182, %v182
  %v268 = vpack.c.bf16 %v185, %v185
  %v269 = vpack.c.bf16 %v188, %v188
  %v270 = vpack.c.bf16 %v191, %v191
  %v271 = vpack.c.bf16 %v194, %v194
  %v272 = vpack.c.bf16 %v197, %v197
  %v273 = vpack.c.bf16 %v200, %v200
  %v274 = vpack.c.bf16 %v203, %v203
  %v275 = vpack.c.bf16 %v206, %v206
  %v276 = vpack.c.bf16 %v209, %v209
  %v277 = vpack.c.bf16 %v212, %v212
  %v278 = vpack.c.bf16 %v215, %v215
  %v279 = vpack.c.bf16 %v218, %v218
  %v280 = vpack.c.bf16 %v221, %v221
  %v281 = vpack.c.bf16 %v224, %v224
  %v282 = vpack.c.bf16 %v227, %v227
  %v283 = vpack.c.bf16 %v230, %v230
  %v284 = vpack.c.bf16 %v233, %v233
  %v285 = vpack.c.bf16 %v236, %v236
  %v286 = vpack.c.bf16 %v239, %v239
  %v287 = vpack.c.bf16 %v242, %v242
  %v288 = vpack.c.bf16 %v245, %v245
  %v289 = vpack.c.bf16 %v248, %v248
  %v290 = vpack.c.bf16 %v251, %v251
  %v291 = vpack.c.bf16 %v254, %v254
  %v292 = vpack.c.bf16 %v257, %v257
  %v293 = vpack.c.bf16 %v260, %v260
  %vm294 = vcmask 60416
  %295 = vst.msk [vmem:[%s4] sm:$0xf] %vm294, %v262
  %296 = vst.msk [vmem:[%s4 + $0x4] sm:$0xf] %vm294, %v263
  %297 = vst.msk [vmem:[%s4 + $0x8] sm:$0xf] %vm294, %v264
  %298 = vst.msk [vmem:[%s4 + $0xc] sm:$0xf] %vm294, %v265
  %299 = vst.msk [vmem:[%s4 + $0x10] sm:$0xf] %vm294, %v266
  %300 = vst.msk [vmem:[%s4 + $0x14] sm:$0xf] %vm294, %v267
  %301 = vst.msk [vmem:[%s4 + $0x18] sm:$0xf] %vm294, %v268
  %302 = vst.msk [vmem:[%s4 + $0x1c] sm:$0xf] %vm294, %v269
  %303 = vst.msk [vmem:[%s4 + $0x20] sm:$0xf] %vm294, %v270
  %304 = vst.msk [vmem:[%s4 + $0x24] sm:$0xf] %vm294, %v271
  %305 = vst.msk [vmem:[%s4 + $0x28] sm:$0xf] %vm294, %v272
  %306 = vst.msk [vmem:[%s4 + $0x2c] sm:$0xf] %vm294, %v273
  %307 = vst.msk [vmem:[%s4 + $0x30] sm:$0xf] %vm294, %v274
  %308 = vst.msk [vmem:[%s4 + $0x34] sm:$0xf] %vm294, %v275
  %309 = vst.msk [vmem:[%s4 + $0x38] sm:$0xf] %vm294, %v276
  %310 = vst.msk [vmem:[%s4 + $0x3c] sm:$0xf] %vm294, %v277
  %311 = vst.msk [vmem:[%s4 + $0x40] sm:$0xf] %vm294, %v278
  %312 = vst.msk [vmem:[%s4 + $0x44] sm:$0xf] %vm294, %v279
  %313 = vst.msk [vmem:[%s4 + $0x48] sm:$0xf] %vm294, %v280
  %314 = vst.msk [vmem:[%s4 + $0x4c] sm:$0xf] %vm294, %v281
  %315 = vst.msk [vmem:[%s4 + $0x50] sm:$0xf] %vm294, %v282
  %316 = vst.msk [vmem:[%s4 + $0x54] sm:$0xf] %vm294, %v283
  %317 = vst.msk [vmem:[%s4 + $0x58] sm:$0xf] %vm294, %v284
  %318 = vst.msk [vmem:[%s4 + $0x5c] sm:$0xf] %vm294, %v285
  %319 = vst.msk [vmem:[%s4 + $0x60] sm:$0xf] %vm294, %v286
  %320 = vst.msk [vmem:[%s4 + $0x64] sm:$0xf] %vm294, %v287
  %321 = vst.msk [vmem:[%s4 + $0x68] sm:$0xf] %vm294, %v288
  %322 = vst.msk [vmem:[%s4 + $0x6c] sm:$0xf] %vm294, %v289
  %323 = vst.msk [vmem:[%s4 + $0x70] sm:$0xf] %vm294, %v290
  %324 = vst.msk [vmem:[%s4 + $0x74] sm:$0xf] %vm294, %v291
  %325 = vst.msk [vmem:[%s4 + $0x78] sm:$0xf] %vm294, %v292
  %326 = vst.msk [vmem:[%s4 + $0x7c] sm:$0xf] %vm294, %v293
  %v327 = vld [vmem:[%s2] sm:$0xff]
  %v328 = vld [vmem:[%s3] sm:$0x1]
  %v330 = vperm.slane %v328, 0
  %332 = vmatpush.msra.mxu0 0.0
  %333 = vmatpush.msra.mxu0 0.0
  %334 = vmatpush.msra.mxu0 0.0
  %335 = vmatpush.msra.mxu0 0.0
  %336 = vmatpush.msra.mxu0 0.0
  %337 = vmatpush.msra.mxu0 0.0
  %338 = vmatpush.msra.mxu0 0.0
  %339 = vmatpush.msra.mxu0 0.0
  %340 = vmatpush.msra.mxu0 0.0
  %341 = vmatpush.msra.mxu0 0.0
  %342 = vmatpush.msra.mxu0 0.0
  %343 = vmatpush.msra.mxu0 0.0
  %344 = vmatpush.msra.mxu0 0.0
  %345 = vmatpush.msra.mxu0 0.0
  %346 = vmatpush.msra.mxu0 0.0
  %347 = vmatpush.msra.mxu0 %v327
  %348 = vmatmul.f32.gmra.mxu0 %v54
  %v349 = vpop.f32.mrf.mxu0
  %v350 = vadd.f32 %v330, %v349
  %351 = vmatmul.f32.gmra.mxu0 %v57
  %v352 = vpop.f32.mrf.mxu0
  %v353 = vadd.f32 %v330, %v352
  %354 = vmatmul.f32.gmra.mxu0 %v60
  %v355 = vpop.f32.mrf.mxu0
  %v356 = vadd.f32 %v330, %v355
  %357 = vmatmul.f32.gmra.mxu0 %v63
  %v358 = vpop.f32.mrf.mxu0
  %v359 = vadd.f32 %v330, %v358
  %360 = vmatmul.f32.gmra.mxu0 %v66
  %v361 = vpop.f32.mrf.mxu0
  %v362 = vadd.f32 %v330, %v361
  %363 = vmatmul.f32.gmra.mxu0 %v69
  %v364 = vpop.f32.mrf.mxu0
  %v365 = vadd.f32 %v330, %v364
  %366 = vmatmul.f32.gmra.mxu0 %v72
  %v367 = vpop.f32.mrf.mxu0
  %v368 = vadd.f32 %v330, %v367
  %369 = vmatmul.f32.gmra.mxu0 %v75
  %v370 = vpop.f32.mrf.mxu0
  %v371 = vadd.f32 %v330, %v370
  %372 = vmatmul.f32.gmra.mxu0 %v78
  %v373 = vpop.f32.mrf.mxu0
  %v374 = vadd.f32 %v330, %v373
  %375 = vmatmul.f32.gmra.mxu0 %v81
  %v376 = vpop.f32.mrf.mxu0
  %v377 = vadd.f32 %v330, %v376
  %378 = vmatmul.f32.gmra.mxu0 %v84
  %v379 = vpop.f32.mrf.mxu0
  %v380 = vadd.f32 %v330, %v379
  %381 = vmatmul.f32.gmra.mxu0 %v87
  %v382 = vpop.f32.mrf.mxu0
  %v383 = vadd.f32 %v330, %v382
  %384 = vmatmul.f32.gmra.mxu0 %v90
  %v385 = vpop.f32.mrf.mxu0
  %v386 = vadd.f32 %v330, %v385
  %387 = vmatmul.f32.gmra.mxu0 %v93
  %v388 = vpop.f32.mrf.mxu0
  %v389 = vadd.f32 %v330, %v388
  %390 = vmatmul.f32.gmra.mxu0 %v96
  %v391 = vpop.f32.mrf.mxu0
  %v392 = vadd.f32 %v330, %v391
  %393 = vmatmul.f32.gmra.mxu0 %v99
  %v394 = vpop.f32.mrf.mxu0
  %v395 = vadd.f32 %v330, %v394
  %396 = vmatmul.f32.gmra.mxu0 %v102
  %v397 = vpop.f32.mrf.mxu0
  %v398 = vadd.f32 %v330, %v397
  %399 = vmatmul.f32.gmra.mxu0 %v105
  %v400 = vpop.f32.mrf.mxu0
  %v401 = vadd.f32 %v330, %v400
  %402 = vmatmul.f32.gmra.mxu0 %v108
  %v403 = vpop.f32.mrf.mxu0
  %v404 = vadd.f32 %v330, %v403
  %405 = vmatmul.f32.gmra.mxu0 %v111
  %v406 = vpop.f32.mrf.mxu0
  %v407 = vadd.f32 %v330, %v406
  %408 = vmatmul.f32.gmra.mxu0 %v114
  %v409 = vpop.f32.mrf.mxu0
  %v410 = vadd.f32 %v330, %v409
  %411 = vmatmul.f32.gmra.mxu0 %v117
  %v412 = vpop.f32.mrf.mxu0
  %v413 = vadd.f32 %v330, %v412
  %414 = vmatmul.f32.gmra.mxu0 %v120
  %v415 = vpop.f32.mrf.mxu0
  %v416 = vadd.f32 %v330, %v415
  %417 = vmatmul.f32.gmra.mxu0 %v123
  %v418 = vpop.f32.mrf.mxu0
  %v419 = vadd.f32 %v330, %v418
  %420 = vmatmul.f32.gmra.mxu0 %v126
  %v421 = vpop.f32.mrf.mxu0
  %v422 = vadd.f32 %v330, %v421
  %423 = vmatmul.f32.gmra.mxu0 %v129
  %v424 = vpop.f32.mrf.mxu0
  %v425 = vadd.f32 %v330, %v424
  %426 = vmatmul.f32.gmra.mxu0 %v132
  %v427 = vpop.f32.mrf.mxu0
  %v428 = vadd.f32 %v330, %v427
  %429 = vmatmul.f32.gmra.mxu0 %v135
  %v430 = vpop.f32.mrf.mxu0
  %v431 = vadd.f32 %v330, %v430
  %432 = vmatmul.f32.gmra.mxu0 %v138
  %v433 = vpop.f32.mrf.mxu0
  %v434 = vadd.f32 %v330, %v433
  %435 = vmatmul.f32.gmra.mxu0 %v141
  %v436 = vpop.f32.mrf.mxu0
  %v437 = vadd.f32 %v330, %v436
  %438 = vmatmul.f32.gmra.mxu0 %v144
  %v439 = vpop.f32.mrf.mxu0
  %v440 = vadd.f32 %v330, %v439
  %441 = vmatmul.f32.gmra.mxu0 %v147
  %v442 = vpop.f32.mrf.mxu0
  %v443 = vadd.f32 %v330, %v442
  %444 = vdwg.mxu0
  %445 = vst.msk [vmem:[%s5] sm:$0xff] %vm52, %v350
  %446 = vst.msk [vmem:[%s5 + $0x8] sm:$0xff] %vm52, %v353
  %447 = vst.msk [vmem:[%s5 + $0x10] sm:$0xff] %vm52, %v356
  %448 = vst.msk [vmem:[%s5 + $0x18] sm:$0xff] %vm52, %v359
  %449 = vst.msk [vmem:[%s5 + $0x20] sm:$0xff] %vm52, %v362
  %450 = vst.msk [vmem:[%s5 + $0x28] sm:$0xff] %vm52, %v365
  %451 = vst.msk [vmem:[%s5 + $0x30] sm:$0xff] %vm52, %v368
  %452 = vst.msk [vmem:[%s5 + $0x38] sm:$0xff] %vm52, %v371
  %453 = vst.msk [vmem:[%s5 + $0x40] sm:$0xff] %vm52, %v374
  %454 = vst.msk [vmem:[%s5 + $0x48] sm:$0xff] %vm52, %v377
  %455 = vst.msk [vmem:[%s5 + $0x50] sm:$0xff] %vm52, %v380
  %456 = vst.msk [vmem:[%s5 + $0x58] sm:$0xff] %vm52, %v383
  %457 = vst.msk [vmem:[%s5 + $0x60] sm:$0xff] %vm52, %v386
  %458 = vst.msk [vmem:[%s5 + $0x68] sm:$0xff] %vm52, %v389
  %459 = vst.msk [vmem:[%s5 + $0x70] sm:$0xff] %vm52, %v392
  %460 = vst.msk [vmem:[%s5 + $0x78] sm:$0xff] %vm52, %v395
  %461 = vst.msk [vmem:[%s5 + $0x80] sm:$0xff] %vm52, %v398
  %462 = vst.msk [vmem:[%s5 + $0x88] sm:$0xff] %vm52, %v401
  %463 = vst.msk [vmem:[%s5 + $0x90] sm:$0xff] %vm52, %v404
  %464 = vst.msk [vmem:[%s5 + $0x98] sm:$0xff] %vm52, %v407
  %465 = vst.msk [vmem:[%s5 + $0xa0] sm:$0xff] %vm52, %v410
  %466 = vst.msk [vmem:[%s5 + $0xa8] sm:$0xff] %vm52, %v413
  %467 = vst.msk [vmem:[%s5 + $0xb0] sm:$0xff] %vm52, %v416
  %468 = vst.msk [vmem:[%s5 + $0xb8] sm:$0xff] %vm52, %v419
  %469 = vst.msk [vmem:[%s5 + $0xc0] sm:$0xff] %vm52, %v422
  %470 = vst.msk [vmem:[%s5 + $0xc8] sm:$0xff] %vm52, %v425
  %471 = vst.msk [vmem:[%s5 + $0xd0] sm:$0xff] %vm52, %v428
  %472 = vst.msk [vmem:[%s5 + $0xd8] sm:$0xff] %vm52, %v431
  %473 = vst.msk [vmem:[%s5 + $0xe0] sm:$0xff] %vm52, %v434
  %474 = vst.msk [vmem:[%s5 + $0xe8] sm:$0xff] %vm52, %v437
  %475 = vst.msk [vmem:[%s5 + $0xf0] sm:$0xff] %vm52, %v440
  %476 = vst.msk [vmem:[%s5 + $0xf8] sm:$0xff] %vm52, %v443
  // Predicated region
  $region18: #{graphsage_forward.7} parent=0 // pred_check
    _
  $region19: #{graphsage_forward.7} parent=0 // pred_check_branch
    %478 = sbr.rel (0) target = $region21
  $region20: #{graphsage_forward.7} parent=0 // pred_region
    _
  $region21: #{graphsage_forward.7} parent=0 // pred_fallthru
    _
  // Predicated region
  $region22: #{graphsage_forward.7} parent=0 // pred_check
    _
  $region23: #{graphsage_forward.7} parent=0 // pred_check_branch
    %480 = sbr.rel (0) target = $region25
  $region24: #{graphsage_forward.7} parent=0 // pred_region
    _
  $region25: #{graphsage_forward.7} parent=0 // pred_fallthru
    _
  // Predicated region
  $region26: #{graphsage_forward.7} parent=0 // pred_check
    _
  $region27: #{graphsage_forward.7} parent=0 // pred_check_branch
    %482 = sbr.rel (0) target = $region29
  $region28: #{graphsage_forward.7} parent=0 // pred_region
    _
  $region29: #{graphsage_forward.7} parent=0 // pred_fallthru
    _
  // Predicated region
  $region30: #{graphsage_forward.7} parent=0 // pred_check
    _
  $region31: #{graphsage_forward.7} parent=0 // pred_check_branch
    %484 = sbr.rel (0) target = $region33
  $region32: #{graphsage_forward.7} parent=0 // pred_region
    _
  $region33: #{graphsage_forward.7} parent=0 // pred_fallthru
    _

// kernel: graphsage_forward.5
$region0: #{graphsage_forward.5}
  #allocation0 [shape = 'u32[]', space=smem, size = 0x4, offset = 0x4, fixed_abs, tag = 'smem constant byte address 0x4 - core index']
  #allocation1 [shape = 'u32[72,128]{1,0:T(1,128)}', space=vmem, size = 0x9000, scoped, tag = 'internal scratch']
  %s0 = inlined_call_operand.vmem [shape: f32[256,32], index: 0, kind: input, shape index: {}]
  %s1 = inlined_call_operand.vmem [shape: f32[32,8], index: 1, kind: input, shape index: {}]
  %s2 = inlined_call_operand.vmem [shape: f32[32,8], index: 2, kind: input, shape index: {}]
  %s3 = inlined_call_operand.vmem [shape: f32[1,8], index: 3, kind: input, shape index: {}]
  %s4 = inlined_call_operand.vmem [shape: bf16[256,8], index: 4, kind: output, shape index: {0}]
  %s5 = inlined_call_operand.vmem [shape: f32[256,8], index: 5, kind: output, shape index: {1}]
  %6 = xla_tuple %s4, %s5
  %s7 = sld [smem:[#allocation0]]
  $region34: #{graphsage_forward.5} parent=0
    _
  %s9 = ssub.s32 1, %s7
  %s10 = scalar_select 0, %s9, %s7
  // Predicated region
  $region2: #{graphsage_forward.5} parent=0 // pred_check
    _
  $region3: #{graphsage_forward.5} parent=0 // pred_check_branch
    %12 = sbr.rel (0) target = $region5
  $region4: #{graphsage_forward.5} parent=0 // pred_region
    _
  $region5: #{graphsage_forward.5} parent=0 // pred_fallthru
    _
  // Predicated region
  $region6: #{graphsage_forward.5} parent=0 // pred_check
    _
  $region7: #{graphsage_forward.5} parent=0 // pred_check_branch
    %14 = sbr.rel (0) target = $region9
  $region8: #{graphsage_forward.5} parent=0 // pred_region
    _
  $region9: #{graphsage_forward.5} parent=0 // pred_fallthru
    _
  // Predicated region
  $region10: #{graphsage_forward.5} parent=0 // pred_check
    _
  $region11: #{graphsage_forward.5} parent=0 // pred_check_branch
    %16 = sbr.rel (0) target = $region13
  $region12: #{graphsage_forward.5} parent=0 // pred_region
    _
  $region13: #{graphsage_forward.5} parent=0 // pred_fallthru
    _
  // Predicated region
  $region14: #{graphsage_forward.5} parent=0 // pred_check
    _
  $region15: #{graphsage_forward.5} parent=0 // pred_check_branch
    %18 = sbr.rel (0) target = $region17
  $region16: #{graphsage_forward.5} parent=0 // pred_region
    _
  $region17: #{graphsage_forward.5} parent=0 // pred_fallthru
    _
  %v19 = vld [vmem:[%s0] sm:$0xff]
  %v20 = vld [vmem:[%s0 + $0x8] sm:$0xff]
  %v21 = vld [vmem:[%s0 + $0x10] sm:$0xff]
  %v22 = vld [vmem:[%s0 + $0x18] sm:$0xff]
  %v23 = vld [vmem:[%s0 + $0x20] sm:$0xff]
  %v24 = vld [vmem:[%s0 + $0x28] sm:$0xff]
  %v25 = vld [vmem:[%s0 + $0x30] sm:$0xff]
  %v26 = vld [vmem:[%s0 + $0x38] sm:$0xff]
  %v27 = vld [vmem:[%s0 + $0x40] sm:$0xff]
  %v28 = vld [vmem:[%s0 + $0x48] sm:$0xff]
  %v29 = vld [vmem:[%s0 + $0x50] sm:$0xff]
  %v30 = vld [vmem:[%s0 + $0x58] sm:$0xff]
  %v31 = vld [vmem:[%s0 + $0x60] sm:$0xff]
  %v32 = vld [vmem:[%s0 + $0x68] sm:$0xff]
  %v33 = vld [vmem:[%s0 + $0x70] sm:$0xff]
  %v34 = vld [vmem:[%s0 + $0x78] sm:$0xff]
  %v35 = vld [vmem:[%s0 + $0x80] sm:$0xff]
  %v36 = vld [vmem:[%s0 + $0x88] sm:$0xff]
  %v37 = vld [vmem:[%s0 + $0x90] sm:$0xff]
  %v38 = vld [vmem:[%s0 + $0x98] sm:$0xff]
  %v39 = vld [vmem:[%s0 + $0xa0] sm:$0xff]
  %v40 = vld [vmem:[%s0 + $0xa8] sm:$0xff]
  %v41 = vld [vmem:[%s0 + $0xb0] sm:$0xff]
  %v42 = vld [vmem:[%s0 + $0xb8] sm:$0xff]
  %v43 = vld [vmem:[%s0 + $0xc0] sm:$0xff]
  %v44 = vld [vmem:[%s0 + $0xc8] sm:$0xff]
  %v45 = vld [vmem:[%s0 + $0xd0] sm:$0xff]
  %v46 = vld [vmem:[%s0 + $0xd8] sm:$0xff]
  %v47 = vld [vmem:[%s0 + $0xe0] sm:$0xff]
  %v48 = vld [vmem:[%s0 + $0xe8] sm:$0xff]
  %v49 = vld [vmem:[%s0 + $0xf0] sm:$0xff]
  %v50 = vld [vmem:[%s0 + $0xf8] sm:$0xff]
  %v51 = vld [vmem:[%s1] sm:$0xff]
  %v52 = vld [vmem:[%s1 + $0x8] sm:$0xff]
  %v53 = vld [vmem:[%s1 + $0x10] sm:$0xff]
  %v54 = vld [vmem:[%s1 + $0x18] sm:$0xff]
  %vm55 = vcmask 261120
  %v57 = vsel %vm55, %v19, 0
  %v60 = vsel %vm55, %v20, 0
  %v63 = vsel %vm55, %v21, 0
  %v66 = vsel %vm55, %v22, 0
  %v69 = vsel %vm55, %v23, 0
  %v72 = vsel %vm55, %v24, 0
  %v75 = vsel %vm55, %v25, 0
  %v78 = vsel %vm55, %v26, 0
  %v81 = vsel %vm55, %v27, 0
  %v84 = vsel %vm55, %v28, 0
  %v87 = vsel %vm55, %v29, 0
  %v90 = vsel %vm55, %v30, 0
  %v93 = vsel %vm55, %v31, 0
  %v96 = vsel %vm55, %v32, 0
  %v99 = vsel %vm55, %v33, 0
  %v102 = vsel %vm55, %v34, 0
  %v105 = vsel %vm55, %v35, 0
  %v108 = vsel %vm55, %v36, 0
  %v111 = vsel %vm55, %v37, 0
  %v114 = vsel %vm55, %v38, 0
  %v117 = vsel %vm55, %v39, 0
  %v120 = vsel %vm55, %v40, 0
  %v123 = vsel %vm55, %v41, 0
  %v126 = vsel %vm55, %v42, 0
  %v129 = vsel %vm55, %v43, 0
  %v132 = vsel %vm55, %v44, 0
  %v135 = vsel %vm55, %v45, 0
  %v138 = vsel %vm55, %v46, 0
  %v141 = vsel %vm55, %v47, 0
  %v144 = vsel %vm55, %v48, 0
  %v147 = vsel %vm55, %v49, 0
  %v150 = vsel %vm55, %v50, 0
  %152 = vmatpush.msra.mxu0 0.0
  %153 = vmatpush.msra.mxu0 0.0
  %154 = vmatpush.msra.mxu0 0.0
  %155 = vmatpush.msra.mxu0 0.0
  %156 = vmatpush.msra.mxu0 0.0
  %157 = vmatpush.msra.mxu0 0.0
  %158 = vmatpush.msra.mxu0 0.0
  %159 = vmatpush.msra.mxu0 0.0
  %160 = vmatpush.msra.mxu0 0.0
  %161 = vmatpush.msra.mxu0 0.0
  %162 = vmatpush.msra.mxu0 0.0
  %163 = vmatpush.msra.mxu0 0.0
  %164 = vmatpush.msra.mxu0 %v54
  %165 = vmatpush.msra.mxu0 %v53
  %166 = vmatpush.msra.mxu0 %v52
  %167 = vmatpush.msra.mxu0 %v51
  %168 = vmatmul.f32.gmra.mxu0 %v57
  %v169 = vpop.f32.mrf.mxu0
  %v170 = vadd.f32 0.0, %v169
  %171 = vmatmul.f32.gmra.mxu0 %v60
  %v172 = vpop.f32.mrf.mxu0
  %v173 = vadd.f32 0.0, %v172
  %174 = vmatmul.f32.gmra.mxu0 %v63
  %v175 = vpop.f32.mrf.mxu0
  %v176 = vadd.f32 0.0, %v175
  %177 = vmatmul.f32.gmra.mxu0 %v66
  %v178 = vpop.f32.mrf.mxu0
  %v179 = vadd.f32 0.0, %v178
  %180 = vmatmul.f32.gmra.mxu0 %v69
  %v181 = vpop.f32.mrf.mxu0
  %v182 = vadd.f32 0.0, %v181
  %183 = vmatmul.f32.gmra.mxu0 %v72
  %v184 = vpop.f32.mrf.mxu0
  %v185 = vadd.f32 0.0, %v184
  %186 = vmatmul.f32.gmra.mxu0 %v75
  %v187 = vpop.f32.mrf.mxu0
  %v188 = vadd.f32 0.0, %v187
  %189 = vmatmul.f32.gmra.mxu0 %v78
  %v190 = vpop.f32.mrf.mxu0
  %v191 = vadd.f32 0.0, %v190
  %192 = vmatmul.f32.gmra.mxu0 %v81
  %v193 = vpop.f32.mrf.mxu0
  %v194 = vadd.f32 0.0, %v193
  %195 = vmatmul.f32.gmra.mxu0 %v84
  %v196 = vpop.f32.mrf.mxu0
  %v197 = vadd.f32 0.0, %v196
  %198 = vmatmul.f32.gmra.mxu0 %v87
  %v199 = vpop.f32.mrf.mxu0
  %v200 = vadd.f32 0.0, %v199
  %201 = vmatmul.f32.gmra.mxu0 %v90
  %v202 = vpop.f32.mrf.mxu0
  %v203 = vadd.f32 0.0, %v202
  %204 = vmatmul.f32.gmra.mxu0 %v93
  %v205 = vpop.f32.mrf.mxu0
  %v206 = vadd.f32 0.0, %v205
  %207 = vmatmul.f32.gmra.mxu0 %v96
  %v208 = vpop.f32.mrf.mxu0
  %v209 = vadd.f32 0.0, %v208
  %210 = vmatmul.f32.gmra.mxu0 %v99
  %v211 = vpop.f32.mrf.mxu0
  %v212 = vadd.f32 0.0, %v211
  %213 = vmatmul.f32.gmra.mxu0 %v102
  %v214 = vpop.f32.mrf.mxu0
  %v215 = vadd.f32 0.0, %v214
  %216 = vmatmul.f32.gmra.mxu0 %v105
  %v217 = vpop.f32.mrf.mxu0
  %v218 = vadd.f32 0.0, %v217
  %219 = vmatmul.f32.gmra.mxu0 %v108
  %v220 = vpop.f32.mrf.mxu0
  %v221 = vadd.f32 0.0, %v220
  %222 = vmatmul.f32.gmra.mxu0 %v111
  %v223 = vpop.f32.mrf.mxu0
  %v224 = vadd.f32 0.0, %v223
  %225 = vmatmul.f32.gmra.mxu0 %v114
  %v226 = vpop.f32.mrf.mxu0
  %v227 = vadd.f32 0.0, %v226
  %228 = vmatmul.f32.gmra.mxu0 %v117
  %v229 = vpop.f32.mrf.mxu0
  %v230 = vadd.f32 0.0, %v229
  %231 = vmatmul.f32.gmra.mxu0 %v120
  %v232 = vpop.f32.mrf.mxu0
  %v233 = vadd.f32 0.0, %v232
  %234 = vmatmul.f32.gmra.mxu0 %v123
  %v235 = vpop.f32.mrf.mxu0
  %v236 = vadd.f32 0.0, %v235
  %237 = vmatmul.f32.gmra.mxu0 %v126
  %v238 = vpop.f32.mrf.mxu0
  %v239 = vadd.f32 0.0, %v238
  %240 = vmatmul.f32.gmra.mxu0 %v129
  %v241 = vpop.f32.mrf.mxu0
  %v242 = vadd.f32 0.0, %v241
  %243 = vmatmul.f32.gmra.mxu0 %v132
  %v244 = vpop.f32.mrf.mxu0
  %v245 = vadd.f32 0.0, %v244
  %246 = vmatmul.f32.gmra.mxu0 %v135
  %v247 = vpop.f32.mrf.mxu0
  %v248 = vadd.f32 0.0, %v247
  %249 = vmatmul.f32.gmra.mxu0 %v138
  %v250 = vpop.f32.mrf.mxu0
  %v251 = vadd.f32 0.0, %v250
  %252 = vmatmul.f32.gmra.mxu0 %v141
  %v253 = vpop.f32.mrf.mxu0
  %v254 = vadd.f32 0.0, %v253
  %255 = vmatmul.f32.gmra.mxu0 %v144
  %v256 = vpop.f32.mrf.mxu0
  %v257 = vadd.f32 0.0, %v256
  %258 = vmatmul.f32.gmra.mxu0 %v147
  %v259 = vpop.f32.mrf.mxu0
  %v260 = vadd.f32 0.0, %v259
  %261 = vmatmul.f32.gmra.mxu0 %v150
  %v262 = vpop.f32.mrf.mxu0
  %v263 = vadd.f32 0.0, %v262
  %264 = vdwg.mxu0
  %v265 = vpack.c.bf16 %v170, %v170
  %v266 = vpack.c.bf16 %v173, %v173
  %v267 = vpack.c.bf16 %v176, %v176
  %v268 = vpack.c.bf16 %v179, %v179
  %v269 = vpack.c.bf16 %v182, %v182
  %v270 = vpack.c.bf16 %v185, %v185
  %v271 = vpack.c.bf16 %v188, %v188
  %v272 = vpack.c.bf16 %v191, %v191
  %v273 = vpack.c.bf16 %v194, %v194
  %v274 = vpack.c.bf16 %v197, %v197
  %v275 = vpack.c.bf16 %v200, %v200
  %v276 = vpack.c.bf16 %v203, %v203
  %v277 = vpack.c.bf16 %v206, %v206
  %v278 = vpack.c.bf16 %v209, %v209
  %v279 = vpack.c.bf16 %v212, %v212
  %v280 = vpack.c.bf16 %v215, %v215
  %v281 = vpack.c.bf16 %v218, %v218
  %v282 = vpack.c.bf16 %v221, %v221
  %v283 = vpack.c.bf16 %v224, %v224
  %v284 = vpack.c.bf16 %v227, %v227
  %v285 = vpack.c.bf16 %v230, %v230
  %v286 = vpack.c.bf16 %v233, %v233
  %v287 = vpack.c.bf16 %v236, %v236
  %v288 = vpack.c.bf16 %v239, %v239
  %v289 = vpack.c.bf16 %v242, %v242
  %v290 = vpack.c.bf16 %v245, %v245
  %v291 = vpack.c.bf16 %v248, %v248
  %v292 = vpack.c.bf16 %v251, %v251
  %v293 = vpack.c.bf16 %v254, %v254
  %v294 = vpack.c.bf16 %v257, %v257
  %v295 = vpack.c.bf16 %v260, %v260
  %v296 = vpack.c.bf16 %v263, %v263
  %vm297 = vcmask 60416
  %298 = vst.msk [vmem:[%s4] sm:$0xf] %vm297, %v265
  %299 = vst.msk [vmem:[%s4 + $0x4] sm:$0xf] %vm297, %v266
  %300 = vst.msk [vmem:[%s4 + $0x8] sm:$0xf] %vm297, %v267
  %301 = vst.msk [vmem:[%s4 + $0xc] sm:$0xf] %vm297, %v268
  %302 = vst.msk [vmem:[%s4 + $0x10] sm:$0xf] %vm297, %v269
  %303 = vst.msk [vmem:[%s4 + $0x14] sm:$0xf] %vm297, %v270
  %304 = vst.msk [vmem:[%s4 + $0x18] sm:$0xf] %vm297, %v271
  %305 = vst.msk [vmem:[%s4 + $0x1c] sm:$0xf] %vm297, %v272
  %306 = vst.msk [vmem:[%s4 + $0x20] sm:$0xf] %vm297, %v273
  %307 = vst.msk [vmem:[%s4 + $0x24] sm:$0xf] %vm297, %v274
  %308 = vst.msk [vmem:[%s4 + $0x28] sm:$0xf] %vm297, %v275
  %309 = vst.msk [vmem:[%s4 + $0x2c] sm:$0xf] %vm297, %v276
  %310 = vst.msk [vmem:[%s4 + $0x30] sm:$0xf] %vm297, %v277
  %311 = vst.msk [vmem:[%s4 + $0x34] sm:$0xf] %vm297, %v278
  %312 = vst.msk [vmem:[%s4 + $0x38] sm:$0xf] %vm297, %v279
  %313 = vst.msk [vmem:[%s4 + $0x3c] sm:$0xf] %vm297, %v280
  %314 = vst.msk [vmem:[%s4 + $0x40] sm:$0xf] %vm297, %v281
  %315 = vst.msk [vmem:[%s4 + $0x44] sm:$0xf] %vm297, %v282
  %316 = vst.msk [vmem:[%s4 + $0x48] sm:$0xf] %vm297, %v283
  %317 = vst.msk [vmem:[%s4 + $0x4c] sm:$0xf] %vm297, %v284
  %318 = vst.msk [vmem:[%s4 + $0x50] sm:$0xf] %vm297, %v285
  %319 = vst.msk [vmem:[%s4 + $0x54] sm:$0xf] %vm297, %v286
  %320 = vst.msk [vmem:[%s4 + $0x58] sm:$0xf] %vm297, %v287
  %321 = vst.msk [vmem:[%s4 + $0x5c] sm:$0xf] %vm297, %v288
  %322 = vst.msk [vmem:[%s4 + $0x60] sm:$0xf] %vm297, %v289
  %323 = vst.msk [vmem:[%s4 + $0x64] sm:$0xf] %vm297, %v290
  %324 = vst.msk [vmem:[%s4 + $0x68] sm:$0xf] %vm297, %v291
  %325 = vst.msk [vmem:[%s4 + $0x6c] sm:$0xf] %vm297, %v292
  %326 = vst.msk [vmem:[%s4 + $0x70] sm:$0xf] %vm297, %v293
  %327 = vst.msk [vmem:[%s4 + $0x74] sm:$0xf] %vm297, %v294
  %328 = vst.msk [vmem:[%s4 + $0x78] sm:$0xf] %vm297, %v295
  %329 = vst.msk [vmem:[%s4 + $0x7c] sm:$0xf] %vm297, %v296
  %v330 = vld [vmem:[%s2] sm:$0xff]
  %v331 = vld [vmem:[%s2 + $0x8] sm:$0xff]
  %v332 = vld [vmem:[%s2 + $0x10] sm:$0xff]
  %v333 = vld [vmem:[%s2 + $0x18] sm:$0xff]
  %v334 = vld [vmem:[%s3] sm:$0x1]
  %v336 = vperm.slane %v334, 0
  %338 = vmatpush.msra.mxu0 0.0
  %339 = vmatpush.msra.mxu0 0.0
  %340 = vmatpush.msra.mxu0 0.0
  %341 = vmatpush.msra.mxu0 0.0
  %342 = vmatpush.msra.mxu0 0.0
  %343 = vmatpush.msra.mxu0 0.0
  %344 = vmatpush.msra.mxu0 0.0
  %345 = vmatpush.msra.mxu0 0.0
  %346 = vmatpush.msra.mxu0 0.0
  %347 = vmatpush.msra.mxu0 0.0
  %348 = vmatpush.msra.mxu0 0.0
  %349 = vmatpush.msra.mxu0 0.0
  %350 = vmatpush.msra.mxu0 %v333
  %351 = vmatpush.msra.mxu0 %v332
  %352 = vmatpush.msra.mxu0 %v331
  %353 = vmatpush.msra.mxu0 %v330
  %354 = vmatmul.f32.gmra.mxu0 %v57
  %v355 = vpop.f32.mrf.mxu0
  %v356 = vadd.f32 %v336, %v355
  %357 = vmatmul.f32.gmra.mxu0 %v60
  %v358 = vpop.f32.mrf.mxu0
  %v359 = vadd.f32 %v336, %v358
  %360 = vmatmul.f32.gmra.mxu0 %v63
  %v361 = vpop.f32.mrf.mxu0
  %v362 = vadd.f32 %v336, %v361
  %363 = vmatmul.f32.gmra.mxu0 %v66
  %v364 = vpop.f32.mrf.mxu0
  %v365 = vadd.f32 %v336, %v364
  %366 = vmatmul.f32.gmra.mxu0 %v69
  %v367 = vpop.f32.mrf.mxu0
  %v368 = vadd.f32 %v336, %v367
  %369 = vmatmul.f32.gmra.mxu0 %v72
  %v370 = vpop.f32.mrf.mxu0
  %v371 = vadd.f32 %v336, %v370
  %372 = vmatmul.f32.gmra.mxu0 %v75
  %v373 = vpop.f32.mrf.mxu0
  %v374 = vadd.f32 %v336, %v373
  %375 = vmatmul.f32.gmra.mxu0 %v78
  %v376 = vpop.f32.mrf.mxu0
  %v377 = vadd.f32 %v336, %v376
  %378 = vmatmul.f32.gmra.mxu0 %v81
  %v379 = vpop.f32.mrf.mxu0
  %v380 = vadd.f32 %v336, %v379
  %381 = vmatmul.f32.gmra.mxu0 %v84
  %v382 = vpop.f32.mrf.mxu0
  %v383 = vadd.f32 %v336, %v382
  %384 = vmatmul.f32.gmra.mxu0 %v87
  %v385 = vpop.f32.mrf.mxu0
  %v386 = vadd.f32 %v336, %v385
  %387 = vmatmul.f32.gmra.mxu0 %v90
  %v388 = vpop.f32.mrf.mxu0
  %v389 = vadd.f32 %v336, %v388
  %390 = vmatmul.f32.gmra.mxu0 %v93
  %v391 = vpop.f32.mrf.mxu0
  %v392 = vadd.f32 %v336, %v391
  %393 = vmatmul.f32.gmra.mxu0 %v96
  %v394 = vpop.f32.mrf.mxu0
  %v395 = vadd.f32 %v336, %v394
  %396 = vmatmul.f32.gmra.mxu0 %v99
  %v397 = vpop.f32.mrf.mxu0
  %v398 = vadd.f32 %v336, %v397
  %399 = vmatmul.f32.gmra.mxu0 %v102
  %v400 = vpop.f32.mrf.mxu0
  %v401 = vadd.f32 %v336, %v400
  %402 = vmatmul.f32.gmra.mxu0 %v105
  %v403 = vpop.f32.mrf.mxu0
  %v404 = vadd.f32 %v336, %v403
  %405 = vmatmul.f32.gmra.mxu0 %v108
  %v406 = vpop.f32.mrf.mxu0
  %v407 = vadd.f32 %v336, %v406
  %408 = vmatmul.f32.gmra.mxu0 %v111
  %v409 = vpop.f32.mrf.mxu0
  %v410 = vadd.f32 %v336, %v409
  %411 = vmatmul.f32.gmra.mxu0 %v114
  %v412 = vpop.f32.mrf.mxu0
  %v413 = vadd.f32 %v336, %v412
  %414 = vmatmul.f32.gmra.mxu0 %v117
  %v415 = vpop.f32.mrf.mxu0
  %v416 = vadd.f32 %v336, %v415
  %417 = vmatmul.f32.gmra.mxu0 %v120
  %v418 = vpop.f32.mrf.mxu0
  %v419 = vadd.f32 %v336, %v418
  %420 = vmatmul.f32.gmra.mxu0 %v123
  %v421 = vpop.f32.mrf.mxu0
  %v422 = vadd.f32 %v336, %v421
  %423 = vmatmul.f32.gmra.mxu0 %v126
  %v424 = vpop.f32.mrf.mxu0
  %v425 = vadd.f32 %v336, %v424
  %426 = vmatmul.f32.gmra.mxu0 %v129
  %v427 = vpop.f32.mrf.mxu0
  %v428 = vadd.f32 %v336, %v427
  %429 = vmatmul.f32.gmra.mxu0 %v132
  %v430 = vpop.f32.mrf.mxu0
  %v431 = vadd.f32 %v336, %v430
  %432 = vmatmul.f32.gmra.mxu0 %v135
  %v433 = vpop.f32.mrf.mxu0
  %v434 = vadd.f32 %v336, %v433
  %435 = vmatmul.f32.gmra.mxu0 %v138
  %v436 = vpop.f32.mrf.mxu0
  %v437 = vadd.f32 %v336, %v436
  %438 = vmatmul.f32.gmra.mxu0 %v141
  %v439 = vpop.f32.mrf.mxu0
  %v440 = vadd.f32 %v336, %v439
  %441 = vmatmul.f32.gmra.mxu0 %v144
  %v442 = vpop.f32.mrf.mxu0
  %v443 = vadd.f32 %v336, %v442
  %444 = vmatmul.f32.gmra.mxu0 %v147
  %v445 = vpop.f32.mrf.mxu0
  %v446 = vadd.f32 %v336, %v445
  %447 = vmatmul.f32.gmra.mxu0 %v150
  %v448 = vpop.f32.mrf.mxu0
  %v449 = vadd.f32 %v336, %v448
  %450 = vdwg.mxu0
  %vm451 = vcmask 64512
  %452 = vst.msk [vmem:[%s5] sm:$0xff] %vm451, %v356
  %453 = vst.msk [vmem:[%s5 + $0x8] sm:$0xff] %vm451, %v359
  %454 = vst.msk [vmem:[%s5 + $0x10] sm:$0xff] %vm451, %v362
  %455 = vst.msk [vmem:[%s5 + $0x18] sm:$0xff] %vm451, %v365
  %456 = vst.msk [vmem:[%s5 + $0x20] sm:$0xff] %vm451, %v368
  %457 = vst.msk [vmem:[%s5 + $0x28] sm:$0xff] %vm451, %v371
  %458 = vst.msk [vmem:[%s5 + $0x30] sm:$0xff] %vm451, %v374
  %459 = vst.msk [vmem:[%s5 + $0x38] sm:$0xff] %vm451, %v377
  %460 = vst.msk [vmem:[%s5 + $0x40] sm:$0xff] %vm451, %v380
  %461 = vst.msk [vmem:[%s5 + $0x48] sm:$0xff] %vm451, %v383
  %462 = vst.msk [vmem:[%s5 + $0x50] sm:$0xff] %vm451, %v386
  %463 = vst.msk [vmem:[%s5 + $0x58] sm:$0xff] %vm451, %v389
  %464 = vst.msk [vmem:[%s5 + $0x60] sm:$0xff] %vm451, %v392
  %465 = vst.msk [vmem:[%s5 + $0x68] sm:$0xff] %vm451, %v395
  %466 = vst.msk [vmem:[%s5 + $0x70] sm:$0xff] %vm451, %v398
  %467 = vst.msk [vmem:[%s5 + $0x78] sm:$0xff] %vm451, %v401
  %468 = vst.msk [vmem:[%s5 + $0x80] sm:$0xff] %vm451, %v404
  %469 = vst.msk [vmem:[%s5 + $0x88] sm:$0xff] %vm451, %v407
  %470 = vst.msk [vmem:[%s5 + $0x90] sm:$0xff] %vm451, %v410
  %471 = vst.msk [vmem:[%s5 + $0x98] sm:$0xff] %vm451, %v413
  %472 = vst.msk [vmem:[%s5 + $0xa0] sm:$0xff] %vm451, %v416
  %473 = vst.msk [vmem:[%s5 + $0xa8] sm:$0xff] %vm451, %v419
  %474 = vst.msk [vmem:[%s5 + $0xb0] sm:$0xff] %vm451, %v422
  %475 = vst.msk [vmem:[%s5 + $0xb8] sm:$0xff] %vm451, %v425
  %476 = vst.msk [vmem:[%s5 + $0xc0] sm:$0xff] %vm451, %v428
  %477 = vst.msk [vmem:[%s5 + $0xc8] sm:$0xff] %vm451, %v431
  %478 = vst.msk [vmem:[%s5 + $0xd0] sm:$0xff] %vm451, %v434
  %479 = vst.msk [vmem:[%s5 + $0xd8] sm:$0xff] %vm451, %v437
  %480 = vst.msk [vmem:[%s5 + $0xe0] sm:$0xff] %vm451, %v440
  %481 = vst.msk [vmem:[%s5 + $0xe8] sm:$0xff] %vm451, %v443
  %482 = vst.msk [vmem:[%s5 + $0xf0] sm:$0xff] %vm451, %v446
  %483 = vst.msk [vmem:[%s5 + $0xf8] sm:$0xff] %vm451, %v449
  // Predicated region
  $region18: #{graphsage_forward.5} parent=0 // pred_check
    _
  $region19: #{graphsage_forward.5} parent=0 // pred_check_branch
    %485 = sbr.rel (0) target = $region21
  $region20: #{graphsage_forward.5} parent=0 // pred_region
    _
  $region21: #{graphsage_forward.5} parent=0 // pred_fallthru
    _
  // Predicated region
  $region22: #{graphsage_forward.5} parent=0 // pred_check
    _
  $region23: #{graphsage_forward.5} parent=0 // pred_check_branch
    %487 = sbr.rel (0) target = $region25
  $region24: #{graphsage_forward.5} parent=0 // pred_region
    _
  $region25: #{graphsage_forward.5} parent=0 // pred_fallthru
    _
  // Predicated region
  $region26: #{graphsage_forward.5} parent=0 // pred_check
    _
  $region27: #{graphsage_forward.5} parent=0 // pred_check_branch
    %489 = sbr.rel (0) target = $region29
  $region28: #{graphsage_forward.5} parent=0 // pred_region
    _
  $region29: #{graphsage_forward.5} parent=0 // pred_fallthru
    _
  // Predicated region
  $region30: #{graphsage_forward.5} parent=0 // pred_check
    _
  $region31: #{graphsage_forward.5} parent=0 // pred_check_branch
    %491 = sbr.rel (0) target = $region33
  $region32: #{graphsage_forward.5} parent=0 // pred_region
    _
  $region33: #{graphsage_forward.5} parent=0 // pred_fallthru
    _

// kernel: graphsage_forward.6
$region0: #{graphsage_forward.6}
  #allocation0 [shape = 'u32[]', space=smem, size = 0x4, offset = 0x4, fixed_abs, tag = 'smem constant byte address 0x4 - core index']
  #allocation1 [shape = 'u32[72,128]{1,0:T(1,128)}', space=vmem, size = 0x9000, scoped, tag = 'internal scratch']
  #allocation2 [shape = 'f32[256,8]{1,0:T(8,128)}', space=vmem, size = 0x20000, scoped, tag = 'scratch operand']
  %s0 = inlined_call_operand.vmem [shape: bf16[256,256], index: 0, kind: input, shape index: {}]
  %s1 = inlined_call_operand.vmem [shape: bf16[256,8], index: 1, kind: input, shape index: {}]
  %s2 = inlined_call_operand.vmem [shape: f32[256,8], index: 2, kind: input, shape index: {}]
  %s3 = inlined_call_operand.vmem [shape: f32[256,8], index: 3, kind: output, shape index: {}]
  %s4 = sld [smem:[#allocation0]]
  $region30: #{graphsage_forward.6} parent=0
    _
  %s6 = ssub.s32 1, %s4
  %s7 = scalar_select 0, %s6, %s4
  // Predicated region
  $region2: #{graphsage_forward.6} parent=0 // pred_check
    _
  $region3: #{graphsage_forward.6} parent=0 // pred_check_branch
    %9 = sbr.rel (0) target = $region5
  $region4: #{graphsage_forward.6} parent=0 // pred_region
    _
  $region5: #{graphsage_forward.6} parent=0 // pred_fallthru
    _
  // Predicated region
  $region6: #{graphsage_forward.6} parent=0 // pred_check
    _
  $region7: #{graphsage_forward.6} parent=0 // pred_check_branch
    %11 = sbr.rel (0) target = $region9
  $region8: #{graphsage_forward.6} parent=0 // pred_region
    _
  $region9: #{graphsage_forward.6} parent=0 // pred_fallthru
    _
  // Predicated region
  $region10: #{graphsage_forward.6} parent=0 // pred_check
    _
  $region11: #{graphsage_forward.6} parent=0 // pred_check_branch
    %13 = sbr.rel (0) target = $region13
  $region12: #{graphsage_forward.6} parent=0 // pred_region
    _
  $region13: #{graphsage_forward.6} parent=0 // pred_fallthru
    _
  %p14 = scmp.eq.s32.totalorder 0, 0
  // Predicated region
  $region14: #{graphsage_forward.6} parent=0 // pred_check
    %p15 = pneg %p14
  $region15: #{graphsage_forward.6} parent=0 // pred_check_branch
    %17 = sbr.rel (%p15) target = $region17
  $region16: #{graphsage_forward.6} parent=0 // pred_region
    %v18 = vld [vmem:[%s2] sm:$0xff]
    %v19 = vld [vmem:[%s2 + $0x8] sm:$0xff]
    %v20 = vld [vmem:[%s2 + $0x10] sm:$0xff]
    %v21 = vld [vmem:[%s2 + $0x18] sm:$0xff]
    %v22 = vld [vmem:[%s2 + $0x20] sm:$0xff]
    %v23 = vld [vmem:[%s2 + $0x28] sm:$0xff]
    %v24 = vld [vmem:[%s2 + $0x30] sm:$0xff]
    %v25 = vld [vmem:[%s2 + $0x38] sm:$0xff]
    %v26 = vld [vmem:[%s2 + $0x40] sm:$0xff]
    %v27 = vld [vmem:[%s2 + $0x48] sm:$0xff]
    %v28 = vld [vmem:[%s2 + $0x50] sm:$0xff]
    %v29 = vld [vmem:[%s2 + $0x58] sm:$0xff]
    %v30 = vld [vmem:[%s2 + $0x60] sm:$0xff]
    %v31 = vld [vmem:[%s2 + $0x68] sm:$0xff]
    %v32 = vld [vmem:[%s2 + $0x70] sm:$0xff]
    %v33 = vld [vmem:[%s2 + $0x78] sm:$0xff]
    %v34 = vld [vmem:[%s2 + $0x80] sm:$0xff]
    %v35 = vld [vmem:[%s2 + $0x88] sm:$0xff]
    %v36 = vld [vmem:[%s2 + $0x90] sm:$0xff]
    %v37 = vld [vmem:[%s2 + $0x98] sm:$0xff]
    %v38 = vld [vmem:[%s2 + $0xa0] sm:$0xff]
    %v39 = vld [vmem:[%s2 + $0xa8] sm:$0xff]
    %v40 = vld [vmem:[%s2 + $0xb0] sm:$0xff]
    %v41 = vld [vmem:[%s2 + $0xb8] sm:$0xff]
    %v42 = vld [vmem:[%s2 + $0xc0] sm:$0xff]
    %v43 = vld [vmem:[%s2 + $0xc8] sm:$0xff]
    %v44 = vld [vmem:[%s2 + $0xd0] sm:$0xff]
    %v45 = vld [vmem:[%s2 + $0xd8] sm:$0xff]
    %v46 = vld [vmem:[%s2 + $0xe0] sm:$0xff]
    %v47 = vld [vmem:[%s2 + $0xe8] sm:$0xff]
    %v48 = vld [vmem:[%s2 + $0xf0] sm:$0xff]
    %v49 = vld [vmem:[%s2 + $0xf8] sm:$0xff]
    %vm50 = vcmask 64512
    %51 = vst.msk [vmem:[#allocation2] sm:$0xff] %vm50, %v18
    %52 = vst.msk [vmem:[#allocation2 + $0x8] sm:$0xff] %vm50, %v19
    %53 = vst.msk [vmem:[#allocation2 + $0x10] sm:$0xff] %vm50, %v20
    %54 = vst.msk [vmem:[#allocation2 + $0x18] sm:$0xff] %vm50, %v21
    %55 = vst.msk [vmem:[#allocation2 + $0x20] sm:$0xff] %vm50, %v22
    %56 = vst.msk [vmem:[#allocation2 + $0x28] sm:$0xff] %vm50, %v23
    %57 = vst.msk [vmem:[#allocation2 + $0x30] sm:$0xff] %vm50, %v24
    %58 = vst.msk [vmem:[#allocation2 + $0x38] sm:$0xff] %vm50, %v25
    %59 = vst.msk [vmem:[#allocation2 + $0x40] sm:$0xff] %vm50, %v26
    %60 = vst.msk [vmem:[#allocation2 + $0x48] sm:$0xff] %vm50, %v27
    %61 = vst.msk [vmem:[#allocation2 + $0x50] sm:$0xff] %vm50, %v28
    %62 = vst.msk [vmem:[#allocation2 + $0x58] sm:$0xff] %vm50, %v29
    %63 = vst.msk [vmem:[#allocation2 + $0x60] sm:$0xff] %vm50, %v30
    %64 = vst.msk [vmem:[#allocation2 + $0x68] sm:$0xff] %vm50, %v31
    %65 = vst.msk [vmem:[#allocation2 + $0x70] sm:$0xff] %vm50, %v32
    %66 = vst.msk [vmem:[#allocation2 + $0x78] sm:$0xff] %vm50, %v33
    %67 = vst.msk [vmem:[#allocation2 + $0x80] sm:$0xff] %vm50, %v34
    %68 = vst.msk [vmem:[#allocation2 + $0x88] sm:$0xff] %vm50, %v35
    %69 = vst.msk [vmem:[#allocation2 + $0x90] sm:$0xff] %vm50, %v36
    %70 = vst.msk [vmem:[#allocation2 + $0x98] sm:$0xff] %vm50, %v37
    %71 = vst.msk [vmem:[#allocation2 + $0xa0] sm:$0xff] %vm50, %v38
    %72 = vst.msk [vmem:[#allocation2 + $0xa8] sm:$0xff] %vm50, %v39
    %73 = vst.msk [vmem:[#allocation2 + $0xb0] sm:$0xff] %vm50, %v40
    %74 = vst.msk [vmem:[#allocation2 + $0xb8] sm:$0xff] %vm50, %v41
    %75 = vst.msk [vmem:[#allocation2 + $0xc0] sm:$0xff] %vm50, %v42
    %76 = vst.msk [vmem:[#allocation2 + $0xc8] sm:$0xff] %vm50, %v43
    %77 = vst.msk [vmem:[#allocation2 + $0xd0] sm:$0xff] %vm50, %v44
    %78 = vst.msk [vmem:[#allocation2 + $0xd8] sm:$0xff] %vm50, %v45
    %79 = vst.msk [vmem:[#allocation2 + $0xe0] sm:$0xff] %vm50, %v46
    %80 = vst.msk [vmem:[#allocation2 + $0xe8] sm:$0xff] %vm50, %v47
    %81 = vst.msk [vmem:[#allocation2 + $0xf0] sm:$0xff] %vm50, %v48
    %82 = vst.msk [vmem:[#allocation2 + $0xf8] sm:$0xff] %vm50, %v49
  $region17: #{graphsage_forward.6} parent=0 // pred_fallthru
    _
  %v83 = vld [vmem:[#allocation2] sm:$0xff]
  %v84 = vld [vmem:[#allocation2 + $0x8] sm:$0xff]
  %v85 = vld [vmem:[#allocation2 + $0x10] sm:$0xff]
  %v86 = vld [vmem:[#allocation2 + $0x18] sm:$0xff]
  %v87 = vld [vmem:[#allocation2 + $0x20] sm:$0xff]
  %v88 = vld [vmem:[#allocation2 + $0x28] sm:$0xff]
  %v89 = vld [vmem:[#allocation2 + $0x30] sm:$0xff]
  %v90 = vld [vmem:[#allocation2 + $0x38] sm:$0xff]
  %v91 = vld [vmem:[#allocation2 + $0x40] sm:$0xff]
  %v92 = vld [vmem:[#allocation2 + $0x48] sm:$0xff]
  %v93 = vld [vmem:[#allocation2 + $0x50] sm:$0xff]
  %v94 = vld [vmem:[#allocation2 + $0x58] sm:$0xff]
  %v95 = vld [vmem:[#allocation2 + $0x60] sm:$0xff]
  %v96 = vld [vmem:[#allocation2 + $0x68] sm:$0xff]
  %v97 = vld [vmem:[#allocation2 + $0x70] sm:$0xff]
  %v98 = vld [vmem:[#allocation2 + $0x78] sm:$0xff]
  %v99 = vld [vmem:[#allocation2 + $0x80] sm:$0xff]
  %v100 = vld [vmem:[#allocation2 + $0x88] sm:$0xff]
  %v101 = vld [vmem:[#allocation2 + $0x90] sm:$0xff]
  %v102 = vld [vmem:[#allocation2 + $0x98] sm:$0xff]
  %v103 = vld [vmem:[#allocation2 + $0xa0] sm:$0xff]
  %v104 = vld [vmem:[#allocation2 + $0xa8] sm:$0xff]
  %v105 = vld [vmem:[#allocation2 + $0xb0] sm:$0xff]
  %v106 = vld [vmem:[#allocation2 + $0xb8] sm:$0xff]
  %v107 = vld [vmem:[#allocation2 + $0xc0] sm:$0xff]
  %v108 = vld [vmem:[#allocation2 + $0xc8] sm:$0xff]
  %v109 = vld [vmem:[#allocation2 + $0xd0] sm:$0xff]
  %v110 = vld [vmem:[#allocation2 + $0xd8] sm:$0xff]
  %v111 = vld [vmem:[#allocation2 + $0xe0] sm:$0xff]
  %v112 = vld [vmem:[#allocation2 + $0xe8] sm:$0xff]
  %v113 = vld [vmem:[#allocation2 + $0xf0] sm:$0xff]
  %v114 = vld [vmem:[#allocation2 + $0xf8] sm:$0xff]
  %v115 = vld [vmem:[%s0] sm:$0xff]
  %v116 = vld [vmem:[%s0 + $0x8] sm:$0xff]
  %v117 = vld [vmem:[%s0 + $0x10] sm:$0xff]
  %v118 = vld [vmem:[%s0 + $0x18] sm:$0xff]
  %v119 = vld [vmem:[%s0 + $0x20] sm:$0xff]
  %v120 = vld [vmem:[%s0 + $0x28] sm:$0xff]
  %v121 = vld [vmem:[%s0 + $0x30] sm:$0xff]
  %v122 = vld [vmem:[%s0 + $0x38] sm:$0xff]
  %v123 = vld [vmem:[%s0 + $0x40] sm:$0xff]
  %v124 = vld [vmem:[%s0 + $0x48] sm:$0xff]
  %v125 = vld [vmem:[%s0 + $0x50] sm:$0xff]
  %v126 = vld [vmem:[%s0 + $0x58] sm:$0xff]
  %v127 = vld [vmem:[%s0 + $0x60] sm:$0xff]
  %v128 = vld [vmem:[%s0 + $0x68] sm:$0xff]
  %v129 = vld [vmem:[%s0 + $0x70] sm:$0xff]
  %v130 = vld [vmem:[%s0 + $0x78] sm:$0xff]
  %v131 = vld [vmem:[%s0 + $0x80] sm:$0xff]
  %v132 = vld [vmem:[%s0 + $0x88] sm:$0xff]
  %v133 = vld [vmem:[%s0 + $0x90] sm:$0xff]
  %v134 = vld [vmem:[%s0 + $0x98] sm:$0xff]
  %v135 = vld [vmem:[%s0 + $0xa0] sm:$0xff]
  %v136 = vld [vmem:[%s0 + $0xa8] sm:$0xff]
  %v137 = vld [vmem:[%s0 + $0xb0] sm:$0xff]
  %v138 = vld [vmem:[%s0 + $0xb8] sm:$0xff]
  %v139 = vld [vmem:[%s0 + $0xc0] sm:$0xff]
  %v140 = vld [vmem:[%s0 + $0xc8] sm:$0xff]
  %v141 = vld [vmem:[%s0 + $0xd0] sm:$0xff]
  %v142 = vld [vmem:[%s0 + $0xd8] sm:$0xff]
  %v143 = vld [vmem:[%s0 + $0xe0] sm:$0xff]
  %v144 = vld [vmem:[%s0 + $0xe8] sm:$0xff]
  %v145 = vld [vmem:[%s0 + $0xf0] sm:$0xff]
  %v146 = vld [vmem:[%s0 + $0xf8] sm:$0xff]
  %v147 = vld [vmem:[%s1] sm:$0xf]
  %v148 = vld [vmem:[%s1 + $0x4] sm:$0xf]
  %v149 = vld [vmem:[%s1 + $0x8] sm:$0xf]
  %v150 = vld [vmem:[%s1 + $0xc] sm:$0xf]
  %v151 = vld [vmem:[%s1 + $0x10] sm:$0xf]
  %v152 = vld [vmem:[%s1 + $0x14] sm:$0xf]
  %v153 = vld [vmem:[%s1 + $0x18] sm:$0xf]
  %v154 = vld [vmem:[%s1 + $0x1c] sm:$0xf]
  %v155 = vld [vmem:[%s1 + $0x20] sm:$0xf]
  %v156 = vld [vmem:[%s1 + $0x24] sm:$0xf]
  %v157 = vld [vmem:[%s1 + $0x28] sm:$0xf]
  %v158 = vld [vmem:[%s1 + $0x2c] sm:$0xf]
  %v159 = vld [vmem:[%s1 + $0x30] sm:$0xf]
  %v160 = vld [vmem:[%s1 + $0x34] sm:$0xf]
  %v161 = vld [vmem:[%s1 + $0x38] sm:$0xf]
  %v162 = vld [vmem:[%s1 + $0x3c] sm:$0xf]
  %v163 = vld [vmem:[%s1 + $0x40] sm:$0xf]
  %v164 = vld [vmem:[%s1 + $0x44] sm:$0xf]
  %v165 = vld [vmem:[%s1 + $0x48] sm:$0xf]
  %v166 = vld [vmem:[%s1 + $0x4c] sm:$0xf]
  %v167 = vld [vmem:[%s1 + $0x50] sm:$0xf]
  %v168 = vld [vmem:[%s1 + $0x54] sm:$0xf]
  %v169 = vld [vmem:[%s1 + $0x58] sm:$0xf]
  %v170 = vld [vmem:[%s1 + $0x5c] sm:$0xf]
  %v171 = vld [vmem:[%s1 + $0x60] sm:$0xf]
  %v172 = vld [vmem:[%s1 + $0x64] sm:$0xf]
  %v173 = vld [vmem:[%s1 + $0x68] sm:$0xf]
  %v174 = vld [vmem:[%s1 + $0x6c] sm:$0xf]
  %v175 = vld [vmem:[%s1 + $0x70] sm:$0xf]
  %v176 = vld [vmem:[%s1 + $0x74] sm:$0xf]
  %v177 = vld [vmem:[%s1 + $0x78] sm:$0xf]
  %v178 = vld [vmem:[%s1 + $0x7c] sm:$0xf]
  %v211 = vunpack.c.l.b16 %v115
  %v212 = vunpack.c.h.b16 %v115
  %v213 = vunpack.c.l.b16 %v116
  %v214 = vunpack.c.h.b16 %v116
  %v215 = vunpack.c.l.b16 %v117
  %v216 = vunpack.c.h.b16 %v117
  %v217 = vunpack.c.l.b16 %v118
  %v218 = vunpack.c.h.b16 %v118
  %v219 = vunpack.c.l.b16 %v119
  %v220 = vunpack.c.h.b16 %v119
  %v221 = vunpack.c.l.b16 %v120
  %v222 = vunpack.c.h.b16 %v120
  %v223 = vunpack.c.l.b16 %v121
  %v224 = vunpack.c.h.b16 %v121
  %v225 = vunpack.c.l.b16 %v122
  %v226 = vunpack.c.h.b16 %v122
  %v227 = vunpack.c.l.b16 %v123
  %v228 = vunpack.c.h.b16 %v123
  %v229 = vunpack.c.l.b16 %v124
  %v230 = vunpack.c.h.b16 %v124
  %v231 = vunpack.c.l.b16 %v125
  %v232 = vunpack.c.h.b16 %v125
  %v233 = vunpack.c.l.b16 %v126
  %v234 = vunpack.c.h.b16 %v126
  %v235 = vunpack.c.l.b16 %v127
  %v236 = vunpack.c.h.b16 %v127
  %v237 = vunpack.c.l.b16 %v128
  %v238 = vunpack.c.h.b16 %v128
  %v239 = vunpack.c.l.b16 %v129
  %v240 = vunpack.c.h.b16 %v129
  %v241 = vunpack.c.l.b16 %v130
  %v242 = vunpack.c.h.b16 %v130
  %v243 = vunpack.c.l.b16 %v131
  %v244 = vunpack.c.h.b16 %v131
  %v245 = vunpack.c.l.b16 %v132
  %v246 = vunpack.c.h.b16 %v132
  %v247 = vunpack.c.l.b16 %v133
  %v248 = vunpack.c.h.b16 %v133
  %v249 = vunpack.c.l.b16 %v134
  %v250 = vunpack.c.h.b16 %v134
  %v251 = vunpack.c.l.b16 %v135
  %v252 = vunpack.c.h.b16 %v135
  %v253 = vunpack.c.l.b16 %v136
  %v254 = vunpack.c.h.b16 %v136
  %v255 = vunpack.c.l.b16 %v137
  %v256 = vunpack.c.h.b16 %v137
  %v257 = vunpack.c.l.b16 %v138
  %v258 = vunpack.c.h.b16 %v138
  %v259 = vunpack.c.l.b16 %v139
  %v260 = vunpack.c.h.b16 %v139
  %v261 = vunpack.c.l.b16 %v140
  %v262 = vunpack.c.h.b16 %v140
  %v263 = vunpack.c.l.b16 %v141
  %v264 = vunpack.c.h.b16 %v141
  %v265 = vunpack.c.l.b16 %v142
  %v266 = vunpack.c.h.b16 %v142
  %v267 = vunpack.c.l.b16 %v143
  %v268 = vunpack.c.h.b16 %v143
  %v269 = vunpack.c.l.b16 %v144
  %v270 = vunpack.c.h.b16 %v144
  %v271 = vunpack.c.l.b16 %v145
  %v272 = vunpack.c.h.b16 %v145
  %v273 = vunpack.c.l.b16 %v146
  %v274 = vunpack.c.h.b16 %v146
  %v275 = vpack.c.b16 %v213, %v211
  %v276 = vpack.c.b16 %v214, %v212
  %v277 = vpack.c.b16 %v217, %v215
  %v278 = vpack.c.b16 %v218, %v216
  %v279 = vpack.c.b16 %v221, %v219
  %v280 = vpack.c.b16 %v222, %v220
  %v281 = vpack.c.b16 %v225, %v223
  %v282 = vpack.c.b16 %v226, %v224
  %v283 = vpack.c.b16 %v229, %v227
  %v284 = vpack.c.b16 %v230, %v228
  %v285 = vpack.c.b16 %v233, %v231
  %v286 = vpack.c.b16 %v234, %v232
  %v287 = vpack.c.b16 %v237, %v235
  %v288 = vpack.c.b16 %v238, %v236
  %v289 = vpack.c.b16 %v241, %v239
  %v290 = vpack.c.b16 %v242, %v240
  %v291 = vpack.c.b16 %v245, %v243
  %v292 = vpack.c.b16 %v246, %v244
  %v293 = vpack.c.b16 %v249, %v247
  %v294 = vpack.c.b16 %v250, %v248
  %v295 = vpack.c.b16 %v253, %v251
  %v296 = vpack.c.b16 %v254, %v252
  %v297 = vpack.c.b16 %v257, %v255
  %v298 = vpack.c.b16 %v258, %v256
  %v299 = vpack.c.b16 %v261, %v259
  %v300 = vpack.c.b16 %v262, %v260
  %v301 = vpack.c.b16 %v265, %v263
  %v302 = vpack.c.b16 %v266, %v264
  %v303 = vpack.c.b16 %v269, %v267
  %v304 = vpack.c.b16 %v270, %v268
  %v305 = vpack.c.b16 %v273, %v271
  %v306 = vpack.c.b16 %v274, %v272
  %v371 = vunpack.c.l.b16 %v147
  %v372 = vunpack.c.l.b16 %v148
  %v373 = vunpack.c.l.b16 %v149
  %v374 = vunpack.c.l.b16 %v150
  %v375 = vunpack.c.l.b16 %v151
  %v376 = vunpack.c.l.b16 %v152
  %v377 = vunpack.c.l.b16 %v153
  %v378 = vunpack.c.l.b16 %v154
  %v379 = vunpack.c.l.b16 %v155
  %v380 = vunpack.c.l.b16 %v156
  %v381 = vunpack.c.l.b16 %v157
  %v382 = vunpack.c.l.b16 %v158
  %v383 = vunpack.c.l.b16 %v159
  %v384 = vunpack.c.l.b16 %v160
  %v385 = vunpack.c.l.b16 %v161
  %v386 = vunpack.c.l.b16 %v162
  %v387 = vunpack.c.l.b16 %v163
  %v388 = vunpack.c.l.b16 %v164
  %v389 = vunpack.c.l.b16 %v165
  %v390 = vunpack.c.l.b16 %v166
  %v391 = vunpack.c.l.b16 %v167
  %v392 = vunpack.c.l.b16 %v168
  %v393 = vunpack.c.l.b16 %v169
  %v394 = vunpack.c.l.b16 %v170
  %v395 = vunpack.c.l.b16 %v171
  %v396 = vunpack.c.l.b16 %v172
  %v397 = vunpack.c.l.b16 %v173
  %v398 = vunpack.c.l.b16 %v174
  %v399 = vunpack.c.l.b16 %v175
  %v400 = vunpack.c.l.b16 %v176
  %v401 = vunpack.c.l.b16 %v177
  %v402 = vunpack.c.l.b16 %v178
  %v403 = vpack.c.b16 %v372, %v371
  %v404 = vpack.c.b16 %v374, %v373
  %v405 = vpack.c.b16 %v376, %v375
  %v406 = vpack.c.b16 %v378, %v377
  %v407 = vpack.c.b16 %v380, %v379
  %v408 = vpack.c.b16 %v382, %v381
  %v409 = vpack.c.b16 %v384, %v383
  %v410 = vpack.c.b16 %v386, %v385
  %v411 = vpack.c.b16 %v388, %v387
  %v412 = vpack.c.b16 %v390, %v389
  %v413 = vpack.c.b16 %v392, %v391
  %v414 = vpack.c.b16 %v394, %v393
  %v415 = vpack.c.b16 %v396, %v395
  %v416 = vpack.c.b16 %v398, %v397
  %v417 = vpack.c.b16 %v400, %v399
  %v418 = vpack.c.b16 %v402, %v401
  %435 = vmatpush.bf16.msra.mxu0 %v410
  %436 = vmatpush.bf16.msra.mxu0 %v409
  %437 = vmatpush.bf16.msra.mxu0 %v408
  %438 = vmatpush.bf16.msra.mxu0 %v407
  %439 = vmatpush.bf16.msra.mxu0 %v406
  %440 = vmatpush.bf16.msra.mxu0 %v405
  %441 = vmatpush.bf16.msra.mxu0 %v404
  %442 = vmatpush.bf16.msra.mxu0 %v403
  %443 = vmatmul.bf16.gmra.mxu0 %v275
  %v444 = vpop.f32.mrf.mxu0
  %v445 = vadd.f32 0.0, %v444
  %v446 = vpop.f32.mrf.mxu0
  %v447 = vadd.f32 0.0, %v446
  %448 = vmatmul.bf16.gmra.mxu0 %v277
  %v449 = vpop.f32.mrf.mxu0
  %v450 = vadd.f32 0.0, %v449
  %v451 = vpop.f32.mrf.mxu0
  %v452 = vadd.f32 0.0, %v451
  %453 = vmatmul.bf16.gmra.mxu0 %v279
  %v454 = vpop.f32.mrf.mxu0
  %v455 = vadd.f32 0.0, %v454
  %v456 = vpop.f32.mrf.mxu0
  %v457 = vadd.f32 0.0, %v456
  %458 = vmatmul.bf16.gmra.mxu0 %v281
  %v459 = vpop.f32.mrf.mxu0
  %v460 = vadd.f32 0.0, %v459
  %v461 = vpop.f32.mrf.mxu0
  %v462 = vadd.f32 0.0, %v461
  %463 = vmatmul.bf16.gmra.mxu0 %v283
  %v464 = vpop.f32.mrf.mxu0
  %v465 = vadd.f32 0.0, %v464
  %v466 = vpop.f32.mrf.mxu0
  %v467 = vadd.f32 0.0, %v466
  %468 = vmatmul.bf16.gmra.mxu0 %v285
  %v469 = vpop.f32.mrf.mxu0
  %v470 = vadd.f32 0.0, %v469
  %v471 = vpop.f32.mrf.mxu0
  %v472 = vadd.f32 0.0, %v471
  %473 = vmatmul.bf16.gmra.mxu0 %v287
  %v474 = vpop.f32.mrf.mxu0
  %v475 = vadd.f32 0.0, %v474
  %v476 = vpop.f32.mrf.mxu0
  %v477 = vadd.f32 0.0, %v476
  %478 = vmatmul.bf16.gmra.mxu0 %v289
  %v479 = vpop.f32.mrf.mxu0
  %v480 = vadd.f32 0.0, %v479
  %v481 = vpop.f32.mrf.mxu0
  %v482 = vadd.f32 0.0, %v481
  %483 = vmatmul.bf16.gmra.mxu0 %v291
  %v484 = vpop.f32.mrf.mxu0
  %v485 = vadd.f32 0.0, %v484
  %v486 = vpop.f32.mrf.mxu0
  %v487 = vadd.f32 0.0, %v486
  %488 = vmatmul.bf16.gmra.mxu0 %v293
  %v489 = vpop.f32.mrf.mxu0
  %v490 = vadd.f32 0.0, %v489
  %v491 = vpop.f32.mrf.mxu0
  %v492 = vadd.f32 0.0, %v491
  %493 = vmatmul.bf16.gmra.mxu0 %v295
  %v494 = vpop.f32.mrf.mxu0
  %v495 = vadd.f32 0.0, %v494
  %v496 = vpop.f32.mrf.mxu0
  %v497 = vadd.f32 0.0, %v496
  %498 = vmatmul.bf16.gmra.mxu0 %v297
  %v499 = vpop.f32.mrf.mxu0
  %v500 = vadd.f32 0.0, %v499
  %v501 = vpop.f32.mrf.mxu0
  %v502 = vadd.f32 0.0, %v501
  %503 = vmatmul.bf16.gmra.mxu0 %v299
  %v504 = vpop.f32.mrf.mxu0
  %v505 = vadd.f32 0.0, %v504
  %v506 = vpop.f32.mrf.mxu0
  %v507 = vadd.f32 0.0, %v506
  %508 = vmatmul.bf16.gmra.mxu0 %v301
  %v509 = vpop.f32.mrf.mxu0
  %v510 = vadd.f32 0.0, %v509
  %v511 = vpop.f32.mrf.mxu0
  %v512 = vadd.f32 0.0, %v511
  %513 = vmatmul.bf16.gmra.mxu0 %v303
  %v514 = vpop.f32.mrf.mxu0
  %v515 = vadd.f32 0.0, %v514
  %v516 = vpop.f32.mrf.mxu0
  %v517 = vadd.f32 0.0, %v516
  %518 = vmatmul.bf16.gmra.mxu0 %v305
  %v519 = vpop.f32.mrf.mxu0
  %v520 = vadd.f32 0.0, %v519
  %v521 = vpop.f32.mrf.mxu0
  %v522 = vadd.f32 0.0, %v521
  %523 = vdwg.mxu0
  %524 = vmatpush.bf16.msra.mxu0 %v418
  %525 = vmatpush.bf16.msra.mxu0 %v417
  %526 = vmatpush.bf16.msra.mxu0 %v416
  %527 = vmatpush.bf16.msra.mxu0 %v415
  %528 = vmatpush.bf16.msra.mxu0 %v414
  %529 = vmatpush.bf16.msra.mxu0 %v413
  %530 = vmatpush.bf16.msra.mxu0 %v412
  %531 = vmatpush.bf16.msra.mxu0 %v411
  %532 = vmatmul.bf16.gmra.mxu0 %v276
  %v533 = vpop.f32.mrf.mxu0
  %v534 = vadd.f32 %v445, %v533
  %v535 = vpop.f32.mrf.mxu0
  %v536 = vadd.f32 %v447, %v535
  %537 = vmatmul.bf16.gmra.mxu0 %v278
  %v538 = vpop.f32.mrf.mxu0
  %v539 = vadd.f32 %v450, %v538
  %v540 = vpop.f32.mrf.mxu0
  %v541 = vadd.f32 %v452, %v540
  %542 = vmatmul.bf16.gmra.mxu0 %v280
  %v543 = vpop.f32.mrf.mxu0
  %v544 = vadd.f32 %v455, %v543
  %v545 = vpop.f32.mrf.mxu0
  %v546 = vadd.f32 %v457, %v545
  %547 = vmatmul.bf16.gmra.mxu0 %v282
  %v548 = vpop.f32.mrf.mxu0
  %v549 = vadd.f32 %v460, %v548
  %v550 = vpop.f32.mrf.mxu0
  %v551 = vadd.f32 %v462, %v550
  %552 = vmatmul.bf16.gmra.mxu0 %v284
  %v553 = vpop.f32.mrf.mxu0
  %v554 = vadd.f32 %v465, %v553
  %v555 = vpop.f32.mrf.mxu0
  %v556 = vadd.f32 %v467, %v555
  %557 = vmatmul.bf16.gmra.mxu0 %v286
  %v558 = vpop.f32.mrf.mxu0
  %v559 = vadd.f32 %v470, %v558
  %v560 = vpop.f32.mrf.mxu0
  %v561 = vadd.f32 %v472, %v560
  %562 = vmatmul.bf16.gmra.mxu0 %v288
  %v563 = vpop.f32.mrf.mxu0
  %v564 = vadd.f32 %v475, %v563
  %v565 = vpop.f32.mrf.mxu0
  %v566 = vadd.f32 %v477, %v565
  %567 = vmatmul.bf16.gmra.mxu0 %v290
  %v568 = vpop.f32.mrf.mxu0
  %v569 = vadd.f32 %v480, %v568
  %v570 = vpop.f32.mrf.mxu0
  %v571 = vadd.f32 %v482, %v570
  %572 = vmatmul.bf16.gmra.mxu0 %v292
  %v573 = vpop.f32.mrf.mxu0
  %v574 = vadd.f32 %v485, %v573
  %v575 = vpop.f32.mrf.mxu0
  %v576 = vadd.f32 %v487, %v575
  %577 = vmatmul.bf16.gmra.mxu0 %v294
  %v578 = vpop.f32.mrf.mxu0
  %v579 = vadd.f32 %v490, %v578
  %v580 = vpop.f32.mrf.mxu0
  %v581 = vadd.f32 %v492, %v580
  %582 = vmatmul.bf16.gmra.mxu0 %v296
  %v583 = vpop.f32.mrf.mxu0
  %v584 = vadd.f32 %v495, %v583
  %v585 = vpop.f32.mrf.mxu0
  %v586 = vadd.f32 %v497, %v585
  %587 = vmatmul.bf16.gmra.mxu0 %v298
  %v588 = vpop.f32.mrf.mxu0
  %v589 = vadd.f32 %v500, %v588
  %v590 = vpop.f32.mrf.mxu0
  %v591 = vadd.f32 %v502, %v590
  %592 = vmatmul.bf16.gmra.mxu0 %v300
  %v593 = vpop.f32.mrf.mxu0
  %v594 = vadd.f32 %v505, %v593
  %v595 = vpop.f32.mrf.mxu0
  %v596 = vadd.f32 %v507, %v595
  %597 = vmatmul.bf16.gmra.mxu0 %v302
  %v598 = vpop.f32.mrf.mxu0
  %v599 = vadd.f32 %v510, %v598
  %v600 = vpop.f32.mrf.mxu0
  %v601 = vadd.f32 %v512, %v600
  %602 = vmatmul.bf16.gmra.mxu0 %v304
  %v603 = vpop.f32.mrf.mxu0
  %v604 = vadd.f32 %v515, %v603
  %v605 = vpop.f32.mrf.mxu0
  %v606 = vadd.f32 %v517, %v605
  %607 = vmatmul.bf16.gmra.mxu0 %v306
  %v608 = vpop.f32.mrf.mxu0
  %v609 = vadd.f32 %v520, %v608
  %v610 = vpop.f32.mrf.mxu0
  %v611 = vadd.f32 %v522, %v610
  %612 = vdwg.mxu0
  %v613 = vadd.f32 %v83, %v534
  %v614 = vadd.f32 %v84, %v536
  %v615 = vadd.f32 %v85, %v539
  %v616 = vadd.f32 %v86, %v541
  %v617 = vadd.f32 %v87, %v544
  %v618 = vadd.f32 %v88, %v546
  %v619 = vadd.f32 %v89, %v549
  %v620 = vadd.f32 %v90, %v551
  %v621 = vadd.f32 %v91, %v554
  %v622 = vadd.f32 %v92, %v556
  %v623 = vadd.f32 %v93, %v559
  %v624 = vadd.f32 %v94, %v561
  %v625 = vadd.f32 %v95, %v564
  %v626 = vadd.f32 %v96, %v566
  %v627 = vadd.f32 %v97, %v569
  %v628 = vadd.f32 %v98, %v571
  %v629 = vadd.f32 %v99, %v574
  %v630 = vadd.f32 %v100, %v576
  %v631 = vadd.f32 %v101, %v579
  %v632 = vadd.f32 %v102, %v581
  %v633 = vadd.f32 %v103, %v584
  %v634 = vadd.f32 %v104, %v586
  %v635 = vadd.f32 %v105, %v589
  %v636 = vadd.f32 %v106, %v591
  %v637 = vadd.f32 %v107, %v594
  %v638 = vadd.f32 %v108, %v596
  %v639 = vadd.f32 %v109, %v599
  %v640 = vadd.f32 %v110, %v601
  %v641 = vadd.f32 %v111, %v604
  %v642 = vadd.f32 %v112, %v606
  %v643 = vadd.f32 %v113, %v609
  %v644 = vadd.f32 %v114, %v611
  %vm645 = vcmask 64512
  %646 = vst.msk [vmem:[#allocation2] sm:$0xff] %vm645, %v613
  %647 = vst.msk [vmem:[#allocation2 + $0x8] sm:$0xff] %vm645, %v614
  %648 = vst.msk [vmem:[#allocation2 + $0x10] sm:$0xff] %vm645, %v615
  %649 = vst.msk [vmem:[#allocation2 + $0x18] sm:$0xff] %vm645, %v616
  %650 = vst.msk [vmem:[#allocation2 + $0x20] sm:$0xff] %vm645, %v617
  %651 = vst.msk [vmem:[#allocation2 + $0x28] sm:$0xff] %vm645, %v618
  %652 = vst.msk [vmem:[#allocation2 + $0x30] sm:$0xff] %vm645, %v619
  %653 = vst.msk [vmem:[#allocation2 + $0x38] sm:$0xff] %vm645, %v620
  %654 = vst.msk [vmem:[#allocation2 + $0x40] sm:$0xff] %vm645, %v621
  %655 = vst.msk [vmem:[#allocation2 + $0x48] sm:$0xff] %vm645, %v622
  %656 = vst.msk [vmem:[#allocation2 + $0x50] sm:$0xff] %vm645, %v623
  %657 = vst.msk [vmem:[#allocation2 + $0x58] sm:$0xff] %vm645, %v624
  %658 = vst.msk [vmem:[#allocation2 + $0x60] sm:$0xff] %vm645, %v625
  %659 = vst.msk [vmem:[#allocation2 + $0x68] sm:$0xff] %vm645, %v626
  %660 = vst.msk [vmem:[#allocation2 + $0x70] sm:$0xff] %vm645, %v627
  %661 = vst.msk [vmem:[#allocation2 + $0x78] sm:$0xff] %vm645, %v628
  %662 = vst.msk [vmem:[#allocation2 + $0x80] sm:$0xff] %vm645, %v629
  %663 = vst.msk [vmem:[#allocation2 + $0x88] sm:$0xff] %vm645, %v630
  %664 = vst.msk [vmem:[#allocation2 + $0x90] sm:$0xff] %vm645, %v631
  %665 = vst.msk [vmem:[#allocation2 + $0x98] sm:$0xff] %vm645, %v632
  %666 = vst.msk [vmem:[#allocation2 + $0xa0] sm:$0xff] %vm645, %v633
  %667 = vst.msk [vmem:[#allocation2 + $0xa8] sm:$0xff] %vm645, %v634
  %668 = vst.msk [vmem:[#allocation2 + $0xb0] sm:$0xff] %vm645, %v635
  %669 = vst.msk [vmem:[#allocation2 + $0xb8] sm:$0xff] %vm645, %v636
  %670 = vst.msk [vmem:[#allocation2 + $0xc0] sm:$0xff] %vm645, %v637
  %671 = vst.msk [vmem:[#allocation2 + $0xc8] sm:$0xff] %vm645, %v638
  %672 = vst.msk [vmem:[#allocation2 + $0xd0] sm:$0xff] %vm645, %v639
  %673 = vst.msk [vmem:[#allocation2 + $0xd8] sm:$0xff] %vm645, %v640
  %674 = vst.msk [vmem:[#allocation2 + $0xe0] sm:$0xff] %vm645, %v641
  %675 = vst.msk [vmem:[#allocation2 + $0xe8] sm:$0xff] %vm645, %v642
  %676 = vst.msk [vmem:[#allocation2 + $0xf0] sm:$0xff] %vm645, %v643
  %677 = vst.msk [vmem:[#allocation2 + $0xf8] sm:$0xff] %vm645, %v644
  // Predicated region
  $region18: #{graphsage_forward.6} parent=0 // pred_check
    %p678 = pneg %p14
  $region19: #{graphsage_forward.6} parent=0 // pred_check_branch
    %680 = sbr.rel (%p678) target = $region21
  $region20: #{graphsage_forward.6} parent=0 // pred_region
    %v681 = vld [vmem:[#allocation2] sm:$0xff]
    %v682 = vld [vmem:[#allocation2 + $0x8] sm:$0xff]
    %v683 = vld [vmem:[#allocation2 + $0x10] sm:$0xff]
    %v684 = vld [vmem:[#allocation2 + $0x18] sm:$0xff]
    %v685 = vld [vmem:[#allocation2 + $0x20] sm:$0xff]
    %v686 = vld [vmem:[#allocation2 + $0x28] sm:$0xff]
    %v687 = vld [vmem:[#allocation2 + $0x30] sm:$0xff]
    %v688 = vld [vmem:[#allocation2 + $0x38] sm:$0xff]
    %v689 = vld [vmem:[#allocation2 + $0x40] sm:$0xff]
    %v690 = vld [vmem:[#allocation2 + $0x48] sm:$0xff]
    %v691 = vld [vmem:[#allocation2 + $0x50] sm:$0xff]
    %v692 = vld [vmem:[#allocation2 + $0x58] sm:$0xff]
    %v693 = vld [vmem:[#allocation2 + $0x60] sm:$0xff]
    %v694 = vld [vmem:[#allocation2 + $0x68] sm:$0xff]
    %v695 = vld [vmem:[#allocation2 + $0x70] sm:$0xff]
    %v696 = vld [vmem:[#allocation2 + $0x78] sm:$0xff]
    %v697 = vld [vmem:[#allocation2 + $0x80] sm:$0xff]
    %v698 = vld [vmem:[#allocation2 + $0x88] sm:$0xff]
    %v699 = vld [vmem:[#allocation2 + $0x90] sm:$0xff]
    %v700 = vld [vmem:[#allocation2 + $0x98] sm:$0xff]
    %v701 = vld [vmem:[#allocation2 + $0xa0] sm:$0xff]
    %v702 = vld [vmem:[#allocation2 + $0xa8] sm:$0xff]
    %v703 = vld [vmem:[#allocation2 + $0xb0] sm:$0xff]
    %v704 = vld [vmem:[#allocation2 + $0xb8] sm:$0xff]
    %v705 = vld [vmem:[#allocation2 + $0xc0] sm:$0xff]
    %v706 = vld [vmem:[#allocation2 + $0xc8] sm:$0xff]
    %v707 = vld [vmem:[#allocation2 + $0xd0] sm:$0xff]
    %v708 = vld [vmem:[#allocation2 + $0xd8] sm:$0xff]
    %v709 = vld [vmem:[#allocation2 + $0xe0] sm:$0xff]
    %v710 = vld [vmem:[#allocation2 + $0xe8] sm:$0xff]
    %v711 = vld [vmem:[#allocation2 + $0xf0] sm:$0xff]
    %v712 = vld [vmem:[#allocation2 + $0xf8] sm:$0xff]
    %v713 = vmax.f32 %v681, 0.0
    %v714 = vmax.f32 %v682, 0.0
    %v715 = vmax.f32 %v683, 0.0
    %v716 = vmax.f32 %v684, 0.0
    %v717 = vmax.f32 %v685, 0.0
    %v718 = vmax.f32 %v686, 0.0
    %v719 = vmax.f32 %v687, 0.0
    %v720 = vmax.f32 %v688, 0.0
    %v721 = vmax.f32 %v689, 0.0
    %v722 = vmax.f32 %v690, 0.0
    %v723 = vmax.f32 %v691, 0.0
    %v724 = vmax.f32 %v692, 0.0
    %v725 = vmax.f32 %v693, 0.0
    %v726 = vmax.f32 %v694, 0.0
    %v727 = vmax.f32 %v695, 0.0
    %v728 = vmax.f32 %v696, 0.0
    %v729 = vmax.f32 %v697, 0.0
    %v730 = vmax.f32 %v698, 0.0
    %v731 = vmax.f32 %v699, 0.0
    %v732 = vmax.f32 %v700, 0.0
    %v733 = vmax.f32 %v701, 0.0
    %v734 = vmax.f32 %v702, 0.0
    %v735 = vmax.f32 %v703, 0.0
    %v736 = vmax.f32 %v704, 0.0
    %v737 = vmax.f32 %v705, 0.0
    %v738 = vmax.f32 %v706, 0.0
    %v739 = vmax.f32 %v707, 0.0
    %v740 = vmax.f32 %v708, 0.0
    %v741 = vmax.f32 %v709, 0.0
    %v742 = vmax.f32 %v710, 0.0
    %v743 = vmax.f32 %v711, 0.0
    %v744 = vmax.f32 %v712, 0.0
    %745 = vst.msk [vmem:[%s3] sm:$0xff] %vm645, %v713
    %746 = vst.msk [vmem:[%s3 + $0x8] sm:$0xff] %vm645, %v714
    %747 = vst.msk [vmem:[%s3 + $0x10] sm:$0xff] %vm645, %v715
    %748 = vst.msk [vmem:[%s3 + $0x18] sm:$0xff] %vm645, %v716
    %749 = vst.msk [vmem:[%s3 + $0x20] sm:$0xff] %vm645, %v717
    %750 = vst.msk [vmem:[%s3 + $0x28] sm:$0xff] %vm645, %v718
    %751 = vst.msk [vmem:[%s3 + $0x30] sm:$0xff] %vm645, %v719
    %752 = vst.msk [vmem:[%s3 + $0x38] sm:$0xff] %vm645, %v720
    %753 = vst.msk [vmem:[%s3 + $0x40] sm:$0xff] %vm645, %v721
    %754 = vst.msk [vmem:[%s3 + $0x48] sm:$0xff] %vm645, %v722
    %755 = vst.msk [vmem:[%s3 + $0x50] sm:$0xff] %vm645, %v723
    %756 = vst.msk [vmem:[%s3 + $0x58] sm:$0xff] %vm645, %v724
    %757 = vst.msk [vmem:[%s3 + $0x60] sm:$0xff] %vm645, %v725
    %758 = vst.msk [vmem:[%s3 + $0x68] sm:$0xff] %vm645, %v726
    %759 = vst.msk [vmem:[%s3 + $0x70] sm:$0xff] %vm645, %v727
    %760 = vst.msk [vmem:[%s3 + $0x78] sm:$0xff] %vm645, %v728
    %761 = vst.msk [vmem:[%s3 + $0x80] sm:$0xff] %vm645, %v729
    %762 = vst.msk [vmem:[%s3 + $0x88] sm:$0xff] %vm645, %v730
    %763 = vst.msk [vmem:[%s3 + $0x90] sm:$0xff] %vm645, %v731
    %764 = vst.msk [vmem:[%s3 + $0x98] sm:$0xff] %vm645, %v732
    %765 = vst.msk [vmem:[%s3 + $0xa0] sm:$0xff] %vm645, %v733
    %766 = vst.msk [vmem:[%s3 + $0xa8] sm:$0xff] %vm645, %v734
    %767 = vst.msk [vmem:[%s3 + $0xb0] sm:$0xff] %vm645, %v735
    %768 = vst.msk [vmem:[%s3 + $0xb8] sm:$0xff] %vm645, %v736
    %769 = vst.msk [vmem:[%s3 + $0xc0] sm:$0xff] %vm645, %v737
    %770 = vst.msk [vmem:[%s3 + $0xc8] sm:$0xff] %vm645, %v738
    %771 = vst.msk [vmem:[%s3 + $0xd0] sm:$0xff] %vm645, %v739
    %772 = vst.msk [vmem:[%s3 + $0xd8] sm:$0xff] %vm645, %v740
    %773 = vst.msk [vmem:[%s3 + $0xe0] sm:$0xff] %vm645, %v741
    %774 = vst.msk [vmem:[%s3 + $0xe8] sm:$0xff] %vm645, %v742
    %775 = vst.msk [vmem:[%s3 + $0xf0] sm:$0xff] %vm645, %v743
    %776 = vst.msk [vmem:[%s3 + $0xf8] sm:$0xff] %vm645, %v744
  $region21: #{graphsage_forward.6} parent=0 // pred_fallthru
    _
  // Predicated region
  $region22: #{graphsage_forward.6} parent=0 // pred_check
    _
  $region23: #{graphsage_forward.6} parent=0 // pred_check_branch
    %778 = sbr.rel (0) target = $region25
  $region24: #{graphsage_forward.6} parent=0 // pred_region
    _
  $region25: #{graphsage_forward.6} parent=0 // pred_fallthru
    _
  // Predicated region
  $region26: #{graphsage_forward.6} parent=0 // pred_check
    _
  $region27: #{graphsage_forward.6} parent=0 // pred_check_branch
    %780 = sbr.rel (0) target = $region29
  $region28: #{graphsage_forward.6} parent=0 // pred_region
    _
  $region29: #{graphsage_forward.6} parent=0 // pred_fallthru
    _

// kernel: graphsage_forward.9
$region0: #{graphsage_forward.9}
  #allocation0 [shape = 'u32[]', space=smem, size = 0x4, offset = 0x4, fixed_abs, tag = 'smem constant byte address 0x4 - core index']
  #allocation1 [shape = 'u32[72,128]{1,0:T(1,128)}', space=vmem, size = 0x9000, scoped, tag = 'internal scratch']
  %s0 = inlined_call_operand.vmem [shape: f32[256,8], index: 0, kind: input, shape index: {}]
  %s1 = inlined_call_operand.vmem [shape: f32[256,8], index: 1, kind: input, shape index: {}]
  %s2 = inlined_call_operand.vmem [shape: f32[8,640], index: 2, kind: input, shape index: {}]
  %s3 = inlined_call_operand.vmem [shape: f32[8,640], index: 3, kind: input, shape index: {}]
  %s4 = inlined_call_operand.vmem [shape: f32[256,128], index: 4, kind: output, shape index: {}]
  %s5 = sld [smem:[#allocation0]]
  $region26: #{graphsage_forward.9} parent=0
    _
  %s7 = ssub.s32 1, %s5
  %s8 = scalar_select 0, %s7, %s5
  // Predicated region
  $region2: #{graphsage_forward.9} parent=0 // pred_check
    _
  $region3: #{graphsage_forward.9} parent=0 // pred_check_branch
    %10 = sbr.rel (0) target = $region5
  $region4: #{graphsage_forward.9} parent=0 // pred_region
    _
  $region5: #{graphsage_forward.9} parent=0 // pred_fallthru
    _
  // Predicated region
  $region6: #{graphsage_forward.9} parent=0 // pred_check
    _
  $region7: #{graphsage_forward.9} parent=0 // pred_check_branch
    %12 = sbr.rel (0) target = $region9
  $region8: #{graphsage_forward.9} parent=0 // pred_region
    _
  $region9: #{graphsage_forward.9} parent=0 // pred_fallthru
    _
  // Predicated region
  $region10: #{graphsage_forward.9} parent=0 // pred_check
    _
  $region11: #{graphsage_forward.9} parent=0 // pred_check_branch
    %14 = sbr.rel (0) target = $region13
  $region12: #{graphsage_forward.9} parent=0 // pred_region
    _
  $region13: #{graphsage_forward.9} parent=0 // pred_fallthru
    _
  // Predicated region
  $region14: #{graphsage_forward.9} parent=0 // pred_check
    _
  $region15: #{graphsage_forward.9} parent=0 // pred_check_branch
    %16 = sbr.rel (0) target = $region17
  $region16: #{graphsage_forward.9} parent=0 // pred_region
    _
  $region17: #{graphsage_forward.9} parent=0 // pred_fallthru
    _
  %v17 = vld [vmem:[%s0] sm:$0xff]
  %v18 = vld [vmem:[%s0 + $0x8] sm:$0xff]
  %v19 = vld [vmem:[%s0 + $0x10] sm:$0xff]
  %v20 = vld [vmem:[%s0 + $0x18] sm:$0xff]
  %v21 = vld [vmem:[%s0 + $0x20] sm:$0xff]
  %v22 = vld [vmem:[%s0 + $0x28] sm:$0xff]
  %v23 = vld [vmem:[%s0 + $0x30] sm:$0xff]
  %v24 = vld [vmem:[%s0 + $0x38] sm:$0xff]
  %v25 = vld [vmem:[%s0 + $0x40] sm:$0xff]
  %v26 = vld [vmem:[%s0 + $0x48] sm:$0xff]
  %v27 = vld [vmem:[%s0 + $0x50] sm:$0xff]
  %v28 = vld [vmem:[%s0 + $0x58] sm:$0xff]
  %v29 = vld [vmem:[%s0 + $0x60] sm:$0xff]
  %v30 = vld [vmem:[%s0 + $0x68] sm:$0xff]
  %v31 = vld [vmem:[%s0 + $0x70] sm:$0xff]
  %v32 = vld [vmem:[%s0 + $0x78] sm:$0xff]
  %v33 = vld [vmem:[%s0 + $0x80] sm:$0xff]
  %v34 = vld [vmem:[%s0 + $0x88] sm:$0xff]
  %v35 = vld [vmem:[%s0 + $0x90] sm:$0xff]
  %v36 = vld [vmem:[%s0 + $0x98] sm:$0xff]
  %v37 = vld [vmem:[%s0 + $0xa0] sm:$0xff]
  %v38 = vld [vmem:[%s0 + $0xa8] sm:$0xff]
  %v39 = vld [vmem:[%s0 + $0xb0] sm:$0xff]
  %v40 = vld [vmem:[%s0 + $0xb8] sm:$0xff]
  %v41 = vld [vmem:[%s0 + $0xc0] sm:$0xff]
  %v42 = vld [vmem:[%s0 + $0xc8] sm:$0xff]
  %v43 = vld [vmem:[%s0 + $0xd0] sm:$0xff]
  %v44 = vld [vmem:[%s0 + $0xd8] sm:$0xff]
  %v45 = vld [vmem:[%s0 + $0xe0] sm:$0xff]
  %v46 = vld [vmem:[%s0 + $0xe8] sm:$0xff]
  %v47 = vld [vmem:[%s0 + $0xf0] sm:$0xff]
  %v48 = vld [vmem:[%s0 + $0xf8] sm:$0xff]
  %v49 = vld [vmem:[%s1] sm:$0xff]
  %v50 = vld [vmem:[%s1 + $0x8] sm:$0xff]
  %v51 = vld [vmem:[%s1 + $0x10] sm:$0xff]
  %v52 = vld [vmem:[%s1 + $0x18] sm:$0xff]
  %v53 = vld [vmem:[%s1 + $0x20] sm:$0xff]
  %v54 = vld [vmem:[%s1 + $0x28] sm:$0xff]
  %v55 = vld [vmem:[%s1 + $0x30] sm:$0xff]
  %v56 = vld [vmem:[%s1 + $0x38] sm:$0xff]
  %v57 = vld [vmem:[%s1 + $0x40] sm:$0xff]
  %v58 = vld [vmem:[%s1 + $0x48] sm:$0xff]
  %v59 = vld [vmem:[%s1 + $0x50] sm:$0xff]
  %v60 = vld [vmem:[%s1 + $0x58] sm:$0xff]
  %v61 = vld [vmem:[%s1 + $0x60] sm:$0xff]
  %v62 = vld [vmem:[%s1 + $0x68] sm:$0xff]
  %v63 = vld [vmem:[%s1 + $0x70] sm:$0xff]
  %v64 = vld [vmem:[%s1 + $0x78] sm:$0xff]
  %v65 = vld [vmem:[%s1 + $0x80] sm:$0xff]
  %v66 = vld [vmem:[%s1 + $0x88] sm:$0xff]
  %v67 = vld [vmem:[%s1 + $0x90] sm:$0xff]
  %v68 = vld [vmem:[%s1 + $0x98] sm:$0xff]
  %v69 = vld [vmem:[%s1 + $0xa0] sm:$0xff]
  %v70 = vld [vmem:[%s1 + $0xa8] sm:$0xff]
  %v71 = vld [vmem:[%s1 + $0xb0] sm:$0xff]
  %v72 = vld [vmem:[%s1 + $0xb8] sm:$0xff]
  %v73 = vld [vmem:[%s1 + $0xc0] sm:$0xff]
  %v74 = vld [vmem:[%s1 + $0xc8] sm:$0xff]
  %v75 = vld [vmem:[%s1 + $0xd0] sm:$0xff]
  %v76 = vld [vmem:[%s1 + $0xd8] sm:$0xff]
  %v77 = vld [vmem:[%s1 + $0xe0] sm:$0xff]
  %v78 = vld [vmem:[%s1 + $0xe8] sm:$0xff]
  %v79 = vld [vmem:[%s1 + $0xf0] sm:$0xff]
  %v80 = vld [vmem:[%s1 + $0xf8] sm:$0xff]
  %v81 = vmax.f32 %v49, 0.0
  %v82 = vmax.f32 %v50, 0.0
  %v83 = vmax.f32 %v51, 0.0
  %v84 = vmax.f32 %v52, 0.0
  %v85 = vmax.f32 %v53, 0.0
  %v86 = vmax.f32 %v54, 0.0
  %v87 = vmax.f32 %v55, 0.0
  %v88 = vmax.f32 %v56, 0.0
  %v89 = vmax.f32 %v57, 0.0
  %v90 = vmax.f32 %v58, 0.0
  %v91 = vmax.f32 %v59, 0.0
  %v92 = vmax.f32 %v60, 0.0
  %v93 = vmax.f32 %v61, 0.0
  %v94 = vmax.f32 %v62, 0.0
  %v95 = vmax.f32 %v63, 0.0
  %v96 = vmax.f32 %v64, 0.0
  %v97 = vmax.f32 %v65, 0.0
  %v98 = vmax.f32 %v66, 0.0
  %v99 = vmax.f32 %v67, 0.0
  %v100 = vmax.f32 %v68, 0.0
  %v101 = vmax.f32 %v69, 0.0
  %v102 = vmax.f32 %v70, 0.0
  %v103 = vmax.f32 %v71, 0.0
  %v104 = vmax.f32 %v72, 0.0
  %v105 = vmax.f32 %v73, 0.0
  %v106 = vmax.f32 %v74, 0.0
  %v107 = vmax.f32 %v75, 0.0
  %v108 = vmax.f32 %v76, 0.0
  %v109 = vmax.f32 %v77, 0.0
  %v110 = vmax.f32 %v78, 0.0
  %v111 = vmax.f32 %v79, 0.0
  %v112 = vmax.f32 %v80, 0.0
  %v113 = vld [vmem:[%s2] sm:$0xff]
  %v114 = vld [vmem:[%s2 + $0x8] sm:$0xff]
  %v115 = vld [vmem:[%s2 + $0x10] sm:$0xff]
  %v116 = vld [vmem:[%s2 + $0x18] sm:$0xff]
  %v117 = vld [vmem:[%s2 + $0x20] sm:$0xff]
  %v118 = vld [vmem:[%s3] sm:$0xff]
  %v119 = vld [vmem:[%s3 + $0x8] sm:$0xff]
  %v120 = vld [vmem:[%s3 + $0x10] sm:$0xff]
  %v121 = vld [vmem:[%s3 + $0x18] sm:$0xff]
  %v122 = vld [vmem:[%s3 + $0x20] sm:$0xff]
  %vm123 = vcmask 64512
  %v125 = vsel %vm123, %v81, 0
  %v128 = vsel %vm123, %v82, 0
  %v131 = vsel %vm123, %v83, 0
  %v134 = vsel %vm123, %v84, 0
  %v137 = vsel %vm123, %v85, 0
  %v140 = vsel %vm123, %v86, 0
  %v143 = vsel %vm123, %v87, 0
  %v146 = vsel %vm123, %v88, 0
  %v149 = vsel %vm123, %v89, 0
  %v152 = vsel %vm123, %v90, 0
  %v155 = vsel %vm123, %v91, 0
  %v158 = vsel %vm123, %v92, 0
  %v161 = vsel %vm123, %v93, 0
  %v164 = vsel %vm123, %v94, 0
  %v167 = vsel %vm123, %v95, 0
  %v170 = vsel %vm123, %v96, 0
  %v173 = vsel %vm123, %v97, 0
  %v176 = vsel %vm123, %v98, 0
  %v179 = vsel %vm123, %v99, 0
  %v182 = vsel %vm123, %v100, 0
  %v185 = vsel %vm123, %v101, 0
  %v188 = vsel %vm123, %v102, 0
  %v191 = vsel %vm123, %v103, 0
  %v194 = vsel %vm123, %v104, 0
  %v197 = vsel %vm123, %v105, 0
  %v200 = vsel %vm123, %v106, 0
  %v203 = vsel %vm123, %v107, 0
  %v206 = vsel %vm123, %v108, 0
  %v209 = vsel %vm123, %v109, 0
  %v212 = vsel %vm123, %v110, 0
  %v215 = vsel %vm123, %v111, 0
  %v218 = vsel %vm123, %v112, 0
  %220 = vmatpush.msra.mxu0 0.0
  %221 = vmatpush.msra.mxu0 0.0
  %222 = vmatpush.msra.mxu0 0.0
  %223 = vmatpush.msra.mxu0 0.0
  %224 = vmatpush.msra.mxu0 0.0
  %225 = vmatpush.msra.mxu0 0.0
  %226 = vmatpush.msra.mxu0 0.0
  %227 = vmatpush.msra.mxu0 0.0
  %228 = vmatpush.msra.mxu0 0.0
  %229 = vmatpush.msra.mxu0 0.0
  %230 = vmatpush.msra.mxu0 0.0
  %231 = vmatpush.msra.mxu0 0.0
  %232 = vmatpush.msra.mxu0 0.0
  %233 = vmatpush.msra.mxu0 0.0
  %234 = vmatpush.msra.mxu0 0.0
  %235 = vmatpush.msra.mxu0 %v118
  %236 = vmatmul.f32.gmra.mxu0 %v125
  %v237 = vpop.f32.mrf.mxu0
  %v238 = vadd.f32 0.0, %v237
  %239 = vmatmul.f32.gmra.mxu0 %v128
  %v240 = vpop.f32.mrf.mxu0
  %v241 = vadd.f32 0.0, %v240
  %242 = vmatmul.f32.gmra.mxu0 %v131
  %v243 = vpop.f32.mrf.mxu0
  %v244 = vadd.f32 0.0, %v243
  %245 = vmatmul.f32.gmra.mxu0 %v134
  %v246 = vpop.f32.mrf.mxu0
  %v247 = vadd.f32 0.0, %v246
  %248 = vmatmul.f32.gmra.mxu0 %v137
  %v249 = vpop.f32.mrf.mxu0
  %v250 = vadd.f32 0.0, %v249
  %251 = vmatmul.f32.gmra.mxu0 %v140
  %v252 = vpop.f32.mrf.mxu0
  %v253 = vadd.f32 0.0, %v252
  %254 = vmatmul.f32.gmra.mxu0 %v143
  %v255 = vpop.f32.mrf.mxu0
  %v256 = vadd.f32 0.0, %v255
  %257 = vmatmul.f32.gmra.mxu0 %v146
  %v258 = vpop.f32.mrf.mxu0
  %v259 = vadd.f32 0.0, %v258
  %260 = vmatmul.f32.gmra.mxu0 %v149
  %v261 = vpop.f32.mrf.mxu0
  %v262 = vadd.f32 0.0, %v261
  %263 = vmatmul.f32.gmra.mxu0 %v152
  %v264 = vpop.f32.mrf.mxu0
  %v265 = vadd.f32 0.0, %v264
  %266 = vmatmul.f32.gmra.mxu0 %v155
  %v267 = vpop.f32.mrf.mxu0
  %v268 = vadd.f32 0.0, %v267
  %269 = vmatmul.f32.gmra.mxu0 %v158
  %v270 = vpop.f32.mrf.mxu0
  %v271 = vadd.f32 0.0, %v270
  %272 = vmatmul.f32.gmra.mxu0 %v161
  %v273 = vpop.f32.mrf.mxu0
  %v274 = vadd.f32 0.0, %v273
  %275 = vmatmul.f32.gmra.mxu0 %v164
  %v276 = vpop.f32.mrf.mxu0
  %v277 = vadd.f32 0.0, %v276
  %278 = vmatmul.f32.gmra.mxu0 %v167
  %v279 = vpop.f32.mrf.mxu0
  %v280 = vadd.f32 0.0, %v279
  %281 = vmatmul.f32.gmra.mxu0 %v170
  %v282 = vpop.f32.mrf.mxu0
  %v283 = vadd.f32 0.0, %v282
  %284 = vmatmul.f32.gmra.mxu0 %v173
  %v285 = vpop.f32.mrf.mxu0
  %v286 = vadd.f32 0.0, %v285
  %287 = vmatmul.f32.gmra.mxu0 %v176
  %v288 = vpop.f32.mrf.mxu0
  %v289 = vadd.f32 0.0, %v288
  %290 = vmatmul.f32.gmra.mxu0 %v179
  %v291 = vpop.f32.mrf.mxu0
  %v292 = vadd.f32 0.0, %v291
  %293 = vmatmul.f32.gmra.mxu0 %v182
  %v294 = vpop.f32.mrf.mxu0
  %v295 = vadd.f32 0.0, %v294
  %296 = vmatmul.f32.gmra.mxu0 %v185
  %v297 = vpop.f32.mrf.mxu0
  %v298 = vadd.f32 0.0, %v297
  %299 = vmatmul.f32.gmra.mxu0 %v188
  %v300 = vpop.f32.mrf.mxu0
  %v301 = vadd.f32 0.0, %v300
  %302 = vmatmul.f32.gmra.mxu0 %v191
  %v303 = vpop.f32.mrf.mxu0
  %v304 = vadd.f32 0.0, %v303
  %305 = vmatmul.f32.gmra.mxu0 %v194
  %v306 = vpop.f32.mrf.mxu0
  %v307 = vadd.f32 0.0, %v306
  %308 = vmatmul.f32.gmra.mxu0 %v197
  %v309 = vpop.f32.mrf.mxu0
  %v310 = vadd.f32 0.0, %v309
  %311 = vmatmul.f32.gmra.mxu0 %v200
  %v312 = vpop.f32.mrf.mxu0
  %v313 = vadd.f32 0.0, %v312
  %314 = vmatmul.f32.gmra.mxu0 %v203
  %v315 = vpop.f32.mrf.mxu0
  %v316 = vadd.f32 0.0, %v315
  %317 = vmatmul.f32.gmra.mxu0 %v206
  %v318 = vpop.f32.mrf.mxu0
  %v319 = vadd.f32 0.0, %v318
  %320 = vmatmul.f32.gmra.mxu0 %v209
  %v321 = vpop.f32.mrf.mxu0
  %v322 = vadd.f32 0.0, %v321
  %323 = vmatmul.f32.gmra.mxu0 %v212
  %v324 = vpop.f32.mrf.mxu0
  %v325 = vadd.f32 0.0, %v324
  %326 = vmatmul.f32.gmra.mxu0 %v215
  %v327 = vpop.f32.mrf.mxu0
  %v328 = vadd.f32 0.0, %v327
  %329 = vmatmul.f32.gmra.mxu0 %v218
  %v330 = vpop.f32.mrf.mxu0
  %v331 = vadd.f32 0.0, %v330
  %332 = vdwg.mxu0
  %333 = vmatpush.msra.mxu0 0.0
  %334 = vmatpush.msra.mxu0 0.0
  %335 = vmatpush.msra.mxu0 0.0
  %336 = vmatpush.msra.mxu0 0.0
  %337 = vmatpush.msra.mxu0 0.0
  %338 = vmatpush.msra.mxu0 0.0
  %339 = vmatpush.msra.mxu0 0.0
  %340 = vmatpush.msra.mxu0 0.0
  %341 = vmatpush.msra.mxu0 0.0
  %342 = vmatpush.msra.mxu0 0.0
  %343 = vmatpush.msra.mxu0 0.0
  %344 = vmatpush.msra.mxu0 0.0
  %345 = vmatpush.msra.mxu0 0.0
  %346 = vmatpush.msra.mxu0 0.0
  %347 = vmatpush.msra.mxu0 0.0
  %348 = vmatpush.msra.mxu0 %v119
  %349 = vmatmul.f32.gmra.mxu0 %v125
  %v350 = vpop.f32.mrf.mxu0
  %v351 = vadd.f32 0.0, %v350
  %352 = vmatmul.f32.gmra.mxu0 %v128
  %v353 = vpop.f32.mrf.mxu0
  %v354 = vadd.f32 0.0, %v353
  %355 = vmatmul.f32.gmra.mxu0 %v131
  %v356 = vpop.f32.mrf.mxu0
  %v357 = vadd.f32 0.0, %v356
  %358 = vmatmul.f32.gmra.mxu0 %v134
  %v359 = vpop.f32.mrf.mxu0
  %v360 = vadd.f32 0.0, %v359
  %361 = vmatmul.f32.gmra.mxu0 %v137
  %v362 = vpop.f32.mrf.mxu0
  %v363 = vadd.f32 0.0, %v362
  %364 = vmatmul.f32.gmra.mxu0 %v140
  %v365 = vpop.f32.mrf.mxu0
  %v366 = vadd.f32 0.0, %v365
  %367 = vmatmul.f32.gmra.mxu0 %v143
  %v368 = vpop.f32.mrf.mxu0
  %v369 = vadd.f32 0.0, %v368
  %370 = vmatmul.f32.gmra.mxu0 %v146
  %v371 = vpop.f32.mrf.mxu0
  %v372 = vadd.f32 0.0, %v371
  %373 = vmatmul.f32.gmra.mxu0 %v149
  %v374 = vpop.f32.mrf.mxu0
  %v375 = vadd.f32 0.0, %v374
  %376 = vmatmul.f32.gmra.mxu0 %v152
  %v377 = vpop.f32.mrf.mxu0
  %v378 = vadd.f32 0.0, %v377
  %379 = vmatmul.f32.gmra.mxu0 %v155
  %v380 = vpop.f32.mrf.mxu0
  %v381 = vadd.f32 0.0, %v380
  %382 = vmatmul.f32.gmra.mxu0 %v158
  %v383 = vpop.f32.mrf.mxu0
  %v384 = vadd.f32 0.0, %v383
  %385 = vmatmul.f32.gmra.mxu0 %v161
  %v386 = vpop.f32.mrf.mxu0
  %v387 = vadd.f32 0.0, %v386
  %388 = vmatmul.f32.gmra.mxu0 %v164
  %v389 = vpop.f32.mrf.mxu0
  %v390 = vadd.f32 0.0, %v389
  %391 = vmatmul.f32.gmra.mxu0 %v167
  %v392 = vpop.f32.mrf.mxu0
  %v393 = vadd.f32 0.0, %v392
  %394 = vmatmul.f32.gmra.mxu0 %v170
  %v395 = vpop.f32.mrf.mxu0
  %v396 = vadd.f32 0.0, %v395
  %397 = vmatmul.f32.gmra.mxu0 %v173
  %v398 = vpop.f32.mrf.mxu0
  %v399 = vadd.f32 0.0, %v398
  %400 = vmatmul.f32.gmra.mxu0 %v176
  %v401 = vpop.f32.mrf.mxu0
  %v402 = vadd.f32 0.0, %v401
  %403 = vmatmul.f32.gmra.mxu0 %v179
  %v404 = vpop.f32.mrf.mxu0
  %v405 = vadd.f32 0.0, %v404
  %406 = vmatmul.f32.gmra.mxu0 %v182
  %v407 = vpop.f32.mrf.mxu0
  %v408 = vadd.f32 0.0, %v407
  %409 = vmatmul.f32.gmra.mxu0 %v185
  %v410 = vpop.f32.mrf.mxu0
  %v411 = vadd.f32 0.0, %v410
  %412 = vmatmul.f32.gmra.mxu0 %v188
  %v413 = vpop.f32.mrf.mxu0
  %v414 = vadd.f32 0.0, %v413
  %415 = vmatmul.f32.gmra.mxu0 %v191
  %v416 = vpop.f32.mrf.mxu0
  %v417 = vadd.f32 0.0, %v416
  %418 = vmatmul.f32.gmra.mxu0 %v194
  %v419 = vpop.f32.mrf.mxu0
  %v420 = vadd.f32 0.0, %v419
  %421 = vmatmul.f32.gmra.mxu0 %v197
  %v422 = vpop.f32.mrf.mxu0
  %v423 = vadd.f32 0.0, %v422
  %424 = vmatmul.f32.gmra.mxu0 %v200
  %v425 = vpop.f32.mrf.mxu0
  %v426 = vadd.f32 0.0, %v425
  %427 = vmatmul.f32.gmra.mxu0 %v203
  %v428 = vpop.f32.mrf.mxu0
  %v429 = vadd.f32 0.0, %v428
  %430 = vmatmul.f32.gmra.mxu0 %v206
  %v431 = vpop.f32.mrf.mxu0
  %v432 = vadd.f32 0.0, %v431
  %433 = vmatmul.f32.gmra.mxu0 %v209
  %v434 = vpop.f32.mrf.mxu0
  %v435 = vadd.f32 0.0, %v434
  %436 = vmatmul.f32.gmra.mxu0 %v212
  %v437 = vpop.f32.mrf.mxu0
  %v438 = vadd.f32 0.0, %v437
  %439 = vmatmul.f32.gmra.mxu0 %v215
  %v440 = vpop.f32.mrf.mxu0
  %v441 = vadd.f32 0.0, %v440
  %442 = vmatmul.f32.gmra.mxu0 %v218
  %v443 = vpop.f32.mrf.mxu0
  %v444 = vadd.f32 0.0, %v443
  %445 = vdwg.mxu0
  %446 = vmatpush.msra.mxu0 0.0
  %447 = vmatpush.msra.mxu0 0.0
  %448 = vmatpush.msra.mxu0 0.0
  %449 = vmatpush.msra.mxu0 0.0
  %450 = vmatpush.msra.mxu0 0.0
  %451 = vmatpush.msra.mxu0 0.0
  %452 = vmatpush.msra.mxu0 0.0
  %453 = vmatpush.msra.mxu0 0.0
  %454 = vmatpush.msra.mxu0 0.0
  %455 = vmatpush.msra.mxu0 0.0
  %456 = vmatpush.msra.mxu0 0.0
  %457 = vmatpush.msra.mxu0 0.0
  %458 = vmatpush.msra.mxu0 0.0
  %459 = vmatpush.msra.mxu0 0.0
  %460 = vmatpush.msra.mxu0 0.0
  %461 = vmatpush.msra.mxu0 %v120
  %462 = vmatmul.f32.gmra.mxu0 %v125
  %v463 = vpop.f32.mrf.mxu0
  %v464 = vadd.f32 0.0, %v463
  %465 = vmatmul.f32.gmra.mxu0 %v128
  %v466 = vpop.f32.mrf.mxu0
  %v467 = vadd.f32 0.0, %v466
  %468 = vmatmul.f32.gmra.mxu0 %v131
  %v469 = vpop.f32.mrf.mxu0
  %v470 = vadd.f32 0.0, %v469
  %471 = vmatmul.f32.gmra.mxu0 %v134
  %v472 = vpop.f32.mrf.mxu0
  %v473 = vadd.f32 0.0, %v472
  %474 = vmatmul.f32.gmra.mxu0 %v137
  %v475 = vpop.f32.mrf.mxu0
  %v476 = vadd.f32 0.0, %v475
  %477 = vmatmul.f32.gmra.mxu0 %v140
  %v478 = vpop.f32.mrf.mxu0
  %v479 = vadd.f32 0.0, %v478
  %480 = vmatmul.f32.gmra.mxu0 %v143
  %v481 = vpop.f32.mrf.mxu0
  %v482 = vadd.f32 0.0, %v481
  %483 = vmatmul.f32.gmra.mxu0 %v146
  %v484 = vpop.f32.mrf.mxu0
  %v485 = vadd.f32 0.0, %v484
  %486 = vmatmul.f32.gmra.mxu0 %v149
  %v487 = vpop.f32.mrf.mxu0
  %v488 = vadd.f32 0.0, %v487
  %489 = vmatmul.f32.gmra.mxu0 %v152
  %v490 = vpop.f32.mrf.mxu0
  %v491 = vadd.f32 0.0, %v490
  %492 = vmatmul.f32.gmra.mxu0 %v155
  %v493 = vpop.f32.mrf.mxu0
  %v494 = vadd.f32 0.0, %v493
  %495 = vmatmul.f32.gmra.mxu0 %v158
  %v496 = vpop.f32.mrf.mxu0
  %v497 = vadd.f32 0.0, %v496
  %498 = vmatmul.f32.gmra.mxu0 %v161
  %v499 = vpop.f32.mrf.mxu0
  %v500 = vadd.f32 0.0, %v499
  %501 = vmatmul.f32.gmra.mxu0 %v164
  %v502 = vpop.f32.mrf.mxu0
  %v503 = vadd.f32 0.0, %v502
  %504 = vmatmul.f32.gmra.mxu0 %v167
  %v505 = vpop.f32.mrf.mxu0
  %v506 = vadd.f32 0.0, %v505
  %507 = vmatmul.f32.gmra.mxu0 %v170
  %v508 = vpop.f32.mrf.mxu0
  %v509 = vadd.f32 0.0, %v508
  %510 = vmatmul.f32.gmra.mxu0 %v173
  %v511 = vpop.f32.mrf.mxu0
  %v512 = vadd.f32 0.0, %v511
  %513 = vmatmul.f32.gmra.mxu0 %v176
  %v514 = vpop.f32.mrf.mxu0
  %v515 = vadd.f32 0.0, %v514
  %516 = vmatmul.f32.gmra.mxu0 %v179
  %v517 = vpop.f32.mrf.mxu0
  %v518 = vadd.f32 0.0, %v517
  %519 = vmatmul.f32.gmra.mxu0 %v182
  %v520 = vpop.f32.mrf.mxu0
  %v521 = vadd.f32 0.0, %v520
  %522 = vmatmul.f32.gmra.mxu0 %v185
  %v523 = vpop.f32.mrf.mxu0
  %v524 = vadd.f32 0.0, %v523
  %525 = vmatmul.f32.gmra.mxu0 %v188
  %v526 = vpop.f32.mrf.mxu0
  %v527 = vadd.f32 0.0, %v526
  %528 = vmatmul.f32.gmra.mxu0 %v191
  %v529 = vpop.f32.mrf.mxu0
  %v530 = vadd.f32 0.0, %v529
  %531 = vmatmul.f32.gmra.mxu0 %v194
  %v532 = vpop.f32.mrf.mxu0
  %v533 = vadd.f32 0.0, %v532
  %534 = vmatmul.f32.gmra.mxu0 %v197
  %v535 = vpop.f32.mrf.mxu0
  %v536 = vadd.f32 0.0, %v535
  %537 = vmatmul.f32.gmra.mxu0 %v200
  %v538 = vpop.f32.mrf.mxu0
  %v539 = vadd.f32 0.0, %v538
  %540 = vmatmul.f32.gmra.mxu0 %v203
  %v541 = vpop.f32.mrf.mxu0
  %v542 = vadd.f32 0.0, %v541
  %543 = vmatmul.f32.gmra.mxu0 %v206
  %v544 = vpop.f32.mrf.mxu0
  %v545 = vadd.f32 0.0, %v544
  %546 = vmatmul.f32.gmra.mxu0 %v209
  %v547 = vpop.f32.mrf.mxu0
  %v548 = vadd.f32 0.0, %v547
  %549 = vmatmul.f32.gmra.mxu0 %v212
  %v550 = vpop.f32.mrf.mxu0
  %v551 = vadd.f32 0.0, %v550
  %552 = vmatmul.f32.gmra.mxu0 %v215
  %v553 = vpop.f32.mrf.mxu0
  %v554 = vadd.f32 0.0, %v553
  %555 = vmatmul.f32.gmra.mxu0 %v218
  %v556 = vpop.f32.mrf.mxu0
  %v557 = vadd.f32 0.0, %v556
  %558 = vdwg.mxu0
  %559 = vmatpush.msra.mxu0 0.0
  %560 = vmatpush.msra.mxu0 0.0
  %561 = vmatpush.msra.mxu0 0.0
  %562 = vmatpush.msra.mxu0 0.0
  %563 = vmatpush.msra.mxu0 0.0
  %564 = vmatpush.msra.mxu0 0.0
  %565 = vmatpush.msra.mxu0 0.0
  %566 = vmatpush.msra.mxu0 0.0
  %567 = vmatpush.msra.mxu0 0.0
  %568 = vmatpush.msra.mxu0 0.0
  %569 = vmatpush.msra.mxu0 0.0
  %570 = vmatpush.msra.mxu0 0.0
  %571 = vmatpush.msra.mxu0 0.0
  %572 = vmatpush.msra.mxu0 0.0
  %573 = vmatpush.msra.mxu0 0.0
  %574 = vmatpush.msra.mxu0 %v121
  %575 = vmatmul.f32.gmra.mxu0 %v125
  %v576 = vpop.f32.mrf.mxu0
  %v577 = vadd.f32 0.0, %v576
  %578 = vmatmul.f32.gmra.mxu0 %v128
  %v579 = vpop.f32.mrf.mxu0
  %v580 = vadd.f32 0.0, %v579
  %581 = vmatmul.f32.gmra.mxu0 %v131
  %v582 = vpop.f32.mrf.mxu0
  %v583 = vadd.f32 0.0, %v582
  %584 = vmatmul.f32.gmra.mxu0 %v134
  %v585 = vpop.f32.mrf.mxu0
  %v586 = vadd.f32 0.0, %v585
  %587 = vmatmul.f32.gmra.mxu0 %v137
  %v588 = vpop.f32.mrf.mxu0
  %v589 = vadd.f32 0.0, %v588
  %590 = vmatmul.f32.gmra.mxu0 %v140
  %v591 = vpop.f32.mrf.mxu0
  %v592 = vadd.f32 0.0, %v591
  %593 = vmatmul.f32.gmra.mxu0 %v143
  %v594 = vpop.f32.mrf.mxu0
  %v595 = vadd.f32 0.0, %v594
  %596 = vmatmul.f32.gmra.mxu0 %v146
  %v597 = vpop.f32.mrf.mxu0
  %v598 = vadd.f32 0.0, %v597
  %599 = vmatmul.f32.gmra.mxu0 %v149
  %v600 = vpop.f32.mrf.mxu0
  %v601 = vadd.f32 0.0, %v600
  %602 = vmatmul.f32.gmra.mxu0 %v152
  %v603 = vpop.f32.mrf.mxu0
  %v604 = vadd.f32 0.0, %v603
  %605 = vmatmul.f32.gmra.mxu0 %v155
  %v606 = vpop.f32.mrf.mxu0
  %v607 = vadd.f32 0.0, %v606
  %608 = vmatmul.f32.gmra.mxu0 %v158
  %v609 = vpop.f32.mrf.mxu0
  %v610 = vadd.f32 0.0, %v609
  %611 = vmatmul.f32.gmra.mxu0 %v161
  %v612 = vpop.f32.mrf.mxu0
  %v613 = vadd.f32 0.0, %v612
  %614 = vmatmul.f32.gmra.mxu0 %v164
  %v615 = vpop.f32.mrf.mxu0
  %v616 = vadd.f32 0.0, %v615
  %617 = vmatmul.f32.gmra.mxu0 %v167
  %v618 = vpop.f32.mrf.mxu0
  %v619 = vadd.f32 0.0, %v618
  %620 = vmatmul.f32.gmra.mxu0 %v170
  %v621 = vpop.f32.mrf.mxu0
  %v622 = vadd.f32 0.0, %v621
  %623 = vmatmul.f32.gmra.mxu0 %v173
  %v624 = vpop.f32.mrf.mxu0
  %v625 = vadd.f32 0.0, %v624
  %626 = vmatmul.f32.gmra.mxu0 %v176
  %v627 = vpop.f32.mrf.mxu0
  %v628 = vadd.f32 0.0, %v627
  %629 = vmatmul.f32.gmra.mxu0 %v179
  %v630 = vpop.f32.mrf.mxu0
  %v631 = vadd.f32 0.0, %v630
  %632 = vmatmul.f32.gmra.mxu0 %v182
  %v633 = vpop.f32.mrf.mxu0
  %v634 = vadd.f32 0.0, %v633
  %635 = vmatmul.f32.gmra.mxu0 %v185
  %v636 = vpop.f32.mrf.mxu0
  %v637 = vadd.f32 0.0, %v636
  %638 = vmatmul.f32.gmra.mxu0 %v188
  %v639 = vpop.f32.mrf.mxu0
  %v640 = vadd.f32 0.0, %v639
  %641 = vmatmul.f32.gmra.mxu0 %v191
  %v642 = vpop.f32.mrf.mxu0
  %v643 = vadd.f32 0.0, %v642
  %644 = vmatmul.f32.gmra.mxu0 %v194
  %v645 = vpop.f32.mrf.mxu0
  %v646 = vadd.f32 0.0, %v645
  %647 = vmatmul.f32.gmra.mxu0 %v197
  %v648 = vpop.f32.mrf.mxu0
  %v649 = vadd.f32 0.0, %v648
  %650 = vmatmul.f32.gmra.mxu0 %v200
  %v651 = vpop.f32.mrf.mxu0
  %v652 = vadd.f32 0.0, %v651
  %653 = vmatmul.f32.gmra.mxu0 %v203
  %v654 = vpop.f32.mrf.mxu0
  %v655 = vadd.f32 0.0, %v654
  %656 = vmatmul.f32.gmra.mxu0 %v206
  %v657 = vpop.f32.mrf.mxu0
  %v658 = vadd.f32 0.0, %v657
  %659 = vmatmul.f32.gmra.mxu0 %v209
  %v660 = vpop.f32.mrf.mxu0
  %v661 = vadd.f32 0.0, %v660
  %662 = vmatmul.f32.gmra.mxu0 %v212
  %v663 = vpop.f32.mrf.mxu0
  %v664 = vadd.f32 0.0, %v663
  %665 = vmatmul.f32.gmra.mxu0 %v215
  %v666 = vpop.f32.mrf.mxu0
  %v667 = vadd.f32 0.0, %v666
  %668 = vmatmul.f32.gmra.mxu0 %v218
  %v669 = vpop.f32.mrf.mxu0
  %v670 = vadd.f32 0.0, %v669
  %671 = vdwg.mxu0
  %672 = vmatpush.msra.mxu0 0.0
  %673 = vmatpush.msra.mxu0 0.0
  %674 = vmatpush.msra.mxu0 0.0
  %675 = vmatpush.msra.mxu0 0.0
  %676 = vmatpush.msra.mxu0 0.0
  %677 = vmatpush.msra.mxu0 0.0
  %678 = vmatpush.msra.mxu0 0.0
  %679 = vmatpush.msra.mxu0 0.0
  %680 = vmatpush.msra.mxu0 0.0
  %681 = vmatpush.msra.mxu0 0.0
  %682 = vmatpush.msra.mxu0 0.0
  %683 = vmatpush.msra.mxu0 0.0
  %684 = vmatpush.msra.mxu0 0.0
  %685 = vmatpush.msra.mxu0 0.0
  %686 = vmatpush.msra.mxu0 0.0
  %687 = vmatpush.msra.mxu0 %v122
  %688 = vmatmul.f32.gmra.mxu0 %v125
  %v689 = vpop.f32.mrf.mxu0
  %v690 = vadd.f32 0.0, %v689
  %691 = vmatmul.f32.gmra.mxu0 %v128
  %v692 = vpop.f32.mrf.mxu0
  %v693 = vadd.f32 0.0, %v692
  %694 = vmatmul.f32.gmra.mxu0 %v131
  %v695 = vpop.f32.mrf.mxu0
  %v696 = vadd.f32 0.0, %v695
  %697 = vmatmul.f32.gmra.mxu0 %v134
  %v698 = vpop.f32.mrf.mxu0
  %v699 = vadd.f32 0.0, %v698
  %700 = vmatmul.f32.gmra.mxu0 %v137
  %v701 = vpop.f32.mrf.mxu0
  %v702 = vadd.f32 0.0, %v701
  %703 = vmatmul.f32.gmra.mxu0 %v140
  %v704 = vpop.f32.mrf.mxu0
  %v705 = vadd.f32 0.0, %v704
  %706 = vmatmul.f32.gmra.mxu0 %v143
  %v707 = vpop.f32.mrf.mxu0
  %v708 = vadd.f32 0.0, %v707
  %709 = vmatmul.f32.gmra.mxu0 %v146
  %v710 = vpop.f32.mrf.mxu0
  %v711 = vadd.f32 0.0, %v710
  %712 = vmatmul.f32.gmra.mxu0 %v149
  %v713 = vpop.f32.mrf.mxu0
  %v714 = vadd.f32 0.0, %v713
  %715 = vmatmul.f32.gmra.mxu0 %v152
  %v716 = vpop.f32.mrf.mxu0
  %v717 = vadd.f32 0.0, %v716
  %718 = vmatmul.f32.gmra.mxu0 %v155
  %v719 = vpop.f32.mrf.mxu0
  %v720 = vadd.f32 0.0, %v719
  %721 = vmatmul.f32.gmra.mxu0 %v158
  %v722 = vpop.f32.mrf.mxu0
  %v723 = vadd.f32 0.0, %v722
  %724 = vmatmul.f32.gmra.mxu0 %v161
  %v725 = vpop.f32.mrf.mxu0
  %v726 = vadd.f32 0.0, %v725
  %727 = vmatmul.f32.gmra.mxu0 %v164
  %v728 = vpop.f32.mrf.mxu0
  %v729 = vadd.f32 0.0, %v728
  %730 = vmatmul.f32.gmra.mxu0 %v167
  %v731 = vpop.f32.mrf.mxu0
  %v732 = vadd.f32 0.0, %v731
  %733 = vmatmul.f32.gmra.mxu0 %v170
  %v734 = vpop.f32.mrf.mxu0
  %v735 = vadd.f32 0.0, %v734
  %736 = vmatmul.f32.gmra.mxu0 %v173
  %v737 = vpop.f32.mrf.mxu0
  %v738 = vadd.f32 0.0, %v737
  %739 = vmatmul.f32.gmra.mxu0 %v176
  %v740 = vpop.f32.mrf.mxu0
  %v741 = vadd.f32 0.0, %v740
  %742 = vmatmul.f32.gmra.mxu0 %v179
  %v743 = vpop.f32.mrf.mxu0
  %v744 = vadd.f32 0.0, %v743
  %745 = vmatmul.f32.gmra.mxu0 %v182
  %v746 = vpop.f32.mrf.mxu0
  %v747 = vadd.f32 0.0, %v746
  %748 = vmatmul.f32.gmra.mxu0 %v185
  %v749 = vpop.f32.mrf.mxu0
  %v750 = vadd.f32 0.0, %v749
  %751 = vmatmul.f32.gmra.mxu0 %v188
  %v752 = vpop.f32.mrf.mxu0
  %v753 = vadd.f32 0.0, %v752
  %754 = vmatmul.f32.gmra.mxu0 %v191
  %v755 = vpop.f32.mrf.mxu0
  %v756 = vadd.f32 0.0, %v755
  %757 = vmatmul.f32.gmra.mxu0 %v194
  %v758 = vpop.f32.mrf.mxu0
  %v759 = vadd.f32 0.0, %v758
  %760 = vmatmul.f32.gmra.mxu0 %v197
  %v761 = vpop.f32.mrf.mxu0
  %v762 = vadd.f32 0.0, %v761
  %763 = vmatmul.f32.gmra.mxu0 %v200
  %v764 = vpop.f32.mrf.mxu0
  %v765 = vadd.f32 0.0, %v764
  %766 = vmatmul.f32.gmra.mxu0 %v203
  %v767 = vpop.f32.mrf.mxu0
  %v768 = vadd.f32 0.0, %v767
  %769 = vmatmul.f32.gmra.mxu0 %v206
  %v770 = vpop.f32.mrf.mxu0
  %v771 = vadd.f32 0.0, %v770
  %772 = vmatmul.f32.gmra.mxu0 %v209
  %v773 = vpop.f32.mrf.mxu0
  %v774 = vadd.f32 0.0, %v773
  %775 = vmatmul.f32.gmra.mxu0 %v212
  %v776 = vpop.f32.mrf.mxu0
  %v777 = vadd.f32 0.0, %v776
  %778 = vmatmul.f32.gmra.mxu0 %v215
  %v779 = vpop.f32.mrf.mxu0
  %v780 = vadd.f32 0.0, %v779
  %781 = vmatmul.f32.gmra.mxu0 %v218
  %v782 = vpop.f32.mrf.mxu0
  %v783 = vadd.f32 0.0, %v782
  %784 = vdwg.mxu0
  %v786 = vsel %vm123, %v17, 0
  %v789 = vsel %vm123, %v18, 0
  %v792 = vsel %vm123, %v19, 0
  %v795 = vsel %vm123, %v20, 0
  %v798 = vsel %vm123, %v21, 0
  %v801 = vsel %vm123, %v22, 0
  %v804 = vsel %vm123, %v23, 0
  %v807 = vsel %vm123, %v24, 0
  %v810 = vsel %vm123, %v25, 0
  %v813 = vsel %vm123, %v26, 0
  %v816 = vsel %vm123, %v27, 0
  %v819 = vsel %vm123, %v28, 0
  %v822 = vsel %vm123, %v29, 0
  %v825 = vsel %vm123, %v30, 0
  %v828 = vsel %vm123, %v31, 0
  %v831 = vsel %vm123, %v32, 0
  %v834 = vsel %vm123, %v33, 0
  %v837 = vsel %vm123, %v34, 0
  %v840 = vsel %vm123, %v35, 0
  %v843 = vsel %vm123, %v36, 0
  %v846 = vsel %vm123, %v37, 0
  %v849 = vsel %vm123, %v38, 0
  %v852 = vsel %vm123, %v39, 0
  %v855 = vsel %vm123, %v40, 0
  %v858 = vsel %vm123, %v41, 0
  %v861 = vsel %vm123, %v42, 0
  %v864 = vsel %vm123, %v43, 0
  %v867 = vsel %vm123, %v44, 0
  %v870 = vsel %vm123, %v45, 0
  %v873 = vsel %vm123, %v46, 0
  %v876 = vsel %vm123, %v47, 0
  %v879 = vsel %vm123, %v48, 0
  %881 = vmatpush.msra.mxu0 0.0
  %882 = vmatpush.msra.mxu0 0.0
  %883 = vmatpush.msra.mxu0 0.0
  %884 = vmatpush.msra.mxu0 0.0
  %885 = vmatpush.msra.mxu0 0.0
  %886 = vmatpush.msra.mxu0 0.0
  %887 = vmatpush.msra.mxu0 0.0
  %888 = vmatpush.msra.mxu0 0.0
  %889 = vmatpush.msra.mxu0 0.0
  %890 = vmatpush.msra.mxu0 0.0
  %891 = vmatpush.msra.mxu0 0.0
  %892 = vmatpush.msra.mxu0 0.0
  %893 = vmatpush.msra.mxu0 0.0
  %894 = vmatpush.msra.mxu0 0.0
  %895 = vmatpush.msra.mxu0 0.0
  %896 = vmatpush.msra.mxu0 %v113
  %897 = vmatmul.f32.gmra.mxu0 %v786
  %v898 = vpop.f32.mrf.mxu0
  %v899 = vadd.f32 %v238, %v898
  %900 = vmatmul.f32.gmra.mxu0 %v789
  %v901 = vpop.f32.mrf.mxu0
  %v902 = vadd.f32 %v241, %v901
  %903 = vmatmul.f32.gmra.mxu0 %v792
  %v904 = vpop.f32.mrf.mxu0
  %v905 = vadd.f32 %v244, %v904
  %906 = vmatmul.f32.gmra.mxu0 %v795
  %v907 = vpop.f32.mrf.mxu0
  %v908 = vadd.f32 %v247, %v907
  %909 = vmatmul.f32.gmra.mxu0 %v798
  %v910 = vpop.f32.mrf.mxu0
  %v911 = vadd.f32 %v250, %v910
  %912 = vmatmul.f32.gmra.mxu0 %v801
  %v913 = vpop.f32.mrf.mxu0
  %v914 = vadd.f32 %v253, %v913
  %915 = vmatmul.f32.gmra.mxu0 %v804
  %v916 = vpop.f32.mrf.mxu0
  %v917 = vadd.f32 %v256, %v916
  %918 = vmatmul.f32.gmra.mxu0 %v807
  %v919 = vpop.f32.mrf.mxu0
  %v920 = vadd.f32 %v259, %v919
  %921 = vmatmul.f32.gmra.mxu0 %v810
  %v922 = vpop.f32.mrf.mxu0
  %v923 = vadd.f32 %v262, %v922
  %924 = vmatmul.f32.gmra.mxu0 %v813
  %v925 = vpop.f32.mrf.mxu0
  %v926 = vadd.f32 %v265, %v925
  %927 = vmatmul.f32.gmra.mxu0 %v816
  %v928 = vpop.f32.mrf.mxu0
  %v929 = vadd.f32 %v268, %v928
  %930 = vmatmul.f32.gmra.mxu0 %v819
  %v931 = vpop.f32.mrf.mxu0
  %v932 = vadd.f32 %v271, %v931
  %933 = vmatmul.f32.gmra.mxu0 %v822
  %v934 = vpop.f32.mrf.mxu0
  %v935 = vadd.f32 %v274, %v934
  %936 = vmatmul.f32.gmra.mxu0 %v825
  %v937 = vpop.f32.mrf.mxu0
  %v938 = vadd.f32 %v277, %v937
  %939 = vmatmul.f32.gmra.mxu0 %v828
  %v940 = vpop.f32.mrf.mxu0
  %v941 = vadd.f32 %v280, %v940
  %942 = vmatmul.f32.gmra.mxu0 %v831
  %v943 = vpop.f32.mrf.mxu0
  %v944 = vadd.f32 %v283, %v943
  %945 = vmatmul.f32.gmra.mxu0 %v834
  %v946 = vpop.f32.mrf.mxu0
  %v947 = vadd.f32 %v286, %v946
  %948 = vmatmul.f32.gmra.mxu0 %v837
  %v949 = vpop.f32.mrf.mxu0
  %v950 = vadd.f32 %v289, %v949
  %951 = vmatmul.f32.gmra.mxu0 %v840
  %v952 = vpop.f32.mrf.mxu0
  %v953 = vadd.f32 %v292, %v952
  %954 = vmatmul.f32.gmra.mxu0 %v843
  %v955 = vpop.f32.mrf.mxu0
  %v956 = vadd.f32 %v295, %v955
  %957 = vmatmul.f32.gmra.mxu0 %v846
  %v958 = vpop.f32.mrf.mxu0
  %v959 = vadd.f32 %v298, %v958
  %960 = vmatmul.f32.gmra.mxu0 %v849
  %v961 = vpop.f32.mrf.mxu0
  %v962 = vadd.f32 %v301, %v961
  %963 = vmatmul.f32.gmra.mxu0 %v852
  %v964 = vpop.f32.mrf.mxu0
  %v965 = vadd.f32 %v304, %v964
  %966 = vmatmul.f32.gmra.mxu0 %v855
  %v967 = vpop.f32.mrf.mxu0
  %v968 = vadd.f32 %v307, %v967
  %969 = vmatmul.f32.gmra.mxu0 %v858
  %v970 = vpop.f32.mrf.mxu0
  %v971 = vadd.f32 %v310, %v970
  %972 = vmatmul.f32.gmra.mxu0 %v861
  %v973 = vpop.f32.mrf.mxu0
  %v974 = vadd.f32 %v313, %v973
  %975 = vmatmul.f32.gmra.mxu0 %v864
  %v976 = vpop.f32.mrf.mxu0
  %v977 = vadd.f32 %v316, %v976
  %978 = vmatmul.f32.gmra.mxu0 %v867
  %v979 = vpop.f32.mrf.mxu0
  %v980 = vadd.f32 %v319, %v979
  %981 = vmatmul.f32.gmra.mxu0 %v870
  %v982 = vpop.f32.mrf.mxu0
  %v983 = vadd.f32 %v322, %v982
  %984 = vmatmul.f32.gmra.mxu0 %v873
  %v985 = vpop.f32.mrf.mxu0
  %v986 = vadd.f32 %v325, %v985
  %987 = vmatmul.f32.gmra.mxu0 %v876
  %v988 = vpop.f32.mrf.mxu0
  %v989 = vadd.f32 %v328, %v988
  %990 = vmatmul.f32.gmra.mxu0 %v879
  %v991 = vpop.f32.mrf.mxu0
  %v992 = vadd.f32 %v331, %v991
  %993 = vdwg.mxu0
  %994 = vmatpush.msra.mxu0 0.0
  %995 = vmatpush.msra.mxu0 0.0
  %996 = vmatpush.msra.mxu0 0.0
  %997 = vmatpush.msra.mxu0 0.0
  %998 = vmatpush.msra.mxu0 0.0
  %999 = vmatpush.msra.mxu0 0.0
  %1000 = vmatpush.msra.mxu0 0.0
  %1001 = vmatpush.msra.mxu0 0.0
  %1002 = vmatpush.msra.mxu0 0.0
  %1003 = vmatpush.msra.mxu0 0.0
  %1004 = vmatpush.msra.mxu0 0.0
  %1005 = vmatpush.msra.mxu0 0.0
  %1006 = vmatpush.msra.mxu0 0.0
  %1007 = vmatpush.msra.mxu0 0.0
  %1008 = vmatpush.msra.mxu0 0.0
  %1009 = vmatpush.msra.mxu0 %v114
  %1010 = vmatmul.f32.gmra.mxu0 %v786
  %v1011 = vpop.f32.mrf.mxu0
  %v1012 = vadd.f32 %v351, %v1011
  %1013 = vmatmul.f32.gmra.mxu0 %v789
  %v1014 = vpop.f32.mrf.mxu0
  %v1015 = vadd.f32 %v354, %v1014
  %1016 = vmatmul.f32.gmra.mxu0 %v792
  %v1017 = vpop.f32.mrf.mxu0
  %v1018 = vadd.f32 %v357, %v1017
  %1019 = vmatmul.f32.gmra.mxu0 %v795
  %v1020 = vpop.f32.mrf.mxu0
  %v1021 = vadd.f32 %v360, %v1020
  %1022 = vmatmul.f32.gmra.mxu0 %v798
  %v1023 = vpop.f32.mrf.mxu0
  %v1024 = vadd.f32 %v363, %v1023
  %1025 = vmatmul.f32.gmra.mxu0 %v801
  %v1026 = vpop.f32.mrf.mxu0
  %v1027 = vadd.f32 %v366, %v1026
  %1028 = vmatmul.f32.gmra.mxu0 %v804
  %v1029 = vpop.f32.mrf.mxu0
  %v1030 = vadd.f32 %v369, %v1029
  %1031 = vmatmul.f32.gmra.mxu0 %v807
  %v1032 = vpop.f32.mrf.mxu0
  %v1033 = vadd.f32 %v372, %v1032
  %1034 = vmatmul.f32.gmra.mxu0 %v810
  %v1035 = vpop.f32.mrf.mxu0
  %v1036 = vadd.f32 %v375, %v1035
  %1037 = vmatmul.f32.gmra.mxu0 %v813
  %v1038 = vpop.f32.mrf.mxu0
  %v1039 = vadd.f32 %v378, %v1038
  %1040 = vmatmul.f32.gmra.mxu0 %v816
  %v1041 = vpop.f32.mrf.mxu0
  %v1042 = vadd.f32 %v381, %v1041
  %1043 = vmatmul.f32.gmra.mxu0 %v819
  %v1044 = vpop.f32.mrf.mxu0
  %v1045 = vadd.f32 %v384, %v1044
  %1046 = vmatmul.f32.gmra.mxu0 %v822
  %v1047 = vpop.f32.mrf.mxu0
  %v1048 = vadd.f32 %v387, %v1047
  %1049 = vmatmul.f32.gmra.mxu0 %v825
  %v1050 = vpop.f32.mrf.mxu0
  %v1051 = vadd.f32 %v390, %v1050
  %1052 = vmatmul.f32.gmra.mxu0 %v828
  %v1053 = vpop.f32.mrf.mxu0
  %v1054 = vadd.f32 %v393, %v1053
  %1055 = vmatmul.f32.gmra.mxu0 %v831
  %v1056 = vpop.f32.mrf.mxu0
  %v1057 = vadd.f32 %v396, %v1056
  %1058 = vmatmul.f32.gmra.mxu0 %v834
  %v1059 = vpop.f32.mrf.mxu0
  %v1060 = vadd.f32 %v399, %v1059
  %1061 = vmatmul.f32.gmra.mxu0 %v837
  %v1062 = vpop.f32.mrf.mxu0
  %v1063 = vadd.f32 %v402, %v1062
  %1064 = vmatmul.f32.gmra.mxu0 %v840
  %v1065 = vpop.f32.mrf.mxu0
  %v1066 = vadd.f32 %v405, %v1065
  %1067 = vmatmul.f32.gmra.mxu0 %v843
  %v1068 = vpop.f32.mrf.mxu0
  %v1069 = vadd.f32 %v408, %v1068
  %1070 = vmatmul.f32.gmra.mxu0 %v846
  %v1071 = vpop.f32.mrf.mxu0
  %v1072 = vadd.f32 %v411, %v1071
  %1073 = vmatmul.f32.gmra.mxu0 %v849
  %v1074 = vpop.f32.mrf.mxu0
  %v1075 = vadd.f32 %v414, %v1074
  %1076 = vmatmul.f32.gmra.mxu0 %v852
  %v1077 = vpop.f32.mrf.mxu0
  %v1078 = vadd.f32 %v417, %v1077
  %1079 = vmatmul.f32.gmra.mxu0 %v855
  %v1080 = vpop.f32.mrf.mxu0
  %v1081 = vadd.f32 %v420, %v1080
  %1082 = vmatmul.f32.gmra.mxu0 %v858
  %v1083 = vpop.f32.mrf.mxu0
  %v1084 = vadd.f32 %v423, %v1083
  %1085 = vmatmul.f32.gmra.mxu0 %v861
  %v1086 = vpop.f32.mrf.mxu0
  %v1087 = vadd.f32 %v426, %v1086
  %1088 = vmatmul.f32.gmra.mxu0 %v864
  %v1089 = vpop.f32.mrf.mxu0
  %v1090 = vadd.f32 %v429, %v1089
  %1091 = vmatmul.f32.gmra.mxu0 %v867
  %v1092 = vpop.f32.mrf.mxu0
  %v1093 = vadd.f32 %v432, %v1092
  %1094 = vmatmul.f32.gmra.mxu0 %v870
  %v1095 = vpop.f32.mrf.mxu0
  %v1096 = vadd.f32 %v435, %v1095
  %1097 = vmatmul.f32.gmra.mxu0 %v873
  %v1098 = vpop.f32.mrf.mxu0
  %v1099 = vadd.f32 %v438, %v1098
  %1100 = vmatmul.f32.gmra.mxu0 %v876
  %v1101 = vpop.f32.mrf.mxu0
  %v1102 = vadd.f32 %v441, %v1101
  %1103 = vmatmul.f32.gmra.mxu0 %v879
  %v1104 = vpop.f32.mrf.mxu0
  %v1105 = vadd.f32 %v444, %v1104
  %1106 = vdwg.mxu0
  %1107 = vmatpush.msra.mxu0 0.0
  %1108 = vmatpush.msra.mxu0 0.0
  %1109 = vmatpush.msra.mxu0 0.0
  %1110 = vmatpush.msra.mxu0 0.0
  %1111 = vmatpush.msra.mxu0 0.0
  %1112 = vmatpush.msra.mxu0 0.0
  %1113 = vmatpush.msra.mxu0 0.0
  %1114 = vmatpush.msra.mxu0 0.0
  %1115 = vmatpush.msra.mxu0 0.0
  %1116 = vmatpush.msra.mxu0 0.0
  %1117 = vmatpush.msra.mxu0 0.0
  %1118 = vmatpush.msra.mxu0 0.0
  %1119 = vmatpush.msra.mxu0 0.0
  %1120 = vmatpush.msra.mxu0 0.0
  %1121 = vmatpush.msra.mxu0 0.0
  %1122 = vmatpush.msra.mxu0 %v115
  %1123 = vmatmul.f32.gmra.mxu0 %v786
  %v1124 = vpop.f32.mrf.mxu0
  %v1125 = vadd.f32 %v464, %v1124
  %1126 = vmatmul.f32.gmra.mxu0 %v789
  %v1127 = vpop.f32.mrf.mxu0
  %v1128 = vadd.f32 %v467, %v1127
  %1129 = vmatmul.f32.gmra.mxu0 %v792
  %v1130 = vpop.f32.mrf.mxu0
  %v1131 = vadd.f32 %v470, %v1130
  %1132 = vmatmul.f32.gmra.mxu0 %v795
  %v1133 = vpop.f32.mrf.mxu0
  %v1134 = vadd.f32 %v473, %v1133
  %1135 = vmatmul.f32.gmra.mxu0 %v798
  %v1136 = vpop.f32.mrf.mxu0
  %v1137 = vadd.f32 %v476, %v1136
  %1138 = vmatmul.f32.gmra.mxu0 %v801
  %v1139 = vpop.f32.mrf.mxu0
  %v1140 = vadd.f32 %v479, %v1139
  %1141 = vmatmul.f32.gmra.mxu0 %v804
  %v1142 = vpop.f32.mrf.mxu0
  %v1143 = vadd.f32 %v482, %v1142
  %1144 = vmatmul.f32.gmra.mxu0 %v807
  %v1145 = vpop.f32.mrf.mxu0
  %v1146 = vadd.f32 %v485, %v1145
  %1147 = vmatmul.f32.gmra.mxu0 %v810
  %v1148 = vpop.f32.mrf.mxu0
  %v1149 = vadd.f32 %v488, %v1148
  %1150 = vmatmul.f32.gmra.mxu0 %v813
  %v1151 = vpop.f32.mrf.mxu0
  %v1152 = vadd.f32 %v491, %v1151
  %1153 = vmatmul.f32.gmra.mxu0 %v816
  %v1154 = vpop.f32.mrf.mxu0
  %v1155 = vadd.f32 %v494, %v1154
  %1156 = vmatmul.f32.gmra.mxu0 %v819
  %v1157 = vpop.f32.mrf.mxu0
  %v1158 = vadd.f32 %v497, %v1157
  %1159 = vmatmul.f32.gmra.mxu0 %v822
  %v1160 = vpop.f32.mrf.mxu0
  %v1161 = vadd.f32 %v500, %v1160
  %1162 = vmatmul.f32.gmra.mxu0 %v825
  %v1163 = vpop.f32.mrf.mxu0
  %v1164 = vadd.f32 %v503, %v1163
  %1165 = vmatmul.f32.gmra.mxu0 %v828
  %v1166 = vpop.f32.mrf.mxu0
  %v1167 = vadd.f32 %v506, %v1166
  %1168 = vmatmul.f32.gmra.mxu0 %v831
  %v1169 = vpop.f32.mrf.mxu0
  %v1170 = vadd.f32 %v509, %v1169
  %1171 = vmatmul.f32.gmra.mxu0 %v834
  %v1172 = vpop.f32.mrf.mxu0
  %v1173 = vadd.f32 %v512, %v1172
  %1174 = vmatmul.f32.gmra.mxu0 %v837
  %v1175 = vpop.f32.mrf.mxu0
  %v1176 = vadd.f32 %v515, %v1175
  %1177 = vmatmul.f32.gmra.mxu0 %v840
  %v1178 = vpop.f32.mrf.mxu0
  %v1179 = vadd.f32 %v518, %v1178
  %1180 = vmatmul.f32.gmra.mxu0 %v843
  %v1181 = vpop.f32.mrf.mxu0
  %v1182 = vadd.f32 %v521, %v1181
  %1183 = vmatmul.f32.gmra.mxu0 %v846
  %v1184 = vpop.f32.mrf.mxu0
  %v1185 = vadd.f32 %v524, %v1184
  %1186 = vmatmul.f32.gmra.mxu0 %v849
  %v1187 = vpop.f32.mrf.mxu0
  %v1188 = vadd.f32 %v527, %v1187
  %1189 = vmatmul.f32.gmra.mxu0 %v852
  %v1190 = vpop.f32.mrf.mxu0
  %v1191 = vadd.f32 %v530, %v1190
  %1192 = vmatmul.f32.gmra.mxu0 %v855
  %v1193 = vpop.f32.mrf.mxu0
  %v1194 = vadd.f32 %v533, %v1193
  %1195 = vmatmul.f32.gmra.mxu0 %v858
  %v1196 = vpop.f32.mrf.mxu0
  %v1197 = vadd.f32 %v536, %v1196
  %1198 = vmatmul.f32.gmra.mxu0 %v861
  %v1199 = vpop.f32.mrf.mxu0
  %v1200 = vadd.f32 %v539, %v1199
  %1201 = vmatmul.f32.gmra.mxu0 %v864
  %v1202 = vpop.f32.mrf.mxu0
  %v1203 = vadd.f32 %v542, %v1202
  %1204 = vmatmul.f32.gmra.mxu0 %v867
  %v1205 = vpop.f32.mrf.mxu0
  %v1206 = vadd.f32 %v545, %v1205
  %1207 = vmatmul.f32.gmra.mxu0 %v870
  %v1208 = vpop.f32.mrf.mxu0
  %v1209 = vadd.f32 %v548, %v1208
  %1210 = vmatmul.f32.gmra.mxu0 %v873
  %v1211 = vpop.f32.mrf.mxu0
  %v1212 = vadd.f32 %v551, %v1211
  %1213 = vmatmul.f32.gmra.mxu0 %v876
  %v1214 = vpop.f32.mrf.mxu0
  %v1215 = vadd.f32 %v554, %v1214
  %1216 = vmatmul.f32.gmra.mxu0 %v879
  %v1217 = vpop.f32.mrf.mxu0
  %v1218 = vadd.f32 %v557, %v1217
  %1219 = vdwg.mxu0
  %1220 = vmatpush.msra.mxu0 0.0
  %1221 = vmatpush.msra.mxu0 0.0
  %1222 = vmatpush.msra.mxu0 0.0
  %1223 = vmatpush.msra.mxu0 0.0
  %1224 = vmatpush.msra.mxu0 0.0
  %1225 = vmatpush.msra.mxu0 0.0
  %1226 = vmatpush.msra.mxu0 0.0
  %1227 = vmatpush.msra.mxu0 0.0
  %1228 = vmatpush.msra.mxu0 0.0
  %1229 = vmatpush.msra.mxu0 0.0
  %1230 = vmatpush.msra.mxu0 0.0
  %1231 = vmatpush.msra.mxu0 0.0
  %1232 = vmatpush.msra.mxu0 0.0
  %1233 = vmatpush.msra.mxu0 0.0
  %1234 = vmatpush.msra.mxu0 0.0
  %1235 = vmatpush.msra.mxu0 %v116
  %1236 = vmatmul.f32.gmra.mxu0 %v786
  %v1237 = vpop.f32.mrf.mxu0
  %v1238 = vadd.f32 %v577, %v1237
  %1239 = vmatmul.f32.gmra.mxu0 %v789
  %v1240 = vpop.f32.mrf.mxu0
  %v1241 = vadd.f32 %v580, %v1240
  %1242 = vmatmul.f32.gmra.mxu0 %v792
  %v1243 = vpop.f32.mrf.mxu0
  %v1244 = vadd.f32 %v583, %v1243
  %1245 = vmatmul.f32.gmra.mxu0 %v795
  %v1246 = vpop.f32.mrf.mxu0
  %v1247 = vadd.f32 %v586, %v1246
  %1248 = vmatmul.f32.gmra.mxu0 %v798
  %v1249 = vpop.f32.mrf.mxu0
  %v1250 = vadd.f32 %v589, %v1249
  %1251 = vmatmul.f32.gmra.mxu0 %v801
  %v1252 = vpop.f32.mrf.mxu0
  %v1253 = vadd.f32 %v592, %v1252
  %1254 = vmatmul.f32.gmra.mxu0 %v804
  %v1255 = vpop.f32.mrf.mxu0
  %v1256 = vadd.f32 %v595, %v1255
  %1257 = vmatmul.f32.gmra.mxu0 %v807
  %v1258 = vpop.f32.mrf.mxu0
  %v1259 = vadd.f32 %v598, %v1258
  %1260 = vmatmul.f32.gmra.mxu0 %v810
  %v1261 = vpop.f32.mrf.mxu0
  %v1262 = vadd.f32 %v601, %v1261
  %1263 = vmatmul.f32.gmra.mxu0 %v813
  %v1264 = vpop.f32.mrf.mxu0
  %v1265 = vadd.f32 %v604, %v1264
  %1266 = vmatmul.f32.gmra.mxu0 %v816
  %v1267 = vpop.f32.mrf.mxu0
  %v1268 = vadd.f32 %v607, %v1267
  %1269 = vmatmul.f32.gmra.mxu0 %v819
  %v1270 = vpop.f32.mrf.mxu0
  %v1271 = vadd.f32 %v610, %v1270
  %1272 = vmatmul.f32.gmra.mxu0 %v822
  %v1273 = vpop.f32.mrf.mxu0
  %v1274 = vadd.f32 %v613, %v1273
  %1275 = vmatmul.f32.gmra.mxu0 %v825
  %v1276 = vpop.f32.mrf.mxu0
  %v1277 = vadd.f32 %v616, %v1276
  %1278 = vmatmul.f32.gmra.mxu0 %v828
  %v1279 = vpop.f32.mrf.mxu0
  %v1280 = vadd.f32 %v619, %v1279
  %1281 = vmatmul.f32.gmra.mxu0 %v831
  %v1282 = vpop.f32.mrf.mxu0
  %v1283 = vadd.f32 %v622, %v1282
  %1284 = vmatmul.f32.gmra.mxu0 %v834
  %v1285 = vpop.f32.mrf.mxu0
  %v1286 = vadd.f32 %v625, %v1285
  %1287 = vmatmul.f32.gmra.mxu0 %v837
  %v1288 = vpop.f32.mrf.mxu0
  %v1289 = vadd.f32 %v628, %v1288
  %1290 = vmatmul.f32.gmra.mxu0 %v840
  %v1291 = vpop.f32.mrf.mxu0
  %v1292 = vadd.f32 %v631, %v1291
  %1293 = vmatmul.f32.gmra.mxu0 %v843
  %v1294 = vpop.f32.mrf.mxu0
  %v1295 = vadd.f32 %v634, %v1294
  %1296 = vmatmul.f32.gmra.mxu0 %v846
  %v1297 = vpop.f32.mrf.mxu0
  %v1298 = vadd.f32 %v637, %v1297
  %1299 = vmatmul.f32.gmra.mxu0 %v849
  %v1300 = vpop.f32.mrf.mxu0
  %v1301 = vadd.f32 %v640, %v1300
  %1302 = vmatmul.f32.gmra.mxu0 %v852
  %v1303 = vpop.f32.mrf.mxu0
  %v1304 = vadd.f32 %v643, %v1303
  %1305 = vmatmul.f32.gmra.mxu0 %v855
  %v1306 = vpop.f32.mrf.mxu0
  %v1307 = vadd.f32 %v646, %v1306
  %1308 = vmatmul.f32.gmra.mxu0 %v858
  %v1309 = vpop.f32.mrf.mxu0
  %v1310 = vadd.f32 %v649, %v1309
  %1311 = vmatmul.f32.gmra.mxu0 %v861
  %v1312 = vpop.f32.mrf.mxu0
  %v1313 = vadd.f32 %v652, %v1312
  %1314 = vmatmul.f32.gmra.mxu0 %v864
  %v1315 = vpop.f32.mrf.mxu0
  %v1316 = vadd.f32 %v655, %v1315
  %1317 = vmatmul.f32.gmra.mxu0 %v867
  %v1318 = vpop.f32.mrf.mxu0
  %v1319 = vadd.f32 %v658, %v1318
  %1320 = vmatmul.f32.gmra.mxu0 %v870
  %v1321 = vpop.f32.mrf.mxu0
  %v1322 = vadd.f32 %v661, %v1321
  %1323 = vmatmul.f32.gmra.mxu0 %v873
  %v1324 = vpop.f32.mrf.mxu0
  %v1325 = vadd.f32 %v664, %v1324
  %1326 = vmatmul.f32.gmra.mxu0 %v876
  %v1327 = vpop.f32.mrf.mxu0
  %v1328 = vadd.f32 %v667, %v1327
  %1329 = vmatmul.f32.gmra.mxu0 %v879
  %v1330 = vpop.f32.mrf.mxu0
  %v1331 = vadd.f32 %v670, %v1330
  %1332 = vdwg.mxu0
  %1333 = vmatpush.msra.mxu0 0.0
  %1334 = vmatpush.msra.mxu0 0.0
  %1335 = vmatpush.msra.mxu0 0.0
  %1336 = vmatpush.msra.mxu0 0.0
  %1337 = vmatpush.msra.mxu0 0.0
  %1338 = vmatpush.msra.mxu0 0.0
  %1339 = vmatpush.msra.mxu0 0.0
  %1340 = vmatpush.msra.mxu0 0.0
  %1341 = vmatpush.msra.mxu0 0.0
  %1342 = vmatpush.msra.mxu0 0.0
  %1343 = vmatpush.msra.mxu0 0.0
  %1344 = vmatpush.msra.mxu0 0.0
  %1345 = vmatpush.msra.mxu0 0.0
  %1346 = vmatpush.msra.mxu0 0.0
  %1347 = vmatpush.msra.mxu0 0.0
  %1348 = vmatpush.msra.mxu0 %v117
  %1349 = vmatmul.f32.gmra.mxu0 %v786
  %v1350 = vpop.f32.mrf.mxu0
  %v1351 = vadd.f32 %v690, %v1350
  %1352 = vmatmul.f32.gmra.mxu0 %v789
  %v1353 = vpop.f32.mrf.mxu0
  %v1354 = vadd.f32 %v693, %v1353
  %1355 = vmatmul.f32.gmra.mxu0 %v792
  %v1356 = vpop.f32.mrf.mxu0
  %v1357 = vadd.f32 %v696, %v1356
  %1358 = vmatmul.f32.gmra.mxu0 %v795
  %v1359 = vpop.f32.mrf.mxu0
  %v1360 = vadd.f32 %v699, %v1359
  %1361 = vmatmul.f32.gmra.mxu0 %v798
  %v1362 = vpop.f32.mrf.mxu0
  %v1363 = vadd.f32 %v702, %v1362
  %1364 = vmatmul.f32.gmra.mxu0 %v801
  %v1365 = vpop.f32.mrf.mxu0
  %v1366 = vadd.f32 %v705, %v1365
  %1367 = vmatmul.f32.gmra.mxu0 %v804
  %v1368 = vpop.f32.mrf.mxu0
  %v1369 = vadd.f32 %v708, %v1368
  %1370 = vmatmul.f32.gmra.mxu0 %v807
  %v1371 = vpop.f32.mrf.mxu0
  %v1372 = vadd.f32 %v711, %v1371
  %1373 = vmatmul.f32.gmra.mxu0 %v810
  %v1374 = vpop.f32.mrf.mxu0
  %v1375 = vadd.f32 %v714, %v1374
  %1376 = vmatmul.f32.gmra.mxu0 %v813
  %v1377 = vpop.f32.mrf.mxu0
  %v1378 = vadd.f32 %v717, %v1377
  %1379 = vmatmul.f32.gmra.mxu0 %v816
  %v1380 = vpop.f32.mrf.mxu0
  %v1381 = vadd.f32 %v720, %v1380
  %1382 = vmatmul.f32.gmra.mxu0 %v819
  %v1383 = vpop.f32.mrf.mxu0
  %v1384 = vadd.f32 %v723, %v1383
  %1385 = vmatmul.f32.gmra.mxu0 %v822
  %v1386 = vpop.f32.mrf.mxu0
  %v1387 = vadd.f32 %v726, %v1386
  %1388 = vmatmul.f32.gmra.mxu0 %v825
  %v1389 = vpop.f32.mrf.mxu0
  %v1390 = vadd.f32 %v729, %v1389
  %1391 = vmatmul.f32.gmra.mxu0 %v828
  %v1392 = vpop.f32.mrf.mxu0
  %v1393 = vadd.f32 %v732, %v1392
  %1394 = vmatmul.f32.gmra.mxu0 %v831
  %v1395 = vpop.f32.mrf.mxu0
  %v1396 = vadd.f32 %v735, %v1395
  %1397 = vmatmul.f32.gmra.mxu0 %v834
  %v1398 = vpop.f32.mrf.mxu0
  %v1399 = vadd.f32 %v738, %v1398
  %1400 = vmatmul.f32.gmra.mxu0 %v837
  %v1401 = vpop.f32.mrf.mxu0
  %v1402 = vadd.f32 %v741, %v1401
  %1403 = vmatmul.f32.gmra.mxu0 %v840
  %v1404 = vpop.f32.mrf.mxu0
  %v1405 = vadd.f32 %v744, %v1404
  %1406 = vmatmul.f32.gmra.mxu0 %v843
  %v1407 = vpop.f32.mrf.mxu0
  %v1408 = vadd.f32 %v747, %v1407
  %1409 = vmatmul.f32.gmra.mxu0 %v846
  %v1410 = vpop.f32.mrf.mxu0
  %v1411 = vadd.f32 %v750, %v1410
  %1412 = vmatmul.f32.gmra.mxu0 %v849
  %v1413 = vpop.f32.mrf.mxu0
  %v1414 = vadd.f32 %v753, %v1413
  %1415 = vmatmul.f32.gmra.mxu0 %v852
  %v1416 = vpop.f32.mrf.mxu0
  %v1417 = vadd.f32 %v756, %v1416
  %1418 = vmatmul.f32.gmra.mxu0 %v855
  %v1419 = vpop.f32.mrf.mxu0
  %v1420 = vadd.f32 %v759, %v1419
  %1421 = vmatmul.f32.gmra.mxu0 %v858
  %v1422 = vpop.f32.mrf.mxu0
  %v1423 = vadd.f32 %v762, %v1422
  %1424 = vmatmul.f32.gmra.mxu0 %v861
  %v1425 = vpop.f32.mrf.mxu0
  %v1426 = vadd.f32 %v765, %v1425
  %1427 = vmatmul.f32.gmra.mxu0 %v864
  %v1428 = vpop.f32.mrf.mxu0
  %v1429 = vadd.f32 %v768, %v1428
  %1430 = vmatmul.f32.gmra.mxu0 %v867
  %v1431 = vpop.f32.mrf.mxu0
  %v1432 = vadd.f32 %v771, %v1431
  %1433 = vmatmul.f32.gmra.mxu0 %v870
  %v1434 = vpop.f32.mrf.mxu0
  %v1435 = vadd.f32 %v774, %v1434
  %1436 = vmatmul.f32.gmra.mxu0 %v873
  %v1437 = vpop.f32.mrf.mxu0
  %v1438 = vadd.f32 %v777, %v1437
  %1439 = vmatmul.f32.gmra.mxu0 %v876
  %v1440 = vpop.f32.mrf.mxu0
  %v1441 = vadd.f32 %v780, %v1440
  %1442 = vmatmul.f32.gmra.mxu0 %v879
  %v1443 = vpop.f32.mrf.mxu0
  %v1444 = vadd.f32 %v783, %v1443
  %1445 = vdwg.mxu0
  %v1446 = vlaneseq
  %v1447 = vand.u32 %v1446, 127
  %vm1448 = vcmp.lt.s32.totalorder %v1447, 4
  %v1449 = vsel %vm1448, %v899, -inf
  %v1450 = vsel %vm1448, %v902, -inf
  %v1451 = vsel %vm1448, %v905, -inf
  %v1452 = vsel %vm1448, %v908, -inf
  %v1453 = vsel %vm1448, %v911, -inf
  %v1454 = vsel %vm1448, %v914, -inf
  %v1455 = vsel %vm1448, %v917, -inf
  %v1456 = vsel %vm1448, %v920, -inf
  %v1457 = vsel %vm1448, %v923, -inf
  %v1458 = vsel %vm1448, %v926, -inf
  %v1459 = vsel %vm1448, %v929, -inf
  %v1460 = vsel %vm1448, %v932, -inf
  %v1461 = vsel %vm1448, %v935, -inf
  %v1462 = vsel %vm1448, %v938, -inf
  %v1463 = vsel %vm1448, %v941, -inf
  %v1464 = vsel %vm1448, %v944, -inf
  %v1465 = vsel %vm1448, %v947, -inf
  %v1466 = vsel %vm1448, %v950, -inf
  %v1467 = vsel %vm1448, %v953, -inf
  %v1468 = vsel %vm1448, %v956, -inf
  %v1469 = vsel %vm1448, %v959, -inf
  %v1470 = vsel %vm1448, %v962, -inf
  %v1471 = vsel %vm1448, %v965, -inf
  %v1472 = vsel %vm1448, %v968, -inf
  %v1473 = vsel %vm1448, %v971, -inf
  %v1474 = vsel %vm1448, %v974, -inf
  %v1475 = vsel %vm1448, %v977, -inf
  %v1476 = vsel %vm1448, %v980, -inf
  %v1477 = vsel %vm1448, %v983, -inf
  %v1478 = vsel %vm1448, %v986, -inf
  %v1479 = vsel %vm1448, %v989, -inf
  %v1480 = vsel %vm1448, %v992, -inf
  %1481 = vmax.xlane.f32.xlu0 %v1449
  %v1482 = vpop.xlane.xlu0 %1481
  %1483 = vmax.xlane.f32.xlu0 %v1450
  %v1484 = vpop.xlane.xlu0 %1483
  %1485 = vmax.xlane.f32.xlu0 %v1451
  %v1486 = vpop.xlane.xlu0 %1485
  %1487 = vmax.xlane.f32.xlu0 %v1452
  %v1488 = vpop.xlane.xlu0 %1487
  %1489 = vmax.xlane.f32.xlu0 %v1453
  %v1490 = vpop.xlane.xlu0 %1489
  %1491 = vmax.xlane.f32.xlu0 %v1454
  %v1492 = vpop.xlane.xlu0 %1491
  %1493 = vmax.xlane.f32.xlu0 %v1455
  %v1494 = vpop.xlane.xlu0 %1493
  %1495 = vmax.xlane.f32.xlu0 %v1456
  %v1496 = vpop.xlane.xlu0 %1495
  %1497 = vmax.xlane.f32.xlu0 %v1457
  %v1498 = vpop.xlane.xlu0 %1497
  %1499 = vmax.xlane.f32.xlu0 %v1458
  %v1500 = vpop.xlane.xlu0 %1499
  %1501 = vmax.xlane.f32.xlu0 %v1459
  %v1502 = vpop.xlane.xlu0 %1501
  %1503 = vmax.xlane.f32.xlu0 %v1460
  %v1504 = vpop.xlane.xlu0 %1503
  %1505 = vmax.xlane.f32.xlu0 %v1461
  %v1506 = vpop.xlane.xlu0 %1505
  %1507 = vmax.xlane.f32.xlu0 %v1462
  %v1508 = vpop.xlane.xlu0 %1507
  %1509 = vmax.xlane.f32.xlu0 %v1463
  %v1510 = vpop.xlane.xlu0 %1509
  %1511 = vmax.xlane.f32.xlu0 %v1464
  %v1512 = vpop.xlane.xlu0 %1511
  %1513 = vmax.xlane.f32.xlu0 %v1465
  %v1514 = vpop.xlane.xlu0 %1513
  %1515 = vmax.xlane.f32.xlu0 %v1466
  %v1516 = vpop.xlane.xlu0 %1515
  %1517 = vmax.xlane.f32.xlu0 %v1467
  %v1518 = vpop.xlane.xlu0 %1517
  %1519 = vmax.xlane.f32.xlu0 %v1468
  %v1520 = vpop.xlane.xlu0 %1519
  %1521 = vmax.xlane.f32.xlu0 %v1469
  %v1522 = vpop.xlane.xlu0 %1521
  %1523 = vmax.xlane.f32.xlu0 %v1470
  %v1524 = vpop.xlane.xlu0 %1523
  %1525 = vmax.xlane.f32.xlu0 %v1471
  %v1526 = vpop.xlane.xlu0 %1525
  %1527 = vmax.xlane.f32.xlu0 %v1472
  %v1528 = vpop.xlane.xlu0 %1527
  %1529 = vmax.xlane.f32.xlu0 %v1473
  %v1530 = vpop.xlane.xlu0 %1529
  %1531 = vmax.xlane.f32.xlu0 %v1474
  %v1532 = vpop.xlane.xlu0 %1531
  %1533 = vmax.xlane.f32.xlu0 %v1475
  %v1534 = vpop.xlane.xlu0 %1533
  %1535 = vmax.xlane.f32.xlu0 %v1476
  %v1536 = vpop.xlane.xlu0 %1535
  %1537 = vmax.xlane.f32.xlu0 %v1477
  %v1538 = vpop.xlane.xlu0 %1537
  %1539 = vmax.xlane.f32.xlu0 %v1478
  %v1540 = vpop.xlane.xlu0 %1539
  %1541 = vmax.xlane.f32.xlu0 %v1479
  %v1542 = vpop.xlane.xlu0 %1541
  %1543 = vmax.xlane.f32.xlu0 %v1480
  %v1544 = vpop.xlane.xlu0 %1543
  %vm1545 = vcmp.eq.f32.partialorder %v1449, %v1482
  %vm1546 = vcmp.eq.f32.partialorder %v1450, %v1484
  %vm1547 = vcmp.eq.f32.partialorder %v1451, %v1486
  %vm1548 = vcmp.eq.f32.partialorder %v1452, %v1488
  %vm1549 = vcmp.eq.f32.partialorder %v1453, %v1490
  %vm1550 = vcmp.eq.f32.partialorder %v1454, %v1492
  %vm1551 = vcmp.eq.f32.partialorder %v1455, %v1494
  %vm1552 = vcmp.eq.f32.partialorder %v1456, %v1496
  %vm1553 = vcmp.eq.f32.partialorder %v1457, %v1498
  %vm1554 = vcmp.eq.f32.partialorder %v1458, %v1500
  %vm1555 = vcmp.eq.f32.partialorder %v1459, %v1502
  %vm1556 = vcmp.eq.f32.partialorder %v1460, %v1504
  %vm1557 = vcmp.eq.f32.partialorder %v1461, %v1506
  %vm1558 = vcmp.eq.f32.partialorder %v1462, %v1508
  %vm1559 = vcmp.eq.f32.partialorder %v1463, %v1510
  %vm1560 = vcmp.eq.f32.partialorder %v1464, %v1512
  %vm1561 = vcmp.eq.f32.partialorder %v1465, %v1514
  %vm1562 = vcmp.eq.f32.partialorder %v1466, %v1516
  %vm1563 = vcmp.eq.f32.partialorder %v1467, %v1518
  %vm1564 = vcmp.eq.f32.partialorder %v1468, %v1520
  %vm1565 = vcmp.eq.f32.partialorder %v1469, %v1522
  %vm1566 = vcmp.eq.f32.partialorder %v1470, %v1524
  %vm1567 = vcmp.eq.f32.partialorder %v1471, %v1526
  %vm1568 = vcmp.eq.f32.partialorder %v1472, %v1528
  %vm1569 = vcmp.eq.f32.partialorder %v1473, %v1530
  %vm1570 = vcmp.eq.f32.partialorder %v1474, %v1532
  %vm1571 = vcmp.eq.f32.partialorder %v1475, %v1534
  %vm1572 = vcmp.eq.f32.partialorder %v1476, %v1536
  %vm1573 = vcmp.eq.f32.partialorder %v1477, %v1538
  %vm1574 = vcmp.eq.f32.partialorder %v1478, %v1540
  %vm1575 = vcmp.eq.f32.partialorder %v1479, %v1542
  %vm1576 = vcmp.eq.f32.partialorder %v1480, %v1544
  %v1577 = vsel %vm1545, %v1447, 4
  %v1578 = vsel %vm1546, %v1447, 4
  %v1579 = vsel %vm1547, %v1447, 4
  %v1580 = vsel %vm1548, %v1447, 4
  %v1581 = vsel %vm1549, %v1447, 4
  %v1582 = vsel %vm1550, %v1447, 4
  %v1583 = vsel %vm1551, %v1447, 4
  %v1584 = vsel %vm1552, %v1447, 4
  %v1585 = vsel %vm1553, %v1447, 4
  %v1586 = vsel %vm1554, %v1447, 4
  %v1587 = vsel %vm1555, %v1447, 4
  %v1588 = vsel %vm1556, %v1447, 4
  %v1589 = vsel %vm1557, %v1447, 4
  %v1590 = vsel %vm1558, %v1447, 4
  %v1591 = vsel %vm1559, %v1447, 4
  %v1592 = vsel %vm1560, %v1447, 4
  %v1593 = vsel %vm1561, %v1447, 4
  %v1594 = vsel %vm1562, %v1447, 4
  %v1595 = vsel %vm1563, %v1447, 4
  %v1596 = vsel %vm1564, %v1447, 4
  %v1597 = vsel %vm1565, %v1447, 4
  %v1598 = vsel %vm1566, %v1447, 4
  %v1599 = vsel %vm1567, %v1447, 4
  %v1600 = vsel %vm1568, %v1447, 4
  %v1601 = vsel %vm1569, %v1447, 4
  %v1602 = vsel %vm1570, %v1447, 4
  %v1603 = vsel %vm1571, %v1447, 4
  %v1604 = vsel %vm1572, %v1447, 4
  %v1605 = vsel %vm1573, %v1447, 4
  %v1606 = vsel %vm1574, %v1447, 4
  %v1607 = vsel %vm1575, %v1447, 4
  %v1608 = vsel %vm1576, %v1447, 4
  %v1609 = vand.u32 %v1577, 65535
  %v1610 = vshra.s32 %v1577, 16
  %v1611 = vcvt.s32.f32 %v1609
  %v1612 = vcvt.s32.f32 %v1610
  %1613 = vmin.xlane.f32.xlu0 %v1612
  %v1614 = vpop.xlane.xlu0 %1613
  %vm1615 = vcmp.eq.f32.partialorder %v1612, %v1614
  %v1616 = vsel %vm1615, %v1611, inf
  %1617 = vmin.xlane.f32.xlu0 %v1616
  %v1618 = vpop.xlane.xlu0 %1617
  %v1619 = vcvt.f32.s32 %v1618
  %v1620 = vcvt.f32.s32 %v1614
  %v1621 = vshll.u32 %v1620, 16
  %v1622 = vadd.s32 %v1621, %v1619
  %v1623 = vand.u32 %v1578, 65535
  %v1624 = vshra.s32 %v1578, 16
  %v1625 = vcvt.s32.f32 %v1623
  %v1626 = vcvt.s32.f32 %v1624
  %1627 = vmin.xlane.f32.xlu0 %v1626
  %v1628 = vpop.xlane.xlu0 %1627
  %vm1629 = vcmp.eq.f32.partialorder %v1626, %v1628
  %v1630 = vsel %vm1629, %v1625, inf
  %1631 = vmin.xlane.f32.xlu0 %v1630
  %v1632 = vpop.xlane.xlu0 %1631
  %v1633 = vcvt.f32.s32 %v1632
  %v1634 = vcvt.f32.s32 %v1628
  %v1635 = vshll.u32 %v1634, 16
  %v1636 = vadd.s32 %v1635, %v1633
  %v1637 = vand.u32 %v1579, 65535
  %v1638 = vshra.s32 %v1579, 16
  %v1639 = vcvt.s32.f32 %v1637
  %v1640 = vcvt.s32.f32 %v1638
  %1641 = vmin.xlane.f32.xlu0 %v1640
  %v1642 = vpop.xlane.xlu0 %1641
  %vm1643 = vcmp.eq.f32.partialorder %v1640, %v1642
  %v1644 = vsel %vm1643, %v1639, inf
  %1645 = vmin.xlane.f32.xlu0 %v1644
  %v1646 = vpop.xlane.xlu0 %1645
  %v1647 = vcvt.f32.s32 %v1646
  %v1648 = vcvt.f32.s32 %v1642
  %v1649 = vshll.u32 %v1648, 16
  %v1650 = vadd.s32 %v1649, %v1647
  %v1651 = vand.u32 %v1580, 65535
  %v1652 = vshra.s32 %v1580, 16
  %v1653 = vcvt.s32.f32 %v1651
  %v1654 = vcvt.s32.f32 %v1652
  %1655 = vmin.xlane.f32.xlu0 %v1654
  %v1656 = vpop.xlane.xlu0 %1655
  %vm1657 = vcmp.eq.f32.partialorder %v1654, %v1656
  %v1658 = vsel %vm1657, %v1653, inf
  %1659 = vmin.xlane.f32.xlu0 %v1658
  %v1660 = vpop.xlane.xlu0 %1659
  %v1661 = vcvt.f32.s32 %v1660
  %v1662 = vcvt.f32.s32 %v1656
  %v1663 = vshll.u32 %v1662, 16
  %v1664 = vadd.s32 %v1663, %v1661
  %v1665 = vand.u32 %v1581, 65535
  %v1666 = vshra.s32 %v1581, 16
  %v1667 = vcvt.s32.f32 %v1665
  %v1668 = vcvt.s32.f32 %v1666
  %1669 = vmin.xlane.f32.xlu0 %v1668
  %v1670 = vpop.xlane.xlu0 %1669
  %vm1671 = vcmp.eq.f32.partialorder %v1668, %v1670
  %v1672 = vsel %vm1671, %v1667, inf
  %1673 = vmin.xlane.f32.xlu0 %v1672
  %v1674 = vpop.xlane.xlu0 %1673
  %v1675 = vcvt.f32.s32 %v1674
  %v1676 = vcvt.f32.s32 %v1670
  %v1677 = vshll.u32 %v1676, 16
  %v1678 = vadd.s32 %v1677, %v1675
  %v1679 = vand.u32 %v1582, 65535
  %v1680 = vshra.s32 %v1582, 16
  %v1681 = vcvt.s32.f32 %v1679
  %v1682 = vcvt.s32.f32 %v1680
  %1683 = vmin.xlane.f32.xlu0 %v1682
  %v1684 = vpop.xlane.xlu0 %1683
  %vm1685 = vcmp.eq.f32.partialorder %v1682, %v1684
  %v1686 = vsel %vm1685, %v1681, inf
  %1687 = vmin.xlane.f32.xlu0 %v1686
  %v1688 = vpop.xlane.xlu0 %1687
  %v1689 = vcvt.f32.s32 %v1688
  %v1690 = vcvt.f32.s32 %v1684
  %v1691 = vshll.u32 %v1690, 16
  %v1692 = vadd.s32 %v1691, %v1689
  %v1693 = vand.u32 %v1583, 65535
  %v1694 = vshra.s32 %v1583, 16
  %v1695 = vcvt.s32.f32 %v1693
  %v1696 = vcvt.s32.f32 %v1694
  %1697 = vmin.xlane.f32.xlu0 %v1696
  %v1698 = vpop.xlane.xlu0 %1697
  %vm1699 = vcmp.eq.f32.partialorder %v1696, %v1698
  %v1700 = vsel %vm1699, %v1695, inf
  %1701 = vmin.xlane.f32.xlu0 %v1700
  %v1702 = vpop.xlane.xlu0 %1701
  %v1703 = vcvt.f32.s32 %v1702
  %v1704 = vcvt.f32.s32 %v1698
  %v1705 = vshll.u32 %v1704, 16
  %v1706 = vadd.s32 %v1705, %v1703
  %v1707 = vand.u32 %v1584, 65535
  %v1708 = vshra.s32 %v1584, 16
  %v1709 = vcvt.s32.f32 %v1707
  %v1710 = vcvt.s32.f32 %v1708
  %1711 = vmin.xlane.f32.xlu0 %v1710
  %v1712 = vpop.xlane.xlu0 %1711
  %vm1713 = vcmp.eq.f32.partialorder %v1710, %v1712
  %v1714 = vsel %vm1713, %v1709, inf
  %1715 = vmin.xlane.f32.xlu0 %v1714
  %v1716 = vpop.xlane.xlu0 %1715
  %v1717 = vcvt.f32.s32 %v1716
  %v1718 = vcvt.f32.s32 %v1712
  %v1719 = vshll.u32 %v1718, 16
  %v1720 = vadd.s32 %v1719, %v1717
  %v1721 = vand.u32 %v1585, 65535
  %v1722 = vshra.s32 %v1585, 16
  %v1723 = vcvt.s32.f32 %v1721
  %v1724 = vcvt.s32.f32 %v1722
  %1725 = vmin.xlane.f32.xlu0 %v1724
  %v1726 = vpop.xlane.xlu0 %1725
  %vm1727 = vcmp.eq.f32.partialorder %v1724, %v1726
  %v1728 = vsel %vm1727, %v1723, inf
  %1729 = vmin.xlane.f32.xlu0 %v1728
  %v1730 = vpop.xlane.xlu0 %1729
  %v1731 = vcvt.f32.s32 %v1730
  %v1732 = vcvt.f32.s32 %v1726
  %v1733 = vshll.u32 %v1732, 16
  %v1734 = vadd.s32 %v1733, %v1731
  %v1735 = vand.u32 %v1586, 65535
  %v1736 = vshra.s32 %v1586, 16
  %v1737 = vcvt.s32.f32 %v1735
  %v1738 = vcvt.s32.f32 %v1736
  %1739 = vmin.xlane.f32.xlu0 %v1738
  %v1740 = vpop.xlane.xlu0 %1739
  %vm1741 = vcmp.eq.f32.partialorder %v1738, %v1740
  %v1742 = vsel %vm1741, %v1737, inf
  %1743 = vmin.xlane.f32.xlu0 %v1742
  %v1744 = vpop.xlane.xlu0 %1743
  %v1745 = vcvt.f32.s32 %v1744
  %v1746 = vcvt.f32.s32 %v1740
  %v1747 = vshll.u32 %v1746, 16
  %v1748 = vadd.s32 %v1747, %v1745
  %v1749 = vand.u32 %v1587, 65535
  %v1750 = vshra.s32 %v1587, 16
  %v1751 = vcvt.s32.f32 %v1749
  %v1752 = vcvt.s32.f32 %v1750
  %1753 = vmin.xlane.f32.xlu0 %v1752
  %v1754 = vpop.xlane.xlu0 %1753
  %vm1755 = vcmp.eq.f32.partialorder %v1752, %v1754
  %v1756 = vsel %vm1755, %v1751, inf
  %1757 = vmin.xlane.f32.xlu0 %v1756
  %v1758 = vpop.xlane.xlu0 %1757
  %v1759 = vcvt.f32.s32 %v1758
  %v1760 = vcvt.f32.s32 %v1754
  %v1761 = vshll.u32 %v1760, 16
  %v1762 = vadd.s32 %v1761, %v1759
  %v1763 = vand.u32 %v1588, 65535
  %v1764 = vshra.s32 %v1588, 16
  %v1765 = vcvt.s32.f32 %v1763
  %v1766 = vcvt.s32.f32 %v1764
  %1767 = vmin.xlane.f32.xlu0 %v1766
  %v1768 = vpop.xlane.xlu0 %1767
  %vm1769 = vcmp.eq.f32.partialorder %v1766, %v1768
  %v1770 = vsel %vm1769, %v1765, inf
  %1771 = vmin.xlane.f32.xlu0 %v1770
  %v1772 = vpop.xlane.xlu0 %1771
  %v1773 = vcvt.f32.s32 %v1772
  %v1774 = vcvt.f32.s32 %v1768
  %v1775 = vshll.u32 %v1774, 16
  %v1776 = vadd.s32 %v1775, %v1773
  %v1777 = vand.u32 %v1589, 65535
  %v1778 = vshra.s32 %v1589, 16
  %v1779 = vcvt.s32.f32 %v1777
  %v1780 = vcvt.s32.f32 %v1778
  %1781 = vmin.xlane.f32.xlu0 %v1780
  %v1782 = vpop.xlane.xlu0 %1781
  %vm1783 = vcmp.eq.f32.partialorder %v1780, %v1782
  %v1784 = vsel %vm1783, %v1779, inf
  %1785 = vmin.xlane.f32.xlu0 %v1784
  %v1786 = vpop.xlane.xlu0 %1785
  %v1787 = vcvt.f32.s32 %v1786
  %v1788 = vcvt.f32.s32 %v1782
  %v1789 = vshll.u32 %v1788, 16
  %v1790 = vadd.s32 %v1789, %v1787
  %v1791 = vand.u32 %v1590, 65535
  %v1792 = vshra.s32 %v1590, 16
  %v1793 = vcvt.s32.f32 %v1791
  %v1794 = vcvt.s32.f32 %v1792
  %1795 = vmin.xlane.f32.xlu0 %v1794
  %v1796 = vpop.xlane.xlu0 %1795
  %vm1797 = vcmp.eq.f32.partialorder %v1794, %v1796
  %v1798 = vsel %vm1797, %v1793, inf
  %1799 = vmin.xlane.f32.xlu0 %v1798
  %v1800 = vpop.xlane.xlu0 %1799
  %v1801 = vcvt.f32.s32 %v1800
  %v1802 = vcvt.f32.s32 %v1796
  %v1803 = vshll.u32 %v1802, 16
  %v1804 = vadd.s32 %v1803, %v1801
  %v1805 = vand.u32 %v1591, 65535
  %v1806 = vshra.s32 %v1591, 16
  %v1807 = vcvt.s32.f32 %v1805
  %v1808 = vcvt.s32.f32 %v1806
  %1809 = vmin.xlane.f32.xlu0 %v1808
  %v1810 = vpop.xlane.xlu0 %1809
  %vm1811 = vcmp.eq.f32.partialorder %v1808, %v1810
  %v1812 = vsel %vm1811, %v1807, inf
  %1813 = vmin.xlane.f32.xlu0 %v1812
  %v1814 = vpop.xlane.xlu0 %1813
  %v1815 = vcvt.f32.s32 %v1814
  %v1816 = vcvt.f32.s32 %v1810
  %v1817 = vshll.u32 %v1816, 16
  %v1818 = vadd.s32 %v1817, %v1815
  %v1819 = vand.u32 %v1592, 65535
  %v1820 = vshra.s32 %v1592, 16
  %v1821 = vcvt.s32.f32 %v1819
  %v1822 = vcvt.s32.f32 %v1820
  %1823 = vmin.xlane.f32.xlu0 %v1822
  %v1824 = vpop.xlane.xlu0 %1823
  %vm1825 = vcmp.eq.f32.partialorder %v1822, %v1824
  %v1826 = vsel %vm1825, %v1821, inf
  %1827 = vmin.xlane.f32.xlu0 %v1826
  %v1828 = vpop.xlane.xlu0 %1827
  %v1829 = vcvt.f32.s32 %v1828
  %v1830 = vcvt.f32.s32 %v1824
  %v1831 = vshll.u32 %v1830, 16
  %v1832 = vadd.s32 %v1831, %v1829
  %v1833 = vand.u32 %v1593, 65535
  %v1834 = vshra.s32 %v1593, 16
  %v1835 = vcvt.s32.f32 %v1833
  %v1836 = vcvt.s32.f32 %v1834
  %1837 = vmin.xlane.f32.xlu0 %v1836
  %v1838 = vpop.xlane.xlu0 %1837
  %vm1839 = vcmp.eq.f32.partialorder %v1836, %v1838
  %v1840 = vsel %vm1839, %v1835, inf
  %1841 = vmin.xlane.f32.xlu0 %v1840
  %v1842 = vpop.xlane.xlu0 %1841
  %v1843 = vcvt.f32.s32 %v1842
  %v1844 = vcvt.f32.s32 %v1838
  %v1845 = vshll.u32 %v1844, 16
  %v1846 = vadd.s32 %v1845, %v1843
  %v1847 = vand.u32 %v1594, 65535
  %v1848 = vshra.s32 %v1594, 16
  %v1849 = vcvt.s32.f32 %v1847
  %v1850 = vcvt.s32.f32 %v1848
  %1851 = vmin.xlane.f32.xlu0 %v1850
  %v1852 = vpop.xlane.xlu0 %1851
  %vm1853 = vcmp.eq.f32.partialorder %v1850, %v1852
  %v1854 = vsel %vm1853, %v1849, inf
  %1855 = vmin.xlane.f32.xlu0 %v1854
  %v1856 = vpop.xlane.xlu0 %1855
  %v1857 = vcvt.f32.s32 %v1856
  %v1858 = vcvt.f32.s32 %v1852
  %v1859 = vshll.u32 %v1858, 16
  %v1860 = vadd.s32 %v1859, %v1857
  %v1861 = vand.u32 %v1595, 65535
  %v1862 = vshra.s32 %v1595, 16
  %v1863 = vcvt.s32.f32 %v1861
  %v1864 = vcvt.s32.f32 %v1862
  %1865 = vmin.xlane.f32.xlu0 %v1864
  %v1866 = vpop.xlane.xlu0 %1865
  %vm1867 = vcmp.eq.f32.partialorder %v1864, %v1866
  %v1868 = vsel %vm1867, %v1863, inf
  %1869 = vmin.xlane.f32.xlu0 %v1868
  %v1870 = vpop.xlane.xlu0 %1869
  %v1871 = vcvt.f32.s32 %v1870
  %v1872 = vcvt.f32.s32 %v1866
  %v1873 = vshll.u32 %v1872, 16
  %v1874 = vadd.s32 %v1873, %v1871
  %v1875 = vand.u32 %v1596, 65535
  %v1876 = vshra.s32 %v1596, 16
  %v1877 = vcvt.s32.f32 %v1875
  %v1878 = vcvt.s32.f32 %v1876
  %1879 = vmin.xlane.f32.xlu0 %v1878
  %v1880 = vpop.xlane.xlu0 %1879
  %vm1881 = vcmp.eq.f32.partialorder %v1878, %v1880
  %v1882 = vsel %vm1881, %v1877, inf
  %1883 = vmin.xlane.f32.xlu0 %v1882
  %v1884 = vpop.xlane.xlu0 %1883
  %v1885 = vcvt.f32.s32 %v1884
  %v1886 = vcvt.f32.s32 %v1880
  %v1887 = vshll.u32 %v1886, 16
  %v1888 = vadd.s32 %v1887, %v1885
  %v1889 = vand.u32 %v1597, 65535
  %v1890 = vshra.s32 %v1597, 16
  %v1891 = vcvt.s32.f32 %v1889
  %v1892 = vcvt.s32.f32 %v1890
  %1893 = vmin.xlane.f32.xlu0 %v1892
  %v1894 = vpop.xlane.xlu0 %1893
  %vm1895 = vcmp.eq.f32.partialorder %v1892, %v1894
  %v1896 = vsel %vm1895, %v1891, inf
  %1897 = vmin.xlane.f32.xlu0 %v1896
  %v1898 = vpop.xlane.xlu0 %1897
  %v1899 = vcvt.f32.s32 %v1898
  %v1900 = vcvt.f32.s32 %v1894
  %v1901 = vshll.u32 %v1900, 16
  %v1902 = vadd.s32 %v1901, %v1899
  %v1903 = vand.u32 %v1598, 65535
  %v1904 = vshra.s32 %v1598, 16
  %v1905 = vcvt.s32.f32 %v1903
  %v1906 = vcvt.s32.f32 %v1904
  %1907 = vmin.xlane.f32.xlu0 %v1906
  %v1908 = vpop.xlane.xlu0 %1907
  %vm1909 = vcmp.eq.f32.partialorder %v1906, %v1908
  %v1910 = vsel %vm1909, %v1905, inf
  %1911 = vmin.xlane.f32.xlu0 %v1910
  %v1912 = vpop.xlane.xlu0 %1911
  %v1913 = vcvt.f32.s32 %v1912
  %v1914 = vcvt.f32.s32 %v1908
  %v1915 = vshll.u32 %v1914, 16
  %v1916 = vadd.s32 %v1915, %v1913
  %v1917 = vand.u32 %v1599, 65535
  %v1918 = vshra.s32 %v1599, 16
  %v1919 = vcvt.s32.f32 %v1917
  %v1920 = vcvt.s32.f32 %v1918
  %1921 = vmin.xlane.f32.xlu0 %v1920
  %v1922 = vpop.xlane.xlu0 %1921
  %vm1923 = vcmp.eq.f32.partialorder %v1920, %v1922
  %v1924 = vsel %vm1923, %v1919, inf
  %1925 = vmin.xlane.f32.xlu0 %v1924
  %v1926 = vpop.xlane.xlu0 %1925
  %v1927 = vcvt.f32.s32 %v1926
  %v1928 = vcvt.f32.s32 %v1922
  %v1929 = vshll.u32 %v1928, 16
  %v1930 = vadd.s32 %v1929, %v1927
  %v1931 = vand.u32 %v1600, 65535
  %v1932 = vshra.s32 %v1600, 16
  %v1933 = vcvt.s32.f32 %v1931
  %v1934 = vcvt.s32.f32 %v1932
  %1935 = vmin.xlane.f32.xlu0 %v1934
  %v1936 = vpop.xlane.xlu0 %1935
  %vm1937 = vcmp.eq.f32.partialorder %v1934, %v1936
  %v1938 = vsel %vm1937, %v1933, inf
  %1939 = vmin.xlane.f32.xlu0 %v1938
  %v1940 = vpop.xlane.xlu0 %1939
  %v1941 = vcvt.f32.s32 %v1940
  %v1942 = vcvt.f32.s32 %v1936
  %v1943 = vshll.u32 %v1942, 16
  %v1944 = vadd.s32 %v1943, %v1941
  %v1945 = vand.u32 %v1601, 65535
  %v1946 = vshra.s32 %v1601, 16
  %v1947 = vcvt.s32.f32 %v1945
  %v1948 = vcvt.s32.f32 %v1946
  %1949 = vmin.xlane.f32.xlu0 %v1948
  %v1950 = vpop.xlane.xlu0 %1949
  %vm1951 = vcmp.eq.f32.partialorder %v1948, %v1950
  %v1952 = vsel %vm1951, %v1947, inf
  %1953 = vmin.xlane.f32.xlu0 %v1952
  %v1954 = vpop.xlane.xlu0 %1953
  %v1955 = vcvt.f32.s32 %v1954
  %v1956 = vcvt.f32.s32 %v1950
  %v1957 = vshll.u32 %v1956, 16
  %v1958 = vadd.s32 %v1957, %v1955
  %v1959 = vand.u32 %v1602, 65535
  %v1960 = vshra.s32 %v1602, 16
  %v1961 = vcvt.s32.f32 %v1959
  %v1962 = vcvt.s32.f32 %v1960
  %1963 = vmin.xlane.f32.xlu0 %v1962
  %v1964 = vpop.xlane.xlu0 %1963
  %vm1965 = vcmp.eq.f32.partialorder %v1962, %v1964
  %v1966 = vsel %vm1965, %v1961, inf
  %1967 = vmin.xlane.f32.xlu0 %v1966
  %v1968 = vpop.xlane.xlu0 %1967
  %v1969 = vcvt.f32.s32 %v1968
  %v1970 = vcvt.f32.s32 %v1964
  %v1971 = vshll.u32 %v1970, 16
  %v1972 = vadd.s32 %v1971, %v1969
  %v1973 = vand.u32 %v1603, 65535
  %v1974 = vshra.s32 %v1603, 16
  %v1975 = vcvt.s32.f32 %v1973
  %v1976 = vcvt.s32.f32 %v1974
  %1977 = vmin.xlane.f32.xlu0 %v1976
  %v1978 = vpop.xlane.xlu0 %1977
  %vm1979 = vcmp.eq.f32.partialorder %v1976, %v1978
  %v1980 = vsel %vm1979, %v1975, inf
  %1981 = vmin.xlane.f32.xlu0 %v1980
  %v1982 = vpop.xlane.xlu0 %1981
  %v1983 = vcvt.f32.s32 %v1982
  %v1984 = vcvt.f32.s32 %v1978
  %v1985 = vshll.u32 %v1984, 16
  %v1986 = vadd.s32 %v1985, %v1983
  %v1987 = vand.u32 %v1604, 65535
  %v1988 = vshra.s32 %v1604, 16
  %v1989 = vcvt.s32.f32 %v1987
  %v1990 = vcvt.s32.f32 %v1988
  %1991 = vmin.xlane.f32.xlu0 %v1990
  %v1992 = vpop.xlane.xlu0 %1991
  %vm1993 = vcmp.eq.f32.partialorder %v1990, %v1992
  %v1994 = vsel %vm1993, %v1989, inf
  %1995 = vmin.xlane.f32.xlu0 %v1994
  %v1996 = vpop.xlane.xlu0 %1995
  %v1997 = vcvt.f32.s32 %v1996
  %v1998 = vcvt.f32.s32 %v1992
  %v1999 = vshll.u32 %v1998, 16
  %v2000 = vadd.s32 %v1999, %v1997
  %v2001 = vand.u32 %v1605, 65535
  %v2002 = vshra.s32 %v1605, 16
  %v2003 = vcvt.s32.f32 %v2001
  %v2004 = vcvt.s32.f32 %v2002
  %2005 = vmin.xlane.f32.xlu0 %v2004
  %v2006 = vpop.xlane.xlu0 %2005
  %vm2007 = vcmp.eq.f32.partialorder %v2004, %v2006
  %v2008 = vsel %vm2007, %v2003, inf
  %2009 = vmin.xlane.f32.xlu0 %v2008
  %v2010 = vpop.xlane.xlu0 %2009
  %v2011 = vcvt.f32.s32 %v2010
  %v2012 = vcvt.f32.s32 %v2006
  %v2013 = vshll.u32 %v2012, 16
  %v2014 = vadd.s32 %v2013, %v2011
  %v2015 = vand.u32 %v1606, 65535
  %v2016 = vshra.s32 %v1606, 16
  %v2017 = vcvt.s32.f32 %v2015
  %v2018 = vcvt.s32.f32 %v2016
  %2019 = vmin.xlane.f32.xlu0 %v2018
  %v2020 = vpop.xlane.xlu0 %2019
  %vm2021 = vcmp.eq.f32.partialorder %v2018, %v2020
  %v2022 = vsel %vm2021, %v2017, inf
  %2023 = vmin.xlane.f32.xlu0 %v2022
  %v2024 = vpop.xlane.xlu0 %2023
  %v2025 = vcvt.f32.s32 %v2024
  %v2026 = vcvt.f32.s32 %v2020
  %v2027 = vshll.u32 %v2026, 16
  %v2028 = vadd.s32 %v2027, %v2025
  %v2029 = vand.u32 %v1607, 65535
  %v2030 = vshra.s32 %v1607, 16
  %v2031 = vcvt.s32.f32 %v2029
  %v2032 = vcvt.s32.f32 %v2030
  %2033 = vmin.xlane.f32.xlu0 %v2032
  %v2034 = vpop.xlane.xlu0 %2033
  %vm2035 = vcmp.eq.f32.partialorder %v2032, %v2034
  %v2036 = vsel %vm2035, %v2031, inf
  %2037 = vmin.xlane.f32.xlu0 %v2036
  %v2038 = vpop.xlane.xlu0 %2037
  %v2039 = vcvt.f32.s32 %v2038
  %v2040 = vcvt.f32.s32 %v2034
  %v2041 = vshll.u32 %v2040, 16
  %v2042 = vadd.s32 %v2041, %v2039
  %v2043 = vand.u32 %v1608, 65535
  %v2044 = vshra.s32 %v1608, 16
  %v2045 = vcvt.s32.f32 %v2043
  %v2046 = vcvt.s32.f32 %v2044
  %2047 = vmin.xlane.f32.xlu0 %v2046
  %v2048 = vpop.xlane.xlu0 %2047
  %vm2049 = vcmp.eq.f32.partialorder %v2046, %v2048
  %v2050 = vsel %vm2049, %v2045, inf
  %2051 = vmin.xlane.f32.xlu0 %v2050
  %v2052 = vpop.xlane.xlu0 %2051
  %v2053 = vcvt.f32.s32 %v2052
  %v2054 = vcvt.f32.s32 %v2048
  %v2055 = vshll.u32 %v2054, 16
  %v2056 = vadd.s32 %v2055, %v2053
  %vm2057 = vcmp.eq.s32.totalorder %v1622, 1
  %vm2058 = vcmp.eq.s32.totalorder %v1636, 1
  %vm2059 = vcmp.eq.s32.totalorder %v1650, 1
  %vm2060 = vcmp.eq.s32.totalorder %v1664, 1
  %vm2061 = vcmp.eq.s32.totalorder %v1678, 1
  %vm2062 = vcmp.eq.s32.totalorder %v1692, 1
  %vm2063 = vcmp.eq.s32.totalorder %v1706, 1
  %vm2064 = vcmp.eq.s32.totalorder %v1720, 1
  %vm2065 = vcmp.eq.s32.totalorder %v1734, 1
  %vm2066 = vcmp.eq.s32.totalorder %v1748, 1
  %vm2067 = vcmp.eq.s32.totalorder %v1762, 1
  %vm2068 = vcmp.eq.s32.totalorder %v1776, 1
  %vm2069 = vcmp.eq.s32.totalorder %v1790, 1
  %vm2070 = vcmp.eq.s32.totalorder %v1804, 1
  %vm2071 = vcmp.eq.s32.totalorder %v1818, 1
  %vm2072 = vcmp.eq.s32.totalorder %v1832, 1
  %vm2073 = vcmp.eq.s32.totalorder %v1846, 1
  %vm2074 = vcmp.eq.s32.totalorder %v1860, 1
  %vm2075 = vcmp.eq.s32.totalorder %v1874, 1
  %vm2076 = vcmp.eq.s32.totalorder %v1888, 1
  %vm2077 = vcmp.eq.s32.totalorder %v1902, 1
  %vm2078 = vcmp.eq.s32.totalorder %v1916, 1
  %vm2079 = vcmp.eq.s32.totalorder %v1930, 1
  %vm2080 = vcmp.eq.s32.totalorder %v1944, 1
  %vm2081 = vcmp.eq.s32.totalorder %v1958, 1
  %vm2082 = vcmp.eq.s32.totalorder %v1972, 1
  %vm2083 = vcmp.eq.s32.totalorder %v1986, 1
  %vm2084 = vcmp.eq.s32.totalorder %v2000, 1
  %vm2085 = vcmp.eq.s32.totalorder %v2014, 1
  %vm2086 = vcmp.eq.s32.totalorder %v2028, 1
  %vm2087 = vcmp.eq.s32.totalorder %v2042, 1
  %vm2088 = vcmp.eq.s32.totalorder %v2056, 1
  %v2089 = vsel %vm2057, 1, 0
  %v2090 = vsel %vm2058, 1, 0
  %v2091 = vsel %vm2059, 1, 0
  %v2092 = vsel %vm2060, 1, 0
  %v2093 = vsel %vm2061, 1, 0
  %v2094 = vsel %vm2062, 1, 0
  %v2095 = vsel %vm2063, 1, 0
  %v2096 = vsel %vm2064, 1, 0
  %v2097 = vsel %vm2065, 1, 0
  %v2098 = vsel %vm2066, 1, 0
  %v2099 = vsel %vm2067, 1, 0
  %v2100 = vsel %vm2068, 1, 0
  %v2101 = vsel %vm2069, 1, 0
  %v2102 = vsel %vm2070, 1, 0
  %v2103 = vsel %vm2071, 1, 0
  %v2104 = vsel %vm2072, 1, 0
  %v2105 = vsel %vm2073, 1, 0
  %v2106 = vsel %vm2074, 1, 0
  %v2107 = vsel %vm2075, 1, 0
  %v2108 = vsel %vm2076, 1, 0
  %v2109 = vsel %vm2077, 1, 0
  %v2110 = vsel %vm2078, 1, 0
  %v2111 = vsel %vm2079, 1, 0
  %v2112 = vsel %vm2080, 1, 0
  %v2113 = vsel %vm2081, 1, 0
  %v2114 = vsel %vm2082, 1, 0
  %v2115 = vsel %vm2083, 1, 0
  %v2116 = vsel %vm2084, 1, 0
  %v2117 = vsel %vm2085, 1, 0
  %v2118 = vsel %vm2086, 1, 0
  %v2119 = vsel %vm2087, 1, 0
  %v2120 = vsel %vm2088, 1, 0
  %vm2121 = vcmp.eq.s32.totalorder %v2089, 1
  %vm2122 = vcmp.eq.s32.totalorder %v2090, 1
  %vm2123 = vcmp.eq.s32.totalorder %v2091, 1
  %vm2124 = vcmp.eq.s32.totalorder %v2092, 1
  %vm2125 = vcmp.eq.s32.totalorder %v2093, 1
  %vm2126 = vcmp.eq.s32.totalorder %v2094, 1
  %vm2127 = vcmp.eq.s32.totalorder %v2095, 1
  %vm2128 = vcmp.eq.s32.totalorder %v2096, 1
  %vm2129 = vcmp.eq.s32.totalorder %v2097, 1
  %vm2130 = vcmp.eq.s32.totalorder %v2098, 1
  %vm2131 = vcmp.eq.s32.totalorder %v2099, 1
  %vm2132 = vcmp.eq.s32.totalorder %v2100, 1
  %vm2133 = vcmp.eq.s32.totalorder %v2101, 1
  %vm2134 = vcmp.eq.s32.totalorder %v2102, 1
  %vm2135 = vcmp.eq.s32.totalorder %v2103, 1
  %vm2136 = vcmp.eq.s32.totalorder %v2104, 1
  %vm2137 = vcmp.eq.s32.totalorder %v2105, 1
  %vm2138 = vcmp.eq.s32.totalorder %v2106, 1
  %vm2139 = vcmp.eq.s32.totalorder %v2107, 1
  %vm2140 = vcmp.eq.s32.totalorder %v2108, 1
  %vm2141 = vcmp.eq.s32.totalorder %v2109, 1
  %vm2142 = vcmp.eq.s32.totalorder %v2110, 1
  %vm2143 = vcmp.eq.s32.totalorder %v2111, 1
  %vm2144 = vcmp.eq.s32.totalorder %v2112, 1
  %vm2145 = vcmp.eq.s32.totalorder %v2113, 1
  %vm2146 = vcmp.eq.s32.totalorder %v2114, 1
  %vm2147 = vcmp.eq.s32.totalorder %v2115, 1
  %vm2148 = vcmp.eq.s32.totalorder %v2116, 1
  %vm2149 = vcmp.eq.s32.totalorder %v2117, 1
  %vm2150 = vcmp.eq.s32.totalorder %v2118, 1
  %vm2151 = vcmp.eq.s32.totalorder %v2119, 1
  %vm2152 = vcmp.eq.s32.totalorder %v2120, 1
  %v2153 = vsel %vm2121, %v1125, %v1012
  %v2154 = vsel %vm2122, %v1128, %v1015
  %v2155 = vsel %vm2123, %v1131, %v1018
  %v2156 = vsel %vm2124, %v1134, %v1021
  %v2157 = vsel %vm2125, %v1137, %v1024
  %v2158 = vsel %vm2126, %v1140, %v1027
  %v2159 = vsel %vm2127, %v1143, %v1030
  %v2160 = vsel %vm2128, %v1146, %v1033
  %v2161 = vsel %vm2129, %v1149, %v1036
  %v2162 = vsel %vm2130, %v1152, %v1039
  %v2163 = vsel %vm2131, %v1155, %v1042
  %v2164 = vsel %vm2132, %v1158, %v1045
  %v2165 = vsel %vm2133, %v1161, %v1048
  %v2166 = vsel %vm2134, %v1164, %v1051
  %v2167 = vsel %vm2135, %v1167, %v1054
  %v2168 = vsel %vm2136, %v1170, %v1057
  %v2169 = vsel %vm2137, %v1173, %v1060
  %v2170 = vsel %vm2138, %v1176, %v1063
  %v2171 = vsel %vm2139, %v1179, %v1066
  %v2172 = vsel %vm2140, %v1182, %v1069
  %v2173 = vsel %vm2141, %v1185, %v1072
  %v2174 = vsel %vm2142, %v1188, %v1075
  %v2175 = vsel %vm2143, %v1191, %v1078
  %v2176 = vsel %vm2144, %v1194, %v1081
  %v2177 = vsel %vm2145, %v1197, %v1084
  %v2178 = vsel %vm2146, %v1200, %v1087
  %v2179 = vsel %vm2147, %v1203, %v1090
  %v2180 = vsel %vm2148, %v1206, %v1093
  %v2181 = vsel %vm2149, %v1209, %v1096
  %v2182 = vsel %vm2150, %v1212, %v1099
  %v2183 = vsel %vm2151, %v1215, %v1102
  %v2184 = vsel %vm2152, %v1218, %v1105
  %vm2185 = vcmp.eq.s32.totalorder %v1622, 2
  %vm2186 = vcmp.eq.s32.totalorder %v1636, 2
  %vm2187 = vcmp.eq.s32.totalorder %v1650, 2
  %vm2188 = vcmp.eq.s32.totalorder %v1664, 2
  %vm2189 = vcmp.eq.s32.totalorder %v1678, 2
  %vm2190 = vcmp.eq.s32.totalorder %v1692, 2
  %vm2191 = vcmp.eq.s32.totalorder %v1706, 2
  %vm2192 = vcmp.eq.s32.totalorder %v1720, 2
  %vm2193 = vcmp.eq.s32.totalorder %v1734, 2
  %vm2194 = vcmp.eq.s32.totalorder %v1748, 2
  %vm2195 = vcmp.eq.s32.totalorder %v1762, 2
  %vm2196 = vcmp.eq.s32.totalorder %v1776, 2
  %vm2197 = vcmp.eq.s32.totalorder %v1790, 2
  %vm2198 = vcmp.eq.s32.totalorder %v1804, 2
  %vm2199 = vcmp.eq.s32.totalorder %v1818, 2
  %vm2200 = vcmp.eq.s32.totalorder %v1832, 2
  %vm2201 = vcmp.eq.s32.totalorder %v1846, 2
  %vm2202 = vcmp.eq.s32.totalorder %v1860, 2
  %vm2203 = vcmp.eq.s32.totalorder %v1874, 2
  %vm2204 = vcmp.eq.s32.totalorder %v1888, 2
  %vm2205 = vcmp.eq.s32.totalorder %v1902, 2
  %vm2206 = vcmp.eq.s32.totalorder %v1916, 2
  %vm2207 = vcmp.eq.s32.totalorder %v1930, 2
  %vm2208 = vcmp.eq.s32.totalorder %v1944, 2
  %vm2209 = vcmp.eq.s32.totalorder %v1958, 2
  %vm2210 = vcmp.eq.s32.totalorder %v1972, 2
  %vm2211 = vcmp.eq.s32.totalorder %v1986, 2
  %vm2212 = vcmp.eq.s32.totalorder %v2000, 2
  %vm2213 = vcmp.eq.s32.totalorder %v2014, 2
  %vm2214 = vcmp.eq.s32.totalorder %v2028, 2
  %vm2215 = vcmp.eq.s32.totalorder %v2042, 2
  %vm2216 = vcmp.eq.s32.totalorder %v2056, 2
  %v2217 = vsel %vm2185, 1, 0
  %v2218 = vsel %vm2186, 1, 0
  %v2219 = vsel %vm2187, 1, 0
  %v2220 = vsel %vm2188, 1, 0
  %v2221 = vsel %vm2189, 1, 0
  %v2222 = vsel %vm2190, 1, 0
  %v2223 = vsel %vm2191, 1, 0
  %v2224 = vsel %vm2192, 1, 0
  %v2225 = vsel %vm2193, 1, 0
  %v2226 = vsel %vm2194, 1, 0
  %v2227 = vsel %vm2195, 1, 0
  %v2228 = vsel %vm2196, 1, 0
  %v2229 = vsel %vm2197, 1, 0
  %v2230 = vsel %vm2198, 1, 0
  %v2231 = vsel %vm2199, 1, 0
  %v2232 = vsel %vm2200, 1, 0
  %v2233 = vsel %vm2201, 1, 0
  %v2234 = vsel %vm2202, 1, 0
  %v2235 = vsel %vm2203, 1, 0
  %v2236 = vsel %vm2204, 1, 0
  %v2237 = vsel %vm2205, 1, 0
  %v2238 = vsel %vm2206, 1, 0
  %v2239 = vsel %vm2207, 1, 0
  %v2240 = vsel %vm2208, 1, 0
  %v2241 = vsel %vm2209, 1, 0
  %v2242 = vsel %vm2210, 1, 0
  %v2243 = vsel %vm2211, 1, 0
  %v2244 = vsel %vm2212, 1, 0
  %v2245 = vsel %vm2213, 1, 0
  %v2246 = vsel %vm2214, 1, 0
  %v2247 = vsel %vm2215, 1, 0
  %v2248 = vsel %vm2216, 1, 0
  %vm2249 = vcmp.eq.s32.totalorder %v2217, 1
  %vm2250 = vcmp.eq.s32.totalorder %v2218, 1
  %vm2251 = vcmp.eq.s32.totalorder %v2219, 1
  %vm2252 = vcmp.eq.s32.totalorder %v2220, 1
  %vm2253 = vcmp.eq.s32.totalorder %v2221, 1
  %vm2254 = vcmp.eq.s32.totalorder %v2222, 1
  %vm2255 = vcmp.eq.s32.totalorder %v2223, 1
  %vm2256 = vcmp.eq.s32.totalorder %v2224, 1
  %vm2257 = vcmp.eq.s32.totalorder %v2225, 1
  %vm2258 = vcmp.eq.s32.totalorder %v2226, 1
  %vm2259 = vcmp.eq.s32.totalorder %v2227, 1
  %vm2260 = vcmp.eq.s32.totalorder %v2228, 1
  %vm2261 = vcmp.eq.s32.totalorder %v2229, 1
  %vm2262 = vcmp.eq.s32.totalorder %v2230, 1
  %vm2263 = vcmp.eq.s32.totalorder %v2231, 1
  %vm2264 = vcmp.eq.s32.totalorder %v2232, 1
  %vm2265 = vcmp.eq.s32.totalorder %v2233, 1
  %vm2266 = vcmp.eq.s32.totalorder %v2234, 1
  %vm2267 = vcmp.eq.s32.totalorder %v2235, 1
  %vm2268 = vcmp.eq.s32.totalorder %v2236, 1
  %vm2269 = vcmp.eq.s32.totalorder %v2237, 1
  %vm2270 = vcmp.eq.s32.totalorder %v2238, 1
  %vm2271 = vcmp.eq.s32.totalorder %v2239, 1
  %vm2272 = vcmp.eq.s32.totalorder %v2240, 1
  %vm2273 = vcmp.eq.s32.totalorder %v2241, 1
  %vm2274 = vcmp.eq.s32.totalorder %v2242, 1
  %vm2275 = vcmp.eq.s32.totalorder %v2243, 1
  %vm2276 = vcmp.eq.s32.totalorder %v2244, 1
  %vm2277 = vcmp.eq.s32.totalorder %v2245, 1
  %vm2278 = vcmp.eq.s32.totalorder %v2246, 1
  %vm2279 = vcmp.eq.s32.totalorder %v2247, 1
  %vm2280 = vcmp.eq.s32.totalorder %v2248, 1
  %v2281 = vsel %vm2249, %v1238, %v2153
  %v2282 = vsel %vm2250, %v1241, %v2154
  %v2283 = vsel %vm2251, %v1244, %v2155
  %v2284 = vsel %vm2252, %v1247, %v2156
  %v2285 = vsel %vm2253, %v1250, %v2157
  %v2286 = vsel %vm2254, %v1253, %v2158
  %v2287 = vsel %vm2255, %v1256, %v2159
  %v2288 = vsel %vm2256, %v1259, %v2160
  %v2289 = vsel %vm2257, %v1262, %v2161
  %v2290 = vsel %vm2258, %v1265, %v2162
  %v2291 = vsel %vm2259, %v1268, %v2163
  %v2292 = vsel %vm2260, %v1271, %v2164
  %v2293 = vsel %vm2261, %v1274, %v2165
  %v2294 = vsel %vm2262, %v1277, %v2166
  %v2295 = vsel %vm2263, %v1280, %v2167
  %v2296 = vsel %vm2264, %v1283, %v2168
  %v2297 = vsel %vm2265, %v1286, %v2169
  %v2298 = vsel %vm2266, %v1289, %v2170
  %v2299 = vsel %vm2267, %v1292, %v2171
  %v2300 = vsel %vm2268, %v1295, %v2172
  %v2301 = vsel %vm2269, %v1298, %v2173
  %v2302 = vsel %vm2270, %v1301, %v2174
  %v2303 = vsel %vm2271, %v1304, %v2175
  %v2304 = vsel %vm2272, %v1307, %v2176
  %v2305 = vsel %vm2273, %v1310, %v2177
  %v2306 = vsel %vm2274, %v1313, %v2178
  %v2307 = vsel %vm2275, %v1316, %v2179
  %v2308 = vsel %vm2276, %v1319, %v2180
  %v2309 = vsel %vm2277, %v1322, %v2181
  %v2310 = vsel %vm2278, %v1325, %v2182
  %v2311 = vsel %vm2279, %v1328, %v2183
  %v2312 = vsel %vm2280, %v1331, %v2184
  %vm2313 = vcmp.eq.s32.totalorder %v1622, 3
  %vm2314 = vcmp.eq.s32.totalorder %v1636, 3
  %vm2315 = vcmp.eq.s32.totalorder %v1650, 3
  %vm2316 = vcmp.eq.s32.totalorder %v1664, 3
  %vm2317 = vcmp.eq.s32.totalorder %v1678, 3
  %vm2318 = vcmp.eq.s32.totalorder %v1692, 3
  %vm2319 = vcmp.eq.s32.totalorder %v1706, 3
  %vm2320 = vcmp.eq.s32.totalorder %v1720, 3
  %vm2321 = vcmp.eq.s32.totalorder %v1734, 3
  %vm2322 = vcmp.eq.s32.totalorder %v1748, 3
  %vm2323 = vcmp.eq.s32.totalorder %v1762, 3
  %vm2324 = vcmp.eq.s32.totalorder %v1776, 3
  %vm2325 = vcmp.eq.s32.totalorder %v1790, 3
  %vm2326 = vcmp.eq.s32.totalorder %v1804, 3
  %vm2327 = vcmp.eq.s32.totalorder %v1818, 3
  %vm2328 = vcmp.eq.s32.totalorder %v1832, 3
  %vm2329 = vcmp.eq.s32.totalorder %v1846, 3
  %vm2330 = vcmp.eq.s32.totalorder %v1860, 3
  %vm2331 = vcmp.eq.s32.totalorder %v1874, 3
  %vm2332 = vcmp.eq.s32.totalorder %v1888, 3
  %vm2333 = vcmp.eq.s32.totalorder %v1902, 3
  %vm2334 = vcmp.eq.s32.totalorder %v1916, 3
  %vm2335 = vcmp.eq.s32.totalorder %v1930, 3
  %vm2336 = vcmp.eq.s32.totalorder %v1944, 3
  %vm2337 = vcmp.eq.s32.totalorder %v1958, 3
  %vm2338 = vcmp.eq.s32.totalorder %v1972, 3
  %vm2339 = vcmp.eq.s32.totalorder %v1986, 3
  %vm2340 = vcmp.eq.s32.totalorder %v2000, 3
  %vm2341 = vcmp.eq.s32.totalorder %v2014, 3
  %vm2342 = vcmp.eq.s32.totalorder %v2028, 3
  %vm2343 = vcmp.eq.s32.totalorder %v2042, 3
  %vm2344 = vcmp.eq.s32.totalorder %v2056, 3
  %v2345 = vsel %vm2313, 1, 0
  %v2346 = vsel %vm2314, 1, 0
  %v2347 = vsel %vm2315, 1, 0
  %v2348 = vsel %vm2316, 1, 0
  %v2349 = vsel %vm2317, 1, 0
  %v2350 = vsel %vm2318, 1, 0
  %v2351 = vsel %vm2319, 1, 0
  %v2352 = vsel %vm2320, 1, 0
  %v2353 = vsel %vm2321, 1, 0
  %v2354 = vsel %vm2322, 1, 0
  %v2355 = vsel %vm2323, 1, 0
  %v2356 = vsel %vm2324, 1, 0
  %v2357 = vsel %vm2325, 1, 0
  %v2358 = vsel %vm2326, 1, 0
  %v2359 = vsel %vm2327, 1, 0
  %v2360 = vsel %vm2328, 1, 0
  %v2361 = vsel %vm2329, 1, 0
  %v2362 = vsel %vm2330, 1, 0
  %v2363 = vsel %vm2331, 1, 0
  %v2364 = vsel %vm2332, 1, 0
  %v2365 = vsel %vm2333, 1, 0
  %v2366 = vsel %vm2334, 1, 0
  %v2367 = vsel %vm2335, 1, 0
  %v2368 = vsel %vm2336, 1, 0
  %v2369 = vsel %vm2337, 1, 0
  %v2370 = vsel %vm2338, 1, 0
  %v2371 = vsel %vm2339, 1, 0
  %v2372 = vsel %vm2340, 1, 0
  %v2373 = vsel %vm2341, 1, 0
  %v2374 = vsel %vm2342, 1, 0
  %v2375 = vsel %vm2343, 1, 0
  %v2376 = vsel %vm2344, 1, 0
  %vm2377 = vcmp.eq.s32.totalorder %v2345, 1
  %vm2378 = vcmp.eq.s32.totalorder %v2346, 1
  %vm2379 = vcmp.eq.s32.totalorder %v2347, 1
  %vm2380 = vcmp.eq.s32.totalorder %v2348, 1
  %vm2381 = vcmp.eq.s32.totalorder %v2349, 1
  %vm2382 = vcmp.eq.s32.totalorder %v2350, 1
  %vm2383 = vcmp.eq.s32.totalorder %v2351, 1
  %vm2384 = vcmp.eq.s32.totalorder %v2352, 1
  %vm2385 = vcmp.eq.s32.totalorder %v2353, 1
  %vm2386 = vcmp.eq.s32.totalorder %v2354, 1
  %vm2387 = vcmp.eq.s32.totalorder %v2355, 1
  %vm2388 = vcmp.eq.s32.totalorder %v2356, 1
  %vm2389 = vcmp.eq.s32.totalorder %v2357, 1
  %vm2390 = vcmp.eq.s32.totalorder %v2358, 1
  %vm2391 = vcmp.eq.s32.totalorder %v2359, 1
  %vm2392 = vcmp.eq.s32.totalorder %v2360, 1
  %vm2393 = vcmp.eq.s32.totalorder %v2361, 1
  %vm2394 = vcmp.eq.s32.totalorder %v2362, 1
  %vm2395 = vcmp.eq.s32.totalorder %v2363, 1
  %vm2396 = vcmp.eq.s32.totalorder %v2364, 1
  %vm2397 = vcmp.eq.s32.totalorder %v2365, 1
  %vm2398 = vcmp.eq.s32.totalorder %v2366, 1
  %vm2399 = vcmp.eq.s32.totalorder %v2367, 1
  %vm2400 = vcmp.eq.s32.totalorder %v2368, 1
  %vm2401 = vcmp.eq.s32.totalorder %v2369, 1
  %vm2402 = vcmp.eq.s32.totalorder %v2370, 1
  %vm2403 = vcmp.eq.s32.totalorder %v2371, 1
  %vm2404 = vcmp.eq.s32.totalorder %v2372, 1
  %vm2405 = vcmp.eq.s32.totalorder %v2373, 1
  %vm2406 = vcmp.eq.s32.totalorder %v2374, 1
  %vm2407 = vcmp.eq.s32.totalorder %v2375, 1
  %vm2408 = vcmp.eq.s32.totalorder %v2376, 1
  %v2409 = vsel %vm2377, %v1351, %v2281
  %v2410 = vsel %vm2378, %v1354, %v2282
  %v2411 = vsel %vm2379, %v1357, %v2283
  %v2412 = vsel %vm2380, %v1360, %v2284
  %v2413 = vsel %vm2381, %v1363, %v2285
  %v2414 = vsel %vm2382, %v1366, %v2286
  %v2415 = vsel %vm2383, %v1369, %v2287
  %v2416 = vsel %vm2384, %v1372, %v2288
  %v2417 = vsel %vm2385, %v1375, %v2289
  %v2418 = vsel %vm2386, %v1378, %v2290
  %v2419 = vsel %vm2387, %v1381, %v2291
  %v2420 = vsel %vm2388, %v1384, %v2292
  %v2421 = vsel %vm2389, %v1387, %v2293
  %v2422 = vsel %vm2390, %v1390, %v2294
  %v2423 = vsel %vm2391, %v1393, %v2295
  %v2424 = vsel %vm2392, %v1396, %v2296
  %v2425 = vsel %vm2393, %v1399, %v2297
  %v2426 = vsel %vm2394, %v1402, %v2298
  %v2427 = vsel %vm2395, %v1405, %v2299
  %v2428 = vsel %vm2396, %v1408, %v2300
  %v2429 = vsel %vm2397, %v1411, %v2301
  %v2430 = vsel %vm2398, %v1414, %v2302
  %v2431 = vsel %vm2399, %v1417, %v2303
  %v2432 = vsel %vm2400, %v1420, %v2304
  %v2433 = vsel %vm2401, %v1423, %v2305
  %v2434 = vsel %vm2402, %v1426, %v2306
  %v2435 = vsel %vm2403, %v1429, %v2307
  %v2436 = vsel %vm2404, %v1432, %v2308
  %v2437 = vsel %vm2405, %v1435, %v2309
  %v2438 = vsel %vm2406, %v1438, %v2310
  %v2439 = vsel %vm2407, %v1441, %v2311
  %v2440 = vsel %vm2408, %v1444, %v2312
  %2441 = vst [vmem:[%s4] sm:$0xff] %v2409
  %2442 = vst [vmem:[%s4 + $0x8] sm:$0xff] %v2410
  %2443 = vst [vmem:[%s4 + $0x10] sm:$0xff] %v2411
  %2444 = vst [vmem:[%s4 + $0x18] sm:$0xff] %v2412
  %2445 = vst [vmem:[%s4 + $0x20] sm:$0xff] %v2413
  %2446 = vst [vmem:[%s4 + $0x28] sm:$0xff] %v2414
  %2447 = vst [vmem:[%s4 + $0x30] sm:$0xff] %v2415
  %2448 = vst [vmem:[%s4 + $0x38] sm:$0xff] %v2416
  %2449 = vst [vmem:[%s4 + $0x40] sm:$0xff] %v2417
  %2450 = vst [vmem:[%s4 + $0x48] sm:$0xff] %v2418
  %2451 = vst [vmem:[%s4 + $0x50] sm:$0xff] %v2419
  %2452 = vst [vmem:[%s4 + $0x58] sm:$0xff] %v2420
  %2453 = vst [vmem:[%s4 + $0x60] sm:$0xff] %v2421
  %2454 = vst [vmem:[%s4 + $0x68] sm:$0xff] %v2422
  %2455 = vst [vmem:[%s4 + $0x70] sm:$0xff] %v2423
  %2456 = vst [vmem:[%s4 + $0x78] sm:$0xff] %v2424
  %2457 = vst [vmem:[%s4 + $0x80] sm:$0xff] %v2425
  %2458 = vst [vmem:[%s4 + $0x88] sm:$0xff] %v2426
  %2459 = vst [vmem:[%s4 + $0x90] sm:$0xff] %v2427
  %2460 = vst [vmem:[%s4 + $0x98] sm:$0xff] %v2428
  %2461 = vst [vmem:[%s4 + $0xa0] sm:$0xff] %v2429
  %2462 = vst [vmem:[%s4 + $0xa8] sm:$0xff] %v2430
  %2463 = vst [vmem:[%s4 + $0xb0] sm:$0xff] %v2431
  %2464 = vst [vmem:[%s4 + $0xb8] sm:$0xff] %v2432
  %2465 = vst [vmem:[%s4 + $0xc0] sm:$0xff] %v2433
  %2466 = vst [vmem:[%s4 + $0xc8] sm:$0xff] %v2434
  %2467 = vst [vmem:[%s4 + $0xd0] sm:$0xff] %v2435
  %2468 = vst [vmem:[%s4 + $0xd8] sm:$0xff] %v2436
  %2469 = vst [vmem:[%s4 + $0xe0] sm:$0xff] %v2437
  %2470 = vst [vmem:[%s4 + $0xe8] sm:$0xff] %v2438
  %2471 = vst [vmem:[%s4 + $0xf0] sm:$0xff] %v2439
  %2472 = vst [vmem:[%s4 + $0xf8] sm:$0xff] %v2440
  // Predicated region
  $region18: #{graphsage_forward.9} parent=0 // pred_check
    _
  $region19: #{graphsage_forward.9} parent=0 // pred_check_branch
    %2474 = sbr.rel (0) target = $region21
  $region20: #{graphsage_forward.9} parent=0 // pred_region
    _
  $region21: #{graphsage_forward.9} parent=0 // pred_fallthru
    _
  // Predicated region
  $region22: #{graphsage_forward.9} parent=0 // pred_check
    _
  $region23: #{graphsage_forward.9} parent=0 // pred_check_branch
    %2476 = sbr.rel (0) target = $region25
  $region24: #{graphsage_forward.9} parent=0 // pred_region
    _
  $region25: #{graphsage_forward.9} parent=0 // pred_fallthru
    _

</llo_original>
